<compile_context>
chip_gen: v7x
topology: tpu7x:2x2x1
jax: 0.10.0
libtpu: 0.0.40
codegen_flags: <defaults>
</compile_context>

<pallas_src>
import math

import jax
import jax.numpy as jnp
from jax.experimental import pallas as pl
from jax.experimental.pallas import tpu as pltpu

DIMS = [784, 512, 256, 128, 64, 32]
PAD_IN = 896                # 784 rounded up to a multiple of 128 lanes
EPS = 1e-5
NEG_SLOPE = 0.01            # PyTorch LeakyReLU default


def encoder_kernel(*refs):
    """refs = (x, [w_bf16, gamma, beta] * 5, out). Single VMEM-resident block."""
    x_ref, out_ref = refs[0], refs[-1]
    params = refs[1:-1]

    h = x_ref[...].astype(jnp.float32)            # cast after the VMEM load
    batch = h.shape[0]
    inv_b = jnp.float32(1.0 / batch)
    ones_row = jnp.ones((1, batch), jnp.float32)  # hoisted; reused every layer

    for layer in range(len(DIMS) - 1):
        w_ref, g_ref, be_ref = params[3 * layer: 3 * layer + 3]

        # Linear (bias omitted: exactly cancelled by BN mean subtraction).
        # bf16 weights upcast once in VMEM; f32 accumulation on the MXU.
        w = w_ref[...].astype(jnp.float32)
        h = jnp.dot(h, w, preferred_element_type=jnp.float32)

        # Single-pass batch statistics on the MXU (ones-row matmul does the
        # batch-axis reduction; only the h*h elementwise mul hits the VPU).
        s1 = jnp.dot(ones_row, h, preferred_element_type=jnp.float32)
        s2 = jnp.dot(ones_row, h * h, preferred_element_type=jnp.float32)
        mean = s1 * inv_b
        var = s2 * inv_b - mean * mean

        # BatchNorm1d (training mode, biased variance) folded into one FMA.
        scale = g_ref[...] * jax.lax.rsqrt(var + EPS)
        shift = be_ref[...] - mean * scale
        h = h * scale + shift

        # LeakyReLU(0.01)
        h = jnp.maximum(h, NEG_SLOPE * h)

    out_ref[...] = h.astype(out_ref.dtype)


def init_params(key):
    """PyTorch-style init. Weights stored [in, out] in bf16; layer-0 weight is
    zero-padded from 784 to 896 input rows (matches the padded input)."""
    layers = []
    for li in range(len(DIMS) - 1):
        fan_in, fan_out = DIMS[li], DIMS[li + 1]
        key, kw, kb = jax.random.split(key, 3)
        bound = 1.0 / math.sqrt(fan_in)
        w = jax.random.uniform(kw, (fan_in, fan_out), jnp.float32, -bound, bound)
        if li == 0:
            w = jnp.pad(w, ((0, PAD_IN - fan_in), (0, 0)))  # zero rows
        b = jax.random.uniform(kb, (1, fan_out), jnp.float32, -bound, bound)
        gamma = jnp.ones((1, fan_out), jnp.float32)
        beta = jnp.zeros((1, fan_out), jnp.float32)
        layers.append((w.astype(jnp.bfloat16), b, gamma, beta))
    return layers


@jax.jit
def encoder_forward(x, layers):
    # Glue for `x = x.reshape(-1, 784)` from the PyTorch forward; no wrapper
    # dtype cast (done in-kernel). Pad K to 896 so layer 1 is lane-dense.
    x2d = x.reshape(-1, DIMS[0])
    x2d = jnp.pad(x2d, ((0, 0), (0, PAD_IN - DIMS[0])))
    batch = x2d.shape[0]

    kernel_args = [x2d]
    for (w, _b, g, be) in layers:     # Linear bias intentionally not passed
        kernel_args += [w, g, be]

    return pl.pallas_call(
        encoder_kernel,
        out_shape=jax.ShapeDtypeStruct((batch, DIMS[-1]), jnp.float32),
        in_specs=[pl.BlockSpec(memory_space=pltpu.MemorySpace.VMEM)]
        * len(kernel_args),
        out_specs=pl.BlockSpec(memory_space=pltpu.MemorySpace.VMEM),
        compiler_params=pltpu.CompilerParams(vmem_limit_bytes=32 << 20),
    )(*kernel_args)


def reference_forward(x, layers):
    """Plain-JAX, PyTorch-faithful reference (keeps the Linear bias, two-pass
    BN stats, where-based LeakyReLU) using the same bf16-stored weights."""
    h = x.reshape(-1, DIMS[0]).astype(jnp.float32)
    h = jnp.pad(h, ((0, 0), (0, PAD_IN - DIMS[0])))
    for (w, b, g, be) in layers:
        h = jnp.dot(h, w.astype(jnp.float32),
                    precision=jax.lax.Precision.HIGHEST) + b
        mean = jnp.mean(h, axis=0, keepdims=True)
        var = jnp.mean((h - mean) ** 2, axis=0, keepdims=True)
        h = (h - mean) / jnp.sqrt(var + EPS)
        h = h * g + be
        h = jnp.where(h > 0, h, NEG_SLOPE * h)
    return h


if __name__ == "__main__":
    key = jax.random.PRNGKey(0)
    kx, kp = jax.random.split(key)

    # Small MNIST-like demo input; forward reshapes it to [-1, 784].
    # Batch 8 keeps the demo small while staying a multiple of 8 sublanes.
    batch = 8
    x = jax.random.normal(kx, (batch, 1, 28, 28), jnp.float32)
    layers = init_params(kp)

    out = jax.block_until_ready(encoder_forward(x, layers))
    ref = reference_forward(x, layers)

    assert out.shape == (batch, DIMS[-1]), out.shape
    max_err = float(jnp.max(jnp.abs(out - ref)))
    # Differences vs. the faithful reference are pure FP rounding (bias cancel,
    # single- vs two-pass variance, fused FMA, MXU accumulation order).
    assert jnp.allclose(out, ref, atol=1e-3, rtol=1e-3), max_err
    print("KERNEL_OK")
</pallas_src>

<mosaic_0001>
module attributes {stable_mosaic.version = 11 : i64} {
  func.func @encoder_kernel(%arg0: memref<8x896xf32, #tpu.memory_space<vmem>>, %arg1: memref<896x512xbf16, #tpu.memory_space<vmem>>, %arg2: memref<1x512xf32, #tpu.memory_space<vmem>>, %arg3: memref<1x512xf32, #tpu.memory_space<vmem>>, %arg4: memref<512x256xbf16, #tpu.memory_space<vmem>>, %arg5: memref<1x256xf32, #tpu.memory_space<vmem>>, %arg6: memref<1x256xf32, #tpu.memory_space<vmem>>, %arg7: memref<256x128xbf16, #tpu.memory_space<vmem>>, %arg8: memref<1x128xf32, #tpu.memory_space<vmem>>, %arg9: memref<1x128xf32, #tpu.memory_space<vmem>>, %arg10: memref<128x64xbf16, #tpu.memory_space<vmem>>, %arg11: memref<1x64xf32, #tpu.memory_space<vmem>>, %arg12: memref<1x64xf32, #tpu.memory_space<vmem>>, %arg13: memref<64x32xbf16, #tpu.memory_space<vmem>>, %arg14: memref<1x32xf32, #tpu.memory_space<vmem>>, %arg15: memref<1x32xf32, #tpu.memory_space<vmem>>, %arg16: memref<8x32xf32, #tpu.memory_space<vmem>>) attributes {dimension_semantics = [], scalar_prefetch = 0 : i64, scratch_operands = 0 : i64, tpu.core_type = #tpu.core_type<tc>} {
    %c0 = arith.constant 0 : index
    %c0_0 = arith.constant 0 : index
    %0 = vector.load %arg0[%c0, %c0_0] : memref<8x896xf32, #tpu.memory_space<vmem>>, vector<8x896xf32>
    %cst = arith.constant 1.000000e+00 : f32
    %1 = vector.broadcast %cst : f32 to vector<1x8xf32>
    %c0_1 = arith.constant 0 : index
    %c0_2 = arith.constant 0 : index
    %2 = vector.load %arg1[%c0_1, %c0_2] : memref<896x512xbf16, #tpu.memory_space<vmem>>, vector<896x512xbf16>
    %3 = arith.extf %2 : vector<896x512xbf16> to vector<896x512xf32>
    %cst_3 = arith.constant dense<0.000000e+00> : vector<8x512xf32>
    %4 = tpu.matmul %0, %3, %cst_3 {dimension_numbers = #tpu.dot_dimension_numbers<[1], [0], [0], [1], [0, 0, 1, 1], [], []>} : vector<8x896xf32>, vector<896x512xf32>, vector<8x512xf32> -> vector<8x512xf32>
    %cst_4 = arith.constant dense<0.000000e+00> : vector<1x512xf32>
    %5 = tpu.matmul %1, %4, %cst_4 {dimension_numbers = #tpu.dot_dimension_numbers<[1], [0], [0], [1], [0, 0, 1, 1], [], []>} : vector<1x8xf32>, vector<8x512xf32>, vector<1x512xf32> -> vector<1x512xf32>
    %6 = arith.mulf %4, %4 : vector<8x512xf32>
    %cst_5 = arith.constant dense<0.000000e+00> : vector<1x512xf32>
    %7 = tpu.matmul %1, %6, %cst_5 {dimension_numbers = #tpu.dot_dimension_numbers<[1], [0], [0], [1], [0, 0, 1, 1], [], []>} : vector<1x8xf32>, vector<8x512xf32>, vector<1x512xf32> -> vector<1x512xf32>
    %cst_6 = arith.constant 1.250000e-01 : f32
    %8 = vector.broadcast %cst_6 : f32 to vector<1x512xf32>
    %9 = arith.mulf %5, %8 : vector<1x512xf32>
    %cst_7 = arith.constant 1.250000e-01 : f32
    %10 = vector.broadcast %cst_7 : f32 to vector<1x512xf32>
    %11 = arith.mulf %7, %10 : vector<1x512xf32>
    %12 = arith.mulf %9, %9 : vector<1x512xf32>
    %13 = arith.subf %11, %12 : vector<1x512xf32>
    %c0_8 = arith.constant 0 : index
    %c0_9 = arith.constant 0 : index
    %14 = vector.load %arg2[%c0_8, %c0_9] : memref<1x512xf32, #tpu.memory_space<vmem>>, vector<1x512xf32>
    %cst_10 = arith.constant 9.99999974E-6 : f32
    %15 = vector.broadcast %cst_10 : f32 to vector<1x512xf32>
    %16 = arith.addf %13, %15 : vector<1x512xf32>
    %17 = math.rsqrt %16 : vector<1x512xf32>
    %18 = arith.mulf %14, %17 : vector<1x512xf32>
    %c0_11 = arith.constant 0 : index
    %c0_12 = arith.constant 0 : index
    %19 = vector.load %arg3[%c0_11, %c0_12] : memref<1x512xf32, #tpu.memory_space<vmem>>, vector<1x512xf32>
    %20 = arith.mulf %9, %18 : vector<1x512xf32>
    %21 = arith.subf %19, %20 : vector<1x512xf32>
    %22 = vector.broadcast %18 : vector<1x512xf32> to vector<8x512xf32>
    %23 = arith.mulf %4, %22 : vector<8x512xf32>
    %24 = vector.broadcast %21 : vector<1x512xf32> to vector<8x512xf32>
    %25 = arith.addf %23, %24 : vector<8x512xf32>
    %cst_13 = arith.constant 0.00999999977 : f32
    %26 = vector.broadcast %cst_13 : f32 to vector<8x512xf32>
    %27 = arith.mulf %26, %25 : vector<8x512xf32>
    %28 = arith.maximumf %25, %27 : vector<8x512xf32>
    %c0_14 = arith.constant 0 : index
    %c0_15 = arith.constant 0 : index
    %29 = vector.load %arg4[%c0_14, %c0_15] : memref<512x256xbf16, #tpu.memory_space<vmem>>, vector<512x256xbf16>
    %30 = arith.extf %29 : vector<512x256xbf16> to vector<512x256xf32>
    %cst_16 = arith.constant dense<0.000000e+00> : vector<8x256xf32>
    %31 = tpu.matmul %28, %30, %cst_16 {dimension_numbers = #tpu.dot_dimension_numbers<[1], [0], [0], [1], [0, 0, 1, 1], [], []>} : vector<8x512xf32>, vector<512x256xf32>, vector<8x256xf32> -> vector<8x256xf32>
    %cst_17 = arith.constant dense<0.000000e+00> : vector<1x256xf32>
    %32 = tpu.matmul %1, %31, %cst_17 {dimension_numbers = #tpu.dot_dimension_numbers<[1], [0], [0], [1], [0, 0, 1, 1], [], []>} : vector<1x8xf32>, vector<8x256xf32>, vector<1x256xf32> -> vector<1x256xf32>
    %33 = arith.mulf %31, %31 : vector<8x256xf32>
    %cst_18 = arith.constant dense<0.000000e+00> : vector<1x256xf32>
    %34 = tpu.matmul %1, %33, %cst_18 {dimension_numbers = #tpu.dot_dimension_numbers<[1], [0], [0], [1], [0, 0, 1, 1], [], []>} : vector<1x8xf32>, vector<8x256xf32>, vector<1x256xf32> -> vector<1x256xf32>
    %cst_19 = arith.constant 1.250000e-01 : f32
    %35 = vector.broadcast %cst_19 : f32 to vector<1x256xf32>
    %36 = arith.mulf %32, %35 : vector<1x256xf32>
    %cst_20 = arith.constant 1.250000e-01 : f32
    %37 = vector.broadcast %cst_20 : f32 to vector<1x256xf32>
    %38 = arith.mulf %34, %37 : vector<1x256xf32>
    %39 = arith.mulf %36, %36 : vector<1x256xf32>
    %40 = arith.subf %38, %39 : vector<1x256xf32>
    %c0_21 = arith.constant 0 : index
    %c0_22 = arith.constant 0 : index
    %41 = vector.load %arg5[%c0_21, %c0_22] : memref<1x256xf32, #tpu.memory_space<vmem>>, vector<1x256xf32>
    %cst_23 = arith.constant 9.99999974E-6 : f32
    %42 = vector.broadcast %cst_23 : f32 to vector<1x256xf32>
    %43 = arith.addf %40, %42 : vector<1x256xf32>
    %44 = math.rsqrt %43 : vector<1x256xf32>
    %45 = arith.mulf %41, %44 : vector<1x256xf32>
    %c0_24 = arith.constant 0 : index
    %c0_25 = arith.constant 0 : index
    %46 = vector.load %arg6[%c0_24, %c0_25] : memref<1x256xf32, #tpu.memory_space<vmem>>, vector<1x256xf32>
    %47 = arith.mulf %36, %45 : vector<1x256xf32>
    %48 = arith.subf %46, %47 : vector<1x256xf32>
    %49 = vector.broadcast %45 : vector<1x256xf32> to vector<8x256xf32>
    %50 = arith.mulf %31, %49 : vector<8x256xf32>
    %51 = vector.broadcast %48 : vector<1x256xf32> to vector<8x256xf32>
    %52 = arith.addf %50, %51 : vector<8x256xf32>
    %cst_26 = arith.constant 0.00999999977 : f32
    %53 = vector.broadcast %cst_26 : f32 to vector<8x256xf32>
    %54 = arith.mulf %53, %52 : vector<8x256xf32>
    %55 = arith.maximumf %52, %54 : vector<8x256xf32>
    %c0_27 = arith.constant 0 : index
    %c0_28 = arith.constant 0 : index
    %56 = vector.load %arg7[%c0_27, %c0_28] : memref<256x128xbf16, #tpu.memory_space<vmem>>, vector<256x128xbf16>
    %57 = arith.extf %56 : vector<256x128xbf16> to vector<256x128xf32>
    %cst_29 = arith.constant dense<0.000000e+00> : vector<8x128xf32>
    %58 = tpu.matmul %55, %57, %cst_29 {dimension_numbers = #tpu.dot_dimension_numbers<[1], [0], [0], [1], [0, 0, 1, 1], [], []>} : vector<8x256xf32>, vector<256x128xf32>, vector<8x128xf32> -> vector<8x128xf32>
    %cst_30 = arith.constant dense<0.000000e+00> : vector<1x128xf32>
    %59 = tpu.matmul %1, %58, %cst_30 {dimension_numbers = #tpu.dot_dimension_numbers<[1], [0], [0], [1], [0, 0, 1, 1], [], []>} : vector<1x8xf32>, vector<8x128xf32>, vector<1x128xf32> -> vector<1x128xf32>
    %60 = arith.mulf %58, %58 : vector<8x128xf32>
    %cst_31 = arith.constant dense<0.000000e+00> : vector<1x128xf32>
    %61 = tpu.matmul %1, %60, %cst_31 {dimension_numbers = #tpu.dot_dimension_numbers<[1], [0], [0], [1], [0, 0, 1, 1], [], []>} : vector<1x8xf32>, vector<8x128xf32>, vector<1x128xf32> -> vector<1x128xf32>
    %cst_32 = arith.constant 1.250000e-01 : f32
    %62 = vector.broadcast %cst_32 : f32 to vector<1x128xf32>
    %63 = arith.mulf %59, %62 : vector<1x128xf32>
    %cst_33 = arith.constant 1.250000e-01 : f32
    %64 = vector.broadcast %cst_33 : f32 to vector<1x128xf32>
    %65 = arith.mulf %61, %64 : vector<1x128xf32>
    %66 = arith.mulf %63, %63 : vector<1x128xf32>
    %67 = arith.subf %65, %66 : vector<1x128xf32>
    %c0_34 = arith.constant 0 : index
    %c0_35 = arith.constant 0 : index
    %68 = vector.load %arg8[%c0_34, %c0_35] : memref<1x128xf32, #tpu.memory_space<vmem>>, vector<1x128xf32>
    %cst_36 = arith.constant 9.99999974E-6 : f32
    %69 = vector.broadcast %cst_36 : f32 to vector<1x128xf32>
    %70 = arith.addf %67, %69 : vector<1x128xf32>
    %71 = math.rsqrt %70 : vector<1x128xf32>
    %72 = arith.mulf %68, %71 : vector<1x128xf32>
    %c0_37 = arith.constant 0 : index
    %c0_38 = arith.constant 0 : index
    %73 = vector.load %arg9[%c0_37, %c0_38] : memref<1x128xf32, #tpu.memory_space<vmem>>, vector<1x128xf32>
    %74 = arith.mulf %63, %72 : vector<1x128xf32>
    %75 = arith.subf %73, %74 : vector<1x128xf32>
    %76 = vector.broadcast %72 : vector<1x128xf32> to vector<8x128xf32>
    %77 = arith.mulf %58, %76 : vector<8x128xf32>
    %78 = vector.broadcast %75 : vector<1x128xf32> to vector<8x128xf32>
    %79 = arith.addf %77, %78 : vector<8x128xf32>
    %cst_39 = arith.constant 0.00999999977 : f32
    %80 = vector.broadcast %cst_39 : f32 to vector<8x128xf32>
    %81 = arith.mulf %80, %79 : vector<8x128xf32>
    %82 = arith.maximumf %79, %81 : vector<8x128xf32>
    %c0_40 = arith.constant 0 : index
    %c0_41 = arith.constant 0 : index
    %83 = vector.load %arg10[%c0_40, %c0_41] : memref<128x64xbf16, #tpu.memory_space<vmem>>, vector<128x64xbf16>
    %84 = arith.extf %83 : vector<128x64xbf16> to vector<128x64xf32>
    %cst_42 = arith.constant dense<0.000000e+00> : vector<8x64xf32>
    %85 = tpu.matmul %82, %84, %cst_42 {dimension_numbers = #tpu.dot_dimension_numbers<[1], [0], [0], [1], [0, 0, 1, 1], [], []>} : vector<8x128xf32>, vector<128x64xf32>, vector<8x64xf32> -> vector<8x64xf32>
    %cst_43 = arith.constant dense<0.000000e+00> : vector<1x64xf32>
    %86 = tpu.matmul %1, %85, %cst_43 {dimension_numbers = #tpu.dot_dimension_numbers<[1], [0], [0], [1], [0, 0, 1, 1], [], []>} : vector<1x8xf32>, vector<8x64xf32>, vector<1x64xf32> -> vector<1x64xf32>
    %87 = arith.mulf %85, %85 : vector<8x64xf32>
    %cst_44 = arith.constant dense<0.000000e+00> : vector<1x64xf32>
    %88 = tpu.matmul %1, %87, %cst_44 {dimension_numbers = #tpu.dot_dimension_numbers<[1], [0], [0], [1], [0, 0, 1, 1], [], []>} : vector<1x8xf32>, vector<8x64xf32>, vector<1x64xf32> -> vector<1x64xf32>
    %cst_45 = arith.constant 1.250000e-01 : f32
    %89 = vector.broadcast %cst_45 : f32 to vector<1x64xf32>
    %90 = arith.mulf %86, %89 : vector<1x64xf32>
    %cst_46 = arith.constant 1.250000e-01 : f32
    %91 = vector.broadcast %cst_46 : f32 to vector<1x64xf32>
    %92 = arith.mulf %88, %91 : vector<1x64xf32>
    %93 = arith.mulf %90, %90 : vector<1x64xf32>
    %94 = arith.subf %92, %93 : vector<1x64xf32>
    %c0_47 = arith.constant 0 : index
    %c0_48 = arith.constant 0 : index
    %95 = vector.load %arg11[%c0_47, %c0_48] : memref<1x64xf32, #tpu.memory_space<vmem>>, vector<1x64xf32>
    %cst_49 = arith.constant 9.99999974E-6 : f32
    %96 = vector.broadcast %cst_49 : f32 to vector<1x64xf32>
    %97 = arith.addf %94, %96 : vector<1x64xf32>
    %98 = math.rsqrt %97 : vector<1x64xf32>
    %99 = arith.mulf %95, %98 : vector<1x64xf32>
    %c0_50 = arith.constant 0 : index
    %c0_51 = arith.constant 0 : index
    %100 = vector.load %arg12[%c0_50, %c0_51] : memref<1x64xf32, #tpu.memory_space<vmem>>, vector<1x64xf32>
    %101 = arith.mulf %90, %99 : vector<1x64xf32>
    %102 = arith.subf %100, %101 : vector<1x64xf32>
    %103 = vector.broadcast %99 : vector<1x64xf32> to vector<8x64xf32>
    %104 = arith.mulf %85, %103 : vector<8x64xf32>
    %105 = vector.broadcast %102 : vector<1x64xf32> to vector<8x64xf32>
    %106 = arith.addf %104, %105 : vector<8x64xf32>
    %cst_52 = arith.constant 0.00999999977 : f32
    %107 = vector.broadcast %cst_52 : f32 to vector<8x64xf32>
    %108 = arith.mulf %107, %106 : vector<8x64xf32>
    %109 = arith.maximumf %106, %108 : vector<8x64xf32>
    %c0_53 = arith.constant 0 : index
    %c0_54 = arith.constant 0 : index
    %110 = vector.load %arg13[%c0_53, %c0_54] : memref<64x32xbf16, #tpu.memory_space<vmem>>, vector<64x32xbf16>
    %111 = arith.extf %110 : vector<64x32xbf16> to vector<64x32xf32>
    %cst_55 = arith.constant dense<0.000000e+00> : vector<8x32xf32>
    %112 = tpu.matmul %109, %111, %cst_55 {dimension_numbers = #tpu.dot_dimension_numbers<[1], [0], [0], [1], [0, 0, 1, 1], [], []>} : vector<8x64xf32>, vector<64x32xf32>, vector<8x32xf32> -> vector<8x32xf32>
    %cst_56 = arith.constant dense<0.000000e+00> : vector<1x32xf32>
    %113 = tpu.matmul %1, %112, %cst_56 {dimension_numbers = #tpu.dot_dimension_numbers<[1], [0], [0], [1], [0, 0, 1, 1], [], []>} : vector<1x8xf32>, vector<8x32xf32>, vector<1x32xf32> -> vector<1x32xf32>
    %114 = arith.mulf %112, %112 : vector<8x32xf32>
    %cst_57 = arith.constant dense<0.000000e+00> : vector<1x32xf32>
    %115 = tpu.matmul %1, %114, %cst_57 {dimension_numbers = #tpu.dot_dimension_numbers<[1], [0], [0], [1], [0, 0, 1, 1], [], []>} : vector<1x8xf32>, vector<8x32xf32>, vector<1x32xf32> -> vector<1x32xf32>
    %cst_58 = arith.constant 1.250000e-01 : f32
    %116 = vector.broadcast %cst_58 : f32 to vector<1x32xf32>
    %117 = arith.mulf %113, %116 : vector<1x32xf32>
    %cst_59 = arith.constant 1.250000e-01 : f32
    %118 = vector.broadcast %cst_59 : f32 to vector<1x32xf32>
    %119 = arith.mulf %115, %118 : vector<1x32xf32>
    %120 = arith.mulf %117, %117 : vector<1x32xf32>
    %121 = arith.subf %119, %120 : vector<1x32xf32>
    %c0_60 = arith.constant 0 : index
    %c0_61 = arith.constant 0 : index
    %122 = vector.load %arg14[%c0_60, %c0_61] : memref<1x32xf32, #tpu.memory_space<vmem>>, vector<1x32xf32>
    %cst_62 = arith.constant 9.99999974E-6 : f32
    %123 = vector.broadcast %cst_62 : f32 to vector<1x32xf32>
    %124 = arith.addf %121, %123 : vector<1x32xf32>
    %125 = math.rsqrt %124 : vector<1x32xf32>
    %126 = arith.mulf %122, %125 : vector<1x32xf32>
    %c0_63 = arith.constant 0 : index
    %c0_64 = arith.constant 0 : index
    %127 = vector.load %arg15[%c0_63, %c0_64] : memref<1x32xf32, #tpu.memory_space<vmem>>, vector<1x32xf32>
    %128 = arith.mulf %117, %126 : vector<1x32xf32>
    %129 = arith.subf %127, %128 : vector<1x32xf32>
    %130 = vector.broadcast %126 : vector<1x32xf32> to vector<8x32xf32>
    %131 = arith.mulf %112, %130 : vector<8x32xf32>
    %132 = vector.broadcast %129 : vector<1x32xf32> to vector<8x32xf32>
    %133 = arith.addf %131, %132 : vector<8x32xf32>
    %cst_65 = arith.constant 0.00999999977 : f32
    %134 = vector.broadcast %cst_65 : f32 to vector<8x32xf32>
    %135 = arith.mulf %134, %133 : vector<8x32xf32>
    %136 = arith.maximumf %133, %135 : vector<8x32xf32>
    %c0_66 = arith.constant 0 : index
    %c0_67 = arith.constant 0 : index
    %137 = vector.load %arg16[%c0_66, %c0_67] : memref<8x32xf32, #tpu.memory_space<vmem>>, vector<8x32xf32>
    tpu.vector_store %arg16[%c0_66, %c0_67], %136 {strides = array<i32>} : memref<8x32xf32, #tpu.memory_space<vmem>>, vector<8x32xf32>,
    return
  }
}

</mosaic_0001>

<llo_original>
// kernel: encoder_forward.1
$region0: #{encoder_forward.1}
  #allocation0 [shape = 'u32[]', space=smem, size = 0x4, offset = 0x4, fixed_abs, tag = 'smem constant byte address 0x4 - core index']
  #allocation1 [shape = 'u32[144,128]{1,0:T(1,128)}', space=vmem, size = 0x12000, scoped, tag = 'internal scratch']
  %s0 = inlined_call_operand.vmem [shape: f32[8,896], index: 0, kind: input, shape index: {}]
  %s1 = inlined_call_operand.hbm [shape: bf16[896,512], index: 1, kind: input, shape index: {}]
  %s2 = inlined_call_operand.vmem [shape: f32[1,512], index: 2, kind: input, shape index: {}]
  %s3 = inlined_call_operand.vmem [shape: f32[1,512], index: 3, kind: input, shape index: {}]
  %s4 = inlined_call_operand.vmem [shape: bf16[512,256], index: 4, kind: input, shape index: {}]
  %s5 = inlined_call_operand.vmem [shape: f32[1,256], index: 5, kind: input, shape index: {}]
  %s6 = inlined_call_operand.vmem [shape: f32[1,256], index: 6, kind: input, shape index: {}]
  %s7 = inlined_call_operand.vmem [shape: bf16[256,128], index: 7, kind: input, shape index: {}]
  %s8 = inlined_call_operand.vmem [shape: f32[1,128], index: 8, kind: input, shape index: {}]
  %s9 = inlined_call_operand.vmem [shape: f32[1,128], index: 9, kind: input, shape index: {}]
  %s10 = inlined_call_operand.vmem [shape: bf16[128,64], index: 10, kind: input, shape index: {}]
  %s11 = inlined_call_operand.vmem [shape: f32[1,64], index: 11, kind: input, shape index: {}]
  %s12 = inlined_call_operand.vmem [shape: f32[1,64], index: 12, kind: input, shape index: {}]
  %s13 = inlined_call_operand.vmem [shape: bf16[64,32], index: 13, kind: input, shape index: {}]
  %s14 = inlined_call_operand.vmem [shape: f32[1,32], index: 14, kind: input, shape index: {}]
  %s15 = inlined_call_operand.vmem [shape: f32[1,32], index: 15, kind: input, shape index: {}]
  %s16 = inlined_call_operand.hbm [shape: f32[8,32], index: 16, kind: output, shape index: {}]
  %s17 = sld [smem:[#allocation0]]
  $region78: #{encoder_forward.1} parent=0
    _
  %s19 = ssub.s32 1, %s17
  %s20 = scalar_select 0, %s19, %s17
  $region1: #{encoder_forward.1} parent=0
    #allocation2 [shape = 'u8[917504]{0}', space=vmem, size = 0xe0000, scoped, tag = 'input window, operand 1, single buffered']
    #allocation3 [shape = 's32[1]{0}', space=sflag, size = 0x4, scoped, tag = 'scoped memory for encoder_forward.1']
    #allocation4 [shape = 's32[1]{0}', space=sflag, size = 0x4, scoped, tag = 'scoped memory for encoder_forward.1']
    #allocation5 [shape = 'u8[4096]{0}', space=vmem, size = 0x1000, scoped, tag = 'output window, operand 0, single buffered']
    %21 = vsyncpa [#allocation3], 0
    %22 = vsyncpa [#allocation4], 0
    // Predicated region
    $region2: #{encoder_forward.1} parent=1 // pred_check
      _
    $region3: #{encoder_forward.1} parent=1 // pred_check_branch
      %24 = sbr.rel (0) target = $region5
    $region4: #{encoder_forward.1} parent=1 // pred_region
      _
    $region5: #{encoder_forward.1} parent=1 // pred_fallthru
      _
    // Predicated region
    $region6: #{encoder_forward.1} parent=1 // pred_check
      _
    $region7: #{encoder_forward.1} parent=1 // pred_check_branch
      %26 = sbr.rel (0) target = $region9
    $region8: #{encoder_forward.1} parent=1 // pred_region
      %s28 = ssub.s32 28672, 28672
      %29 = vsyncadd [#allocation3], %s28
      %s30 = sshll.u32 [#allocation2], 4
      %s31 = int_to_ptr.vmem [resolvable:$true] %s30
      %36 = dma.hbm_to_vmem [thread:$0]  %s1, 28672, %s31, [#allocation3], 256, 256, 16
    $region9: #{encoder_forward.1} parent=1 // pred_fallthru
      _
    // Predicated region
    $region10: #{encoder_forward.1} parent=1 // pred_check
      _
    $region11: #{encoder_forward.1} parent=1 // pred_check_branch
      %38 = sbr.rel (0) target = $region13
    $region12: #{encoder_forward.1} parent=1 // pred_region
      _
    $region13: #{encoder_forward.1} parent=1 // pred_fallthru
      _
    // Predicated region
    $region14: #{encoder_forward.1} parent=1 // pred_check
      _
    $region15: #{encoder_forward.1} parent=1 // pred_check_branch
      %40 = sbr.rel (0) target = $region17
    $region16: #{encoder_forward.1} parent=1 // pred_region
      _
    $region17: #{encoder_forward.1} parent=1 // pred_fallthru
      _
    // Predicated region
    $region18: #{encoder_forward.1} parent=1 // pred_check
      _
    $region19: #{encoder_forward.1} parent=1 // pred_check_branch
      %42 = sbr.rel (0) target = $region21
    $region20: #{encoder_forward.1} parent=1 // pred_region
      _
    $region21: #{encoder_forward.1} parent=1 // pred_fallthru
      _
    // Predicated region
    $region22: #{encoder_forward.1} parent=1 // pred_check
      _
    $region23: #{encoder_forward.1} parent=1 // pred_check_branch
      %44 = sbr.rel (0) target = $region25
    $region24: #{encoder_forward.1} parent=1 // pred_region
      _
    $region25: #{encoder_forward.1} parent=1 // pred_fallthru
      _
    // Predicated region
    $region26: #{encoder_forward.1} parent=1 // pred_check
      _
    $region27: #{encoder_forward.1} parent=1 // pred_check_branch
      %46 = sbr.rel (0) target = $region29
    $region28: #{encoder_forward.1} parent=1 // pred_region
      _
    $region29: #{encoder_forward.1} parent=1 // pred_fallthru
      _
    // Predicated region
    $region30: #{encoder_forward.1} parent=1 // pred_check
      _
    $region31: #{encoder_forward.1} parent=1 // pred_check_branch
      %48 = sbr.rel (0) target = $region33
    $region32: #{encoder_forward.1} parent=1 // pred_region
      _
    $region33: #{encoder_forward.1} parent=1 // pred_fallthru
      _
    // Predicated region
    $region34: #{encoder_forward.1} parent=1 // pred_check
      _
    $region35: #{encoder_forward.1} parent=1 // pred_check_branch
      %50 = sbr.rel (0) target = $region37
    $region36: #{encoder_forward.1} parent=1 // pred_region
      _
    $region37: #{encoder_forward.1} parent=1 // pred_fallthru
      _
    // Predicated region
    $region38: #{encoder_forward.1} parent=1 // pred_check
      _
    $region39: #{encoder_forward.1} parent=1 // pred_check_branch
      %52 = sbr.rel (0) target = $region41
    $region40: #{encoder_forward.1} parent=1 // pred_region
      _
    $region41: #{encoder_forward.1} parent=1 // pred_fallthru
      _
    // Predicated region
    $region42: #{encoder_forward.1} parent=1 // pred_check
      _
    $region43: #{encoder_forward.1} parent=1 // pred_check_branch
      %54 = sbr.rel (0) target = $region45
    $region44: #{encoder_forward.1} parent=1 // pred_region
      _
    $region45: #{encoder_forward.1} parent=1 // pred_fallthru
      _
    // Predicated region
    $region46: #{encoder_forward.1} parent=1 // pred_check
      _
    $region47: #{encoder_forward.1} parent=1 // pred_check_branch
      %56 = sbr.rel (0) target = $region49
    $region48: #{encoder_forward.1} parent=1 // pred_region
      _
    $region49: #{encoder_forward.1} parent=1 // pred_fallthru
      _
    // Predicated region
    $region50: #{encoder_forward.1} parent=1 // pred_check
      _
    $region51: #{encoder_forward.1} parent=1 // pred_check_branch
      %58 = sbr.rel (0) target = $region53
    $region52: #{encoder_forward.1} parent=1 // pred_region
      _
    $region53: #{encoder_forward.1} parent=1 // pred_fallthru
      _
    // Predicated region
    $region54: #{encoder_forward.1} parent=1 // pred_check
      _
    $region55: #{encoder_forward.1} parent=1 // pred_check_branch
      %60 = sbr.rel (0) target = $region57
    $region56: #{encoder_forward.1} parent=1 // pred_region
      _
    $region57: #{encoder_forward.1} parent=1 // pred_fallthru
      _
    // Predicated region
    $region58: #{encoder_forward.1} parent=1 // pred_check
      _
    $region59: #{encoder_forward.1} parent=1 // pred_check_branch
      %62 = sbr.rel (0) target = $region61
    $region60: #{encoder_forward.1} parent=1 // pred_region
      _
    $region61: #{encoder_forward.1} parent=1 // pred_fallthru
      _
    // Predicated region
    $region62: #{encoder_forward.1} parent=1 // pred_check
      _
    $region63: #{encoder_forward.1} parent=1 // pred_check_branch
      %64 = sbr.rel (0) target = $region65
    $region64: #{encoder_forward.1} parent=1 // pred_region
      _
    $region65: #{encoder_forward.1} parent=1 // pred_fallthru
      _
    // Predicated region
    $region66: #{encoder_forward.1} parent=1 // pred_check
      _
    $region67: #{encoder_forward.1} parent=1 // pred_check_branch
      %66 = sbr.rel (0) target = $region69
    $region68: #{encoder_forward.1} parent=1 // pred_region
      %67 = dma.done [#allocation3], 28672
    $region69: #{encoder_forward.1} parent=1 // pred_fallthru
      _
    %v68 = vld [vmem:[%s0] sm:$0xff]
    %v69 = vld [vmem:[%s0 + $0x8] sm:$0xff]
    %v70 = vld [vmem:[%s0 + $0x10] sm:$0xff]
    %v71 = vld [vmem:[%s0 + $0x18] sm:$0xff]
    %v72 = vld [vmem:[%s0 + $0x20] sm:$0xff]
    %v73 = vld [vmem:[%s0 + $0x28] sm:$0xff]
    %v74 = vld [vmem:[%s0 + $0x30] sm:$0xff]
    %v75 = vld [vmem:[#allocation2] sm:$0xff]
    %v76 = vld [vmem:[#allocation2 + $0x8] sm:$0xff]
    %v77 = vld [vmem:[#allocation2 + $0x10] sm:$0xff]
    %v78 = vld [vmem:[#allocation2 + $0x18] sm:$0xff]
    %v79 = vld [vmem:[#allocation2 + $0x20] sm:$0xff]
    %v80 = vld [vmem:[#allocation2 + $0x28] sm:$0xff]
    %v81 = vld [vmem:[#allocation2 + $0x30] sm:$0xff]
    %v82 = vld [vmem:[#allocation2 + $0x38] sm:$0xff]
    %v83 = vld [vmem:[#allocation2 + $0x40] sm:$0xff]
    %v84 = vld [vmem:[#allocation2 + $0x48] sm:$0xff]
    %v85 = vld [vmem:[#allocation2 + $0x50] sm:$0xff]
    %v86 = vld [vmem:[#allocation2 + $0x58] sm:$0xff]
    %v87 = vld [vmem:[#allocation2 + $0x60] sm:$0xff]
    %v88 = vld [vmem:[#allocation2 + $0x68] sm:$0xff]
    %v89 = vld [vmem:[#allocation2 + $0x70] sm:$0xff]
    %v90 = vld [vmem:[#allocation2 + $0x78] sm:$0xff]
    %v91 = vld [vmem:[#allocation2 + $0x80] sm:$0xff]
    %v92 = vld [vmem:[#allocation2 + $0x88] sm:$0xff]
    %v93 = vld [vmem:[#allocation2 + $0x90] sm:$0xff]
    %v94 = vld [vmem:[#allocation2 + $0x98] sm:$0xff]
    %v95 = vld [vmem:[#allocation2 + $0xa0] sm:$0xff]
    %v96 = vld [vmem:[#allocation2 + $0xa8] sm:$0xff]
    %v97 = vld [vmem:[#allocation2 + $0xb0] sm:$0xff]
    %v98 = vld [vmem:[#allocation2 + $0xb8] sm:$0xff]
    %v99 = vld [vmem:[#allocation2 + $0xc0] sm:$0xff]
    %v100 = vld [vmem:[#allocation2 + $0xc8] sm:$0xff]
    %v101 = vld [vmem:[#allocation2 + $0xd0] sm:$0xff]
    %v102 = vld [vmem:[#allocation2 + $0xd8] sm:$0xff]
    %v103 = vld [vmem:[#allocation2 + $0xe0] sm:$0xff]
    %v104 = vld [vmem:[#allocation2 + $0xe8] sm:$0xff]
    %v105 = vld [vmem:[#allocation2 + $0xf0] sm:$0xff]
    %v106 = vld [vmem:[#allocation2 + $0xf8] sm:$0xff]
    %v107 = vld [vmem:[#allocation2 + $0x100] sm:$0xff]
    %v108 = vld [vmem:[#allocation2 + $0x108] sm:$0xff]
    %v109 = vld [vmem:[#allocation2 + $0x110] sm:$0xff]
    %v110 = vld [vmem:[#allocation2 + $0x118] sm:$0xff]
    %v111 = vld [vmem:[#allocation2 + $0x120] sm:$0xff]
    %v112 = vld [vmem:[#allocation2 + $0x128] sm:$0xff]
    %v113 = vld [vmem:[#allocation2 + $0x130] sm:$0xff]
    %v114 = vld [vmem:[#allocation2 + $0x138] sm:$0xff]
    %v115 = vld [vmem:[#allocation2 + $0x140] sm:$0xff]
    %v116 = vld [vmem:[#allocation2 + $0x148] sm:$0xff]
    %v117 = vld [vmem:[#allocation2 + $0x150] sm:$0xff]
    %v118 = vld [vmem:[#allocation2 + $0x158] sm:$0xff]
    %v119 = vld [vmem:[#allocation2 + $0x160] sm:$0xff]
    %v120 = vld [vmem:[#allocation2 + $0x168] sm:$0xff]
    %v121 = vld [vmem:[#allocation2 + $0x170] sm:$0xff]
    %v122 = vld [vmem:[#allocation2 + $0x178] sm:$0xff]
    %v123 = vld [vmem:[#allocation2 + $0x180] sm:$0xff]
    %v124 = vld [vmem:[#allocation2 + $0x188] sm:$0xff]
    %v125 = vld [vmem:[#allocation2 + $0x190] sm:$0xff]
    %v126 = vld [vmem:[#allocation2 + $0x198] sm:$0xff]
    %v127 = vld [vmem:[#allocation2 + $0x1a0] sm:$0xff]
    %v128 = vld [vmem:[#allocation2 + $0x1a8] sm:$0xff]
    %v129 = vld [vmem:[#allocation2 + $0x1b0] sm:$0xff]
    %v130 = vld [vmem:[#allocation2 + $0x1b8] sm:$0xff]
    %v131 = vld [vmem:[#allocation2 + $0x1c0] sm:$0xff]
    %v132 = vld [vmem:[#allocation2 + $0x1c8] sm:$0xff]
    %v133 = vld [vmem:[#allocation2 + $0x1d0] sm:$0xff]
    %v134 = vld [vmem:[#allocation2 + $0x1d8] sm:$0xff]
    %v135 = vld [vmem:[#allocation2 + $0x1e0] sm:$0xff]
    %v136 = vld [vmem:[#allocation2 + $0x1e8] sm:$0xff]
    %v137 = vld [vmem:[#allocation2 + $0x1f0] sm:$0xff]
    %v138 = vld [vmem:[#allocation2 + $0x1f8] sm:$0xff]
    %v139 = vld [vmem:[#allocation2 + $0x200] sm:$0xff]
    %v140 = vld [vmem:[#allocation2 + $0x208] sm:$0xff]
    %v141 = vld [vmem:[#allocation2 + $0x210] sm:$0xff]
    %v142 = vld [vmem:[#allocation2 + $0x218] sm:$0xff]
    %v143 = vld [vmem:[#allocation2 + $0x220] sm:$0xff]
    %v144 = vld [vmem:[#allocation2 + $0x228] sm:$0xff]
    %v145 = vld [vmem:[#allocation2 + $0x230] sm:$0xff]
    %v146 = vld [vmem:[#allocation2 + $0x238] sm:$0xff]
    %v147 = vld [vmem:[#allocation2 + $0x240] sm:$0xff]
    %v148 = vld [vmem:[#allocation2 + $0x248] sm:$0xff]
    %v149 = vld [vmem:[#allocation2 + $0x250] sm:$0xff]
    %v150 = vld [vmem:[#allocation2 + $0x258] sm:$0xff]
    %v151 = vld [vmem:[#allocation2 + $0x260] sm:$0xff]
    %v152 = vld [vmem:[#allocation2 + $0x268] sm:$0xff]
    %v153 = vld [vmem:[#allocation2 + $0x270] sm:$0xff]
    %v154 = vld [vmem:[#allocation2 + $0x278] sm:$0xff]
    %v155 = vld [vmem:[#allocation2 + $0x280] sm:$0xff]
    %v156 = vld [vmem:[#allocation2 + $0x288] sm:$0xff]
    %v157 = vld [vmem:[#allocation2 + $0x290] sm:$0xff]
    %v158 = vld [vmem:[#allocation2 + $0x298] sm:$0xff]
    %v159 = vld [vmem:[#allocation2 + $0x2a0] sm:$0xff]
    %v160 = vld [vmem:[#allocation2 + $0x2a8] sm:$0xff]
    %v161 = vld [vmem:[#allocation2 + $0x2b0] sm:$0xff]
    %v162 = vld [vmem:[#allocation2 + $0x2b8] sm:$0xff]
    %v163 = vld [vmem:[#allocation2 + $0x2c0] sm:$0xff]
    %v164 = vld [vmem:[#allocation2 + $0x2c8] sm:$0xff]
    %v165 = vld [vmem:[#allocation2 + $0x2d0] sm:$0xff]
    %v166 = vld [vmem:[#allocation2 + $0x2d8] sm:$0xff]
    %v167 = vld [vmem:[#allocation2 + $0x2e0] sm:$0xff]
    %v168 = vld [vmem:[#allocation2 + $0x2e8] sm:$0xff]
    %v169 = vld [vmem:[#allocation2 + $0x2f0] sm:$0xff]
    %v170 = vld [vmem:[#allocation2 + $0x2f8] sm:$0xff]
    %v171 = vld [vmem:[#allocation2 + $0x300] sm:$0xff]
    %v172 = vld [vmem:[#allocation2 + $0x308] sm:$0xff]
    %v173 = vld [vmem:[#allocation2 + $0x310] sm:$0xff]
    %v174 = vld [vmem:[#allocation2 + $0x318] sm:$0xff]
    %v175 = vld [vmem:[#allocation2 + $0x320] sm:$0xff]
    %v176 = vld [vmem:[#allocation2 + $0x328] sm:$0xff]
    %v177 = vld [vmem:[#allocation2 + $0x330] sm:$0xff]
    %v178 = vld [vmem:[#allocation2 + $0x338] sm:$0xff]
    %v179 = vld [vmem:[#allocation2 + $0x340] sm:$0xff]
    %v180 = vld [vmem:[#allocation2 + $0x348] sm:$0xff]
    %v181 = vld [vmem:[#allocation2 + $0x350] sm:$0xff]
    %v182 = vld [vmem:[#allocation2 + $0x358] sm:$0xff]
    %v183 = vld [vmem:[#allocation2 + $0x360] sm:$0xff]
    %v184 = vld [vmem:[#allocation2 + $0x368] sm:$0xff]
    %v185 = vld [vmem:[#allocation2 + $0x370] sm:$0xff]
    %v186 = vld [vmem:[#allocation2 + $0x378] sm:$0xff]
    %v187 = vld [vmem:[#allocation2 + $0x380] sm:$0xff]
    %v188 = vld [vmem:[#allocation2 + $0x388] sm:$0xff]
    %v189 = vld [vmem:[#allocation2 + $0x390] sm:$0xff]
    %v190 = vld [vmem:[#allocation2 + $0x398] sm:$0xff]
    %v191 = vld [vmem:[#allocation2 + $0x3a0] sm:$0xff]
    %v192 = vld [vmem:[#allocation2 + $0x3a8] sm:$0xff]
    %v193 = vld [vmem:[#allocation2 + $0x3b0] sm:$0xff]
    %v194 = vld [vmem:[#allocation2 + $0x3b8] sm:$0xff]
    %v195 = vld [vmem:[#allocation2 + $0x3c0] sm:$0xff]
    %v196 = vld [vmem:[#allocation2 + $0x3c8] sm:$0xff]
    %v197 = vld [vmem:[#allocation2 + $0x3d0] sm:$0xff]
    %v198 = vld [vmem:[#allocation2 + $0x3d8] sm:$0xff]
    %v199 = vld [vmem:[#allocation2 + $0x3e0] sm:$0xff]
    %v200 = vld [vmem:[#allocation2 + $0x3e8] sm:$0xff]
    %v201 = vld [vmem:[#allocation2 + $0x3f0] sm:$0xff]
    %v202 = vld [vmem:[#allocation2 + $0x3f8] sm:$0xff]
    %v203 = vld [vmem:[#allocation2 + $0x400] sm:$0xff]
    %v204 = vld [vmem:[#allocation2 + $0x408] sm:$0xff]
    %v205 = vld [vmem:[#allocation2 + $0x410] sm:$0xff]
    %v206 = vld [vmem:[#allocation2 + $0x418] sm:$0xff]
    %v207 = vld [vmem:[#allocation2 + $0x420] sm:$0xff]
    %v208 = vld [vmem:[#allocation2 + $0x428] sm:$0xff]
    %v209 = vld [vmem:[#allocation2 + $0x430] sm:$0xff]
    %v210 = vld [vmem:[#allocation2 + $0x438] sm:$0xff]
    %v211 = vld [vmem:[#allocation2 + $0x440] sm:$0xff]
    %v212 = vld [vmem:[#allocation2 + $0x448] sm:$0xff]
    %v213 = vld [vmem:[#allocation2 + $0x450] sm:$0xff]
    %v214 = vld [vmem:[#allocation2 + $0x458] sm:$0xff]
    %v215 = vld [vmem:[#allocation2 + $0x460] sm:$0xff]
    %v216 = vld [vmem:[#allocation2 + $0x468] sm:$0xff]
    %v217 = vld [vmem:[#allocation2 + $0x470] sm:$0xff]
    %v218 = vld [vmem:[#allocation2 + $0x478] sm:$0xff]
    %v219 = vld [vmem:[#allocation2 + $0x480] sm:$0xff]
    %v220 = vld [vmem:[#allocation2 + $0x488] sm:$0xff]
    %v221 = vld [vmem:[#allocation2 + $0x490] sm:$0xff]
    %v222 = vld [vmem:[#allocation2 + $0x498] sm:$0xff]
    %v223 = vld [vmem:[#allocation2 + $0x4a0] sm:$0xff]
    %v224 = vld [vmem:[#allocation2 + $0x4a8] sm:$0xff]
    %v225 = vld [vmem:[#allocation2 + $0x4b0] sm:$0xff]
    %v226 = vld [vmem:[#allocation2 + $0x4b8] sm:$0xff]
    %v227 = vld [vmem:[#allocation2 + $0x4c0] sm:$0xff]
    %v228 = vld [vmem:[#allocation2 + $0x4c8] sm:$0xff]
    %v229 = vld [vmem:[#allocation2 + $0x4d0] sm:$0xff]
    %v230 = vld [vmem:[#allocation2 + $0x4d8] sm:$0xff]
    %v231 = vld [vmem:[#allocation2 + $0x4e0] sm:$0xff]
    %v232 = vld [vmem:[#allocation2 + $0x4e8] sm:$0xff]
    %v233 = vld [vmem:[#allocation2 + $0x4f0] sm:$0xff]
    %v234 = vld [vmem:[#allocation2 + $0x4f8] sm:$0xff]
    %v235 = vld [vmem:[#allocation2 + $0x500] sm:$0xff]
    %v236 = vld [vmem:[#allocation2 + $0x508] sm:$0xff]
    %v237 = vld [vmem:[#allocation2 + $0x510] sm:$0xff]
    %v238 = vld [vmem:[#allocation2 + $0x518] sm:$0xff]
    %v239 = vld [vmem:[#allocation2 + $0x520] sm:$0xff]
    %v240 = vld [vmem:[#allocation2 + $0x528] sm:$0xff]
    %v241 = vld [vmem:[#allocation2 + $0x530] sm:$0xff]
    %v242 = vld [vmem:[#allocation2 + $0x538] sm:$0xff]
    %v243 = vld [vmem:[#allocation2 + $0x540] sm:$0xff]
    %v244 = vld [vmem:[#allocation2 + $0x548] sm:$0xff]
    %v245 = vld [vmem:[#allocation2 + $0x550] sm:$0xff]
    %v246 = vld [vmem:[#allocation2 + $0x558] sm:$0xff]
    %v247 = vld [vmem:[#allocation2 + $0x560] sm:$0xff]
    %v248 = vld [vmem:[#allocation2 + $0x568] sm:$0xff]
    %v249 = vld [vmem:[#allocation2 + $0x570] sm:$0xff]
    %v250 = vld [vmem:[#allocation2 + $0x578] sm:$0xff]
    %v251 = vld [vmem:[#allocation2 + $0x580] sm:$0xff]
    %v252 = vld [vmem:[#allocation2 + $0x588] sm:$0xff]
    %v253 = vld [vmem:[#allocation2 + $0x590] sm:$0xff]
    %v254 = vld [vmem:[#allocation2 + $0x598] sm:$0xff]
    %v255 = vld [vmem:[#allocation2 + $0x5a0] sm:$0xff]
    %v256 = vld [vmem:[#allocation2 + $0x5a8] sm:$0xff]
    %v257 = vld [vmem:[#allocation2 + $0x5b0] sm:$0xff]
    %v258 = vld [vmem:[#allocation2 + $0x5b8] sm:$0xff]
    %v259 = vld [vmem:[#allocation2 + $0x5c0] sm:$0xff]
    %v260 = vld [vmem:[#allocation2 + $0x5c8] sm:$0xff]
    %v261 = vld [vmem:[#allocation2 + $0x5d0] sm:$0xff]
    %v262 = vld [vmem:[#allocation2 + $0x5d8] sm:$0xff]
    %v263 = vld [vmem:[#allocation2 + $0x5e0] sm:$0xff]
    %v264 = vld [vmem:[#allocation2 + $0x5e8] sm:$0xff]
    %v265 = vld [vmem:[#allocation2 + $0x5f0] sm:$0xff]
    %v266 = vld [vmem:[#allocation2 + $0x5f8] sm:$0xff]
    %v267 = vld [vmem:[#allocation2 + $0x600] sm:$0xff]
    %v268 = vld [vmem:[#allocation2 + $0x608] sm:$0xff]
    %v269 = vld [vmem:[#allocation2 + $0x610] sm:$0xff]
    %v270 = vld [vmem:[#allocation2 + $0x618] sm:$0xff]
    %v271 = vld [vmem:[#allocation2 + $0x620] sm:$0xff]
    %v272 = vld [vmem:[#allocation2 + $0x628] sm:$0xff]
    %v273 = vld [vmem:[#allocation2 + $0x630] sm:$0xff]
    %v274 = vld [vmem:[#allocation2 + $0x638] sm:$0xff]
    %v275 = vld [vmem:[#allocation2 + $0x640] sm:$0xff]
    %v276 = vld [vmem:[#allocation2 + $0x648] sm:$0xff]
    %v277 = vld [vmem:[#allocation2 + $0x650] sm:$0xff]
    %v278 = vld [vmem:[#allocation2 + $0x658] sm:$0xff]
    %v279 = vld [vmem:[#allocation2 + $0x660] sm:$0xff]
    %v280 = vld [vmem:[#allocation2 + $0x668] sm:$0xff]
    %v281 = vld [vmem:[#allocation2 + $0x670] sm:$0xff]
    %v282 = vld [vmem:[#allocation2 + $0x678] sm:$0xff]
    %v283 = vld [vmem:[#allocation2 + $0x680] sm:$0xff]
    %v284 = vld [vmem:[#allocation2 + $0x688] sm:$0xff]
    %v285 = vld [vmem:[#allocation2 + $0x690] sm:$0xff]
    %v286 = vld [vmem:[#allocation2 + $0x698] sm:$0xff]
    %v287 = vld [vmem:[#allocation2 + $0x6a0] sm:$0xff]
    %v288 = vld [vmem:[#allocation2 + $0x6a8] sm:$0xff]
    %v289 = vld [vmem:[#allocation2 + $0x6b0] sm:$0xff]
    %v290 = vld [vmem:[#allocation2 + $0x6b8] sm:$0xff]
    %v291 = vld [vmem:[#allocation2 + $0x6c0] sm:$0xff]
    %v292 = vld [vmem:[#allocation2 + $0x6c8] sm:$0xff]
    %v293 = vld [vmem:[#allocation2 + $0x6d0] sm:$0xff]
    %v294 = vld [vmem:[#allocation2 + $0x6d8] sm:$0xff]
    %v295 = vld [vmem:[#allocation2 + $0x6e0] sm:$0xff]
    %v296 = vld [vmem:[#allocation2 + $0x6e8] sm:$0xff]
    %v297 = vld [vmem:[#allocation2 + $0x6f0] sm:$0xff]
    %v298 = vld [vmem:[#allocation2 + $0x6f8] sm:$0xff]
    %v299 = vunpack.c.l.bf16 %v75
    %v300 = vunpack.c.h.bf16 %v75
    %v301 = vunpack.c.l.bf16 %v76
    %v302 = vunpack.c.h.bf16 %v76
    %v303 = vunpack.c.l.bf16 %v77
    %v304 = vunpack.c.h.bf16 %v77
    %v305 = vunpack.c.l.bf16 %v78
    %v306 = vunpack.c.h.bf16 %v78
    %v307 = vunpack.c.l.bf16 %v79
    %v308 = vunpack.c.h.bf16 %v79
    %v309 = vunpack.c.l.bf16 %v80
    %v310 = vunpack.c.h.bf16 %v80
    %v311 = vunpack.c.l.bf16 %v81
    %v312 = vunpack.c.h.bf16 %v81
    %v313 = vunpack.c.l.bf16 %v82
    %v314 = vunpack.c.h.bf16 %v82
    %v315 = vunpack.c.l.bf16 %v83
    %v316 = vunpack.c.h.bf16 %v83
    %v317 = vunpack.c.l.bf16 %v84
    %v318 = vunpack.c.h.bf16 %v84
    %v319 = vunpack.c.l.bf16 %v85
    %v320 = vunpack.c.h.bf16 %v85
    %v321 = vunpack.c.l.bf16 %v86
    %v322 = vunpack.c.h.bf16 %v86
    %v323 = vunpack.c.l.bf16 %v87
    %v324 = vunpack.c.h.bf16 %v87
    %v325 = vunpack.c.l.bf16 %v88
    %v326 = vunpack.c.h.bf16 %v88
    %v327 = vunpack.c.l.bf16 %v89
    %v328 = vunpack.c.h.bf16 %v89
    %v329 = vunpack.c.l.bf16 %v90
    %v330 = vunpack.c.h.bf16 %v90
    %v331 = vunpack.c.l.bf16 %v91
    %v332 = vunpack.c.h.bf16 %v91
    %v333 = vunpack.c.l.bf16 %v92
    %v334 = vunpack.c.h.bf16 %v92
    %v335 = vunpack.c.l.bf16 %v93
    %v336 = vunpack.c.h.bf16 %v93
    %v337 = vunpack.c.l.bf16 %v94
    %v338 = vunpack.c.h.bf16 %v94
    %v339 = vunpack.c.l.bf16 %v95
    %v340 = vunpack.c.h.bf16 %v95
    %v341 = vunpack.c.l.bf16 %v96
    %v342 = vunpack.c.h.bf16 %v96
    %v343 = vunpack.c.l.bf16 %v97
    %v344 = vunpack.c.h.bf16 %v97
    %v345 = vunpack.c.l.bf16 %v98
    %v346 = vunpack.c.h.bf16 %v98
    %v347 = vunpack.c.l.bf16 %v99
    %v348 = vunpack.c.h.bf16 %v99
    %v349 = vunpack.c.l.bf16 %v100
    %v350 = vunpack.c.h.bf16 %v100
    %v351 = vunpack.c.l.bf16 %v101
    %v352 = vunpack.c.h.bf16 %v101
    %v353 = vunpack.c.l.bf16 %v102
    %v354 = vunpack.c.h.bf16 %v102
    %v355 = vunpack.c.l.bf16 %v103
    %v356 = vunpack.c.h.bf16 %v103
    %v357 = vunpack.c.l.bf16 %v104
    %v358 = vunpack.c.h.bf16 %v104
    %v359 = vunpack.c.l.bf16 %v105
    %v360 = vunpack.c.h.bf16 %v105
    %v361 = vunpack.c.l.bf16 %v106
    %v362 = vunpack.c.h.bf16 %v106
    %v363 = vunpack.c.l.bf16 %v107
    %v364 = vunpack.c.h.bf16 %v107
    %v365 = vunpack.c.l.bf16 %v108
    %v366 = vunpack.c.h.bf16 %v108
    %v367 = vunpack.c.l.bf16 %v109
    %v368 = vunpack.c.h.bf16 %v109
    %v369 = vunpack.c.l.bf16 %v110
    %v370 = vunpack.c.h.bf16 %v110
    %v371 = vunpack.c.l.bf16 %v111
    %v372 = vunpack.c.h.bf16 %v111
    %v373 = vunpack.c.l.bf16 %v112
    %v374 = vunpack.c.h.bf16 %v112
    %v375 = vunpack.c.l.bf16 %v113
    %v376 = vunpack.c.h.bf16 %v113
    %v377 = vunpack.c.l.bf16 %v114
    %v378 = vunpack.c.h.bf16 %v114
    %v379 = vunpack.c.l.bf16 %v115
    %v380 = vunpack.c.h.bf16 %v115
    %v381 = vunpack.c.l.bf16 %v116
    %v382 = vunpack.c.h.bf16 %v116
    %v383 = vunpack.c.l.bf16 %v117
    %v384 = vunpack.c.h.bf16 %v117
    %v385 = vunpack.c.l.bf16 %v118
    %v386 = vunpack.c.h.bf16 %v118
    %v387 = vunpack.c.l.bf16 %v119
    %v388 = vunpack.c.h.bf16 %v119
    %v389 = vunpack.c.l.bf16 %v120
    %v390 = vunpack.c.h.bf16 %v120
    %v391 = vunpack.c.l.bf16 %v121
    %v392 = vunpack.c.h.bf16 %v121
    %v393 = vunpack.c.l.bf16 %v122
    %v394 = vunpack.c.h.bf16 %v122
    %v395 = vunpack.c.l.bf16 %v123
    %v396 = vunpack.c.h.bf16 %v123
    %v397 = vunpack.c.l.bf16 %v124
    %v398 = vunpack.c.h.bf16 %v124
    %v399 = vunpack.c.l.bf16 %v125
    %v400 = vunpack.c.h.bf16 %v125
    %v401 = vunpack.c.l.bf16 %v126
    %v402 = vunpack.c.h.bf16 %v126
    %v403 = vunpack.c.l.bf16 %v127
    %v404 = vunpack.c.h.bf16 %v127
    %v405 = vunpack.c.l.bf16 %v128
    %v406 = vunpack.c.h.bf16 %v128
    %v407 = vunpack.c.l.bf16 %v129
    %v408 = vunpack.c.h.bf16 %v129
    %v409 = vunpack.c.l.bf16 %v130
    %v410 = vunpack.c.h.bf16 %v130
    %v411 = vunpack.c.l.bf16 %v131
    %v412 = vunpack.c.h.bf16 %v131
    %v413 = vunpack.c.l.bf16 %v132
    %v414 = vunpack.c.h.bf16 %v132
    %v415 = vunpack.c.l.bf16 %v133
    %v416 = vunpack.c.h.bf16 %v133
    %v417 = vunpack.c.l.bf16 %v134
    %v418 = vunpack.c.h.bf16 %v134
    %v419 = vunpack.c.l.bf16 %v135
    %v420 = vunpack.c.h.bf16 %v135
    %v421 = vunpack.c.l.bf16 %v136
    %v422 = vunpack.c.h.bf16 %v136
    %v423 = vunpack.c.l.bf16 %v137
    %v424 = vunpack.c.h.bf16 %v137
    %v425 = vunpack.c.l.bf16 %v138
    %v426 = vunpack.c.h.bf16 %v138
    %v427 = vunpack.c.l.bf16 %v139
    %v428 = vunpack.c.h.bf16 %v139
    %v429 = vunpack.c.l.bf16 %v140
    %v430 = vunpack.c.h.bf16 %v140
    %v431 = vunpack.c.l.bf16 %v141
    %v432 = vunpack.c.h.bf16 %v141
    %v433 = vunpack.c.l.bf16 %v142
    %v434 = vunpack.c.h.bf16 %v142
    %v435 = vunpack.c.l.bf16 %v143
    %v436 = vunpack.c.h.bf16 %v143
    %v437 = vunpack.c.l.bf16 %v144
    %v438 = vunpack.c.h.bf16 %v144
    %v439 = vunpack.c.l.bf16 %v145
    %v440 = vunpack.c.h.bf16 %v145
    %v441 = vunpack.c.l.bf16 %v146
    %v442 = vunpack.c.h.bf16 %v146
    %v443 = vunpack.c.l.bf16 %v147
    %v444 = vunpack.c.h.bf16 %v147
    %v445 = vunpack.c.l.bf16 %v148
    %v446 = vunpack.c.h.bf16 %v148
    %v447 = vunpack.c.l.bf16 %v149
    %v448 = vunpack.c.h.bf16 %v149
    %v449 = vunpack.c.l.bf16 %v150
    %v450 = vunpack.c.h.bf16 %v150
    %v451 = vunpack.c.l.bf16 %v151
    %v452 = vunpack.c.h.bf16 %v151
    %v453 = vunpack.c.l.bf16 %v152
    %v454 = vunpack.c.h.bf16 %v152
    %v455 = vunpack.c.l.bf16 %v153
    %v456 = vunpack.c.h.bf16 %v153
    %v457 = vunpack.c.l.bf16 %v154
    %v458 = vunpack.c.h.bf16 %v154
    %v459 = vunpack.c.l.bf16 %v155
    %v460 = vunpack.c.h.bf16 %v155
    %v461 = vunpack.c.l.bf16 %v156
    %v462 = vunpack.c.h.bf16 %v156
    %v463 = vunpack.c.l.bf16 %v157
    %v464 = vunpack.c.h.bf16 %v157
    %v465 = vunpack.c.l.bf16 %v158
    %v466 = vunpack.c.h.bf16 %v158
    %v467 = vunpack.c.l.bf16 %v159
    %v468 = vunpack.c.h.bf16 %v159
    %v469 = vunpack.c.l.bf16 %v160
    %v470 = vunpack.c.h.bf16 %v160
    %v471 = vunpack.c.l.bf16 %v161
    %v472 = vunpack.c.h.bf16 %v161
    %v473 = vunpack.c.l.bf16 %v162
    %v474 = vunpack.c.h.bf16 %v162
    %v475 = vunpack.c.l.bf16 %v163
    %v476 = vunpack.c.h.bf16 %v163
    %v477 = vunpack.c.l.bf16 %v164
    %v478 = vunpack.c.h.bf16 %v164
    %v479 = vunpack.c.l.bf16 %v165
    %v480 = vunpack.c.h.bf16 %v165
    %v481 = vunpack.c.l.bf16 %v166
    %v482 = vunpack.c.h.bf16 %v166
    %v483 = vunpack.c.l.bf16 %v167
    %v484 = vunpack.c.h.bf16 %v167
    %v485 = vunpack.c.l.bf16 %v168
    %v486 = vunpack.c.h.bf16 %v168
    %v487 = vunpack.c.l.bf16 %v169
    %v488 = vunpack.c.h.bf16 %v169
    %v489 = vunpack.c.l.bf16 %v170
    %v490 = vunpack.c.h.bf16 %v170
    %v491 = vunpack.c.l.bf16 %v171
    %v492 = vunpack.c.h.bf16 %v171
    %v493 = vunpack.c.l.bf16 %v172
    %v494 = vunpack.c.h.bf16 %v172
    %v495 = vunpack.c.l.bf16 %v173
    %v496 = vunpack.c.h.bf16 %v173
    %v497 = vunpack.c.l.bf16 %v174
    %v498 = vunpack.c.h.bf16 %v174
    %v499 = vunpack.c.l.bf16 %v175
    %v500 = vunpack.c.h.bf16 %v175
    %v501 = vunpack.c.l.bf16 %v176
    %v502 = vunpack.c.h.bf16 %v176
    %v503 = vunpack.c.l.bf16 %v177
    %v504 = vunpack.c.h.bf16 %v177
    %v505 = vunpack.c.l.bf16 %v178
    %v506 = vunpack.c.h.bf16 %v178
    %v507 = vunpack.c.l.bf16 %v179
    %v508 = vunpack.c.h.bf16 %v179
    %v509 = vunpack.c.l.bf16 %v180
    %v510 = vunpack.c.h.bf16 %v180
    %v511 = vunpack.c.l.bf16 %v181
    %v512 = vunpack.c.h.bf16 %v181
    %v513 = vunpack.c.l.bf16 %v182
    %v514 = vunpack.c.h.bf16 %v182
    %v515 = vunpack.c.l.bf16 %v183
    %v516 = vunpack.c.h.bf16 %v183
    %v517 = vunpack.c.l.bf16 %v184
    %v518 = vunpack.c.h.bf16 %v184
    %v519 = vunpack.c.l.bf16 %v185
    %v520 = vunpack.c.h.bf16 %v185
    %v521 = vunpack.c.l.bf16 %v186
    %v522 = vunpack.c.h.bf16 %v186
    %v523 = vunpack.c.l.bf16 %v187
    %v524 = vunpack.c.h.bf16 %v187
    %v525 = vunpack.c.l.bf16 %v188
    %v526 = vunpack.c.h.bf16 %v188
    %v527 = vunpack.c.l.bf16 %v189
    %v528 = vunpack.c.h.bf16 %v189
    %v529 = vunpack.c.l.bf16 %v190
    %v530 = vunpack.c.h.bf16 %v190
    %v531 = vunpack.c.l.bf16 %v191
    %v532 = vunpack.c.h.bf16 %v191
    %v533 = vunpack.c.l.bf16 %v192
    %v534 = vunpack.c.h.bf16 %v192
    %v535 = vunpack.c.l.bf16 %v193
    %v536 = vunpack.c.h.bf16 %v193
    %v537 = vunpack.c.l.bf16 %v194
    %v538 = vunpack.c.h.bf16 %v194
    %v539 = vunpack.c.l.bf16 %v195
    %v540 = vunpack.c.h.bf16 %v195
    %v541 = vunpack.c.l.bf16 %v196
    %v542 = vunpack.c.h.bf16 %v196
    %v543 = vunpack.c.l.bf16 %v197
    %v544 = vunpack.c.h.bf16 %v197
    %v545 = vunpack.c.l.bf16 %v198
    %v546 = vunpack.c.h.bf16 %v198
    %v547 = vunpack.c.l.bf16 %v199
    %v548 = vunpack.c.h.bf16 %v199
    %v549 = vunpack.c.l.bf16 %v200
    %v550 = vunpack.c.h.bf16 %v200
    %v551 = vunpack.c.l.bf16 %v201
    %v552 = vunpack.c.h.bf16 %v201
    %v553 = vunpack.c.l.bf16 %v202
    %v554 = vunpack.c.h.bf16 %v202
    %v555 = vunpack.c.l.bf16 %v203
    %v556 = vunpack.c.h.bf16 %v203
    %v557 = vunpack.c.l.bf16 %v204
    %v558 = vunpack.c.h.bf16 %v204
    %v559 = vunpack.c.l.bf16 %v205
    %v560 = vunpack.c.h.bf16 %v205
    %v561 = vunpack.c.l.bf16 %v206
    %v562 = vunpack.c.h.bf16 %v206
    %v563 = vunpack.c.l.bf16 %v207
    %v564 = vunpack.c.h.bf16 %v207
    %v565 = vunpack.c.l.bf16 %v208
    %v566 = vunpack.c.h.bf16 %v208
    %v567 = vunpack.c.l.bf16 %v209
    %v568 = vunpack.c.h.bf16 %v209
    %v569 = vunpack.c.l.bf16 %v210
    %v570 = vunpack.c.h.bf16 %v210
    %v571 = vunpack.c.l.bf16 %v211
    %v572 = vunpack.c.h.bf16 %v211
    %v573 = vunpack.c.l.bf16 %v212
    %v574 = vunpack.c.h.bf16 %v212
    %v575 = vunpack.c.l.bf16 %v213
    %v576 = vunpack.c.h.bf16 %v213
    %v577 = vunpack.c.l.bf16 %v214
    %v578 = vunpack.c.h.bf16 %v214
    %v579 = vunpack.c.l.bf16 %v215
    %v580 = vunpack.c.h.bf16 %v215
    %v581 = vunpack.c.l.bf16 %v216
    %v582 = vunpack.c.h.bf16 %v216
    %v583 = vunpack.c.l.bf16 %v217
    %v584 = vunpack.c.h.bf16 %v217
    %v585 = vunpack.c.l.bf16 %v218
    %v586 = vunpack.c.h.bf16 %v218
    %v587 = vunpack.c.l.bf16 %v219
    %v588 = vunpack.c.h.bf16 %v219
    %v589 = vunpack.c.l.bf16 %v220
    %v590 = vunpack.c.h.bf16 %v220
    %v591 = vunpack.c.l.bf16 %v221
    %v592 = vunpack.c.h.bf16 %v221
    %v593 = vunpack.c.l.bf16 %v222
    %v594 = vunpack.c.h.bf16 %v222
    %v595 = vunpack.c.l.bf16 %v223
    %v596 = vunpack.c.h.bf16 %v223
    %v597 = vunpack.c.l.bf16 %v224
    %v598 = vunpack.c.h.bf16 %v224
    %v599 = vunpack.c.l.bf16 %v225
    %v600 = vunpack.c.h.bf16 %v225
    %v601 = vunpack.c.l.bf16 %v226
    %v602 = vunpack.c.h.bf16 %v226
    %v603 = vunpack.c.l.bf16 %v227
    %v604 = vunpack.c.h.bf16 %v227
    %v605 = vunpack.c.l.bf16 %v228
    %v606 = vunpack.c.h.bf16 %v228
    %v607 = vunpack.c.l.bf16 %v229
    %v608 = vunpack.c.h.bf16 %v229
    %v609 = vunpack.c.l.bf16 %v230
    %v610 = vunpack.c.h.bf16 %v230
    %v611 = vunpack.c.l.bf16 %v231
    %v612 = vunpack.c.h.bf16 %v231
    %v613 = vunpack.c.l.bf16 %v232
    %v614 = vunpack.c.h.bf16 %v232
    %v615 = vunpack.c.l.bf16 %v233
    %v616 = vunpack.c.h.bf16 %v233
    %v617 = vunpack.c.l.bf16 %v234
    %v618 = vunpack.c.h.bf16 %v234
    %v619 = vunpack.c.l.bf16 %v235
    %v620 = vunpack.c.h.bf16 %v235
    %v621 = vunpack.c.l.bf16 %v236
    %v622 = vunpack.c.h.bf16 %v236
    %v623 = vunpack.c.l.bf16 %v237
    %v624 = vunpack.c.h.bf16 %v237
    %v625 = vunpack.c.l.bf16 %v238
    %v626 = vunpack.c.h.bf16 %v238
    %v627 = vunpack.c.l.bf16 %v239
    %v628 = vunpack.c.h.bf16 %v239
    %v629 = vunpack.c.l.bf16 %v240
    %v630 = vunpack.c.h.bf16 %v240
    %v631 = vunpack.c.l.bf16 %v241
    %v632 = vunpack.c.h.bf16 %v241
    %v633 = vunpack.c.l.bf16 %v242
    %v634 = vunpack.c.h.bf16 %v242
    %v635 = vunpack.c.l.bf16 %v243
    %v636 = vunpack.c.h.bf16 %v243
    %v637 = vunpack.c.l.bf16 %v244
    %v638 = vunpack.c.h.bf16 %v244
    %v639 = vunpack.c.l.bf16 %v245
    %v640 = vunpack.c.h.bf16 %v245
    %v641 = vunpack.c.l.bf16 %v246
    %v642 = vunpack.c.h.bf16 %v246
    %v643 = vunpack.c.l.bf16 %v247
    %v644 = vunpack.c.h.bf16 %v247
    %v645 = vunpack.c.l.bf16 %v248
    %v646 = vunpack.c.h.bf16 %v248
    %v647 = vunpack.c.l.bf16 %v249
    %v648 = vunpack.c.h.bf16 %v249
    %v649 = vunpack.c.l.bf16 %v250
    %v650 = vunpack.c.h.bf16 %v250
    %v651 = vunpack.c.l.bf16 %v251
    %v652 = vunpack.c.h.bf16 %v251
    %v653 = vunpack.c.l.bf16 %v252
    %v654 = vunpack.c.h.bf16 %v252
    %v655 = vunpack.c.l.bf16 %v253
    %v656 = vunpack.c.h.bf16 %v253
    %v657 = vunpack.c.l.bf16 %v254
    %v658 = vunpack.c.h.bf16 %v254
    %v659 = vunpack.c.l.bf16 %v255
    %v660 = vunpack.c.h.bf16 %v255
    %v661 = vunpack.c.l.bf16 %v256
    %v662 = vunpack.c.h.bf16 %v256
    %v663 = vunpack.c.l.bf16 %v257
    %v664 = vunpack.c.h.bf16 %v257
    %v665 = vunpack.c.l.bf16 %v258
    %v666 = vunpack.c.h.bf16 %v258
    %v667 = vunpack.c.l.bf16 %v259
    %v668 = vunpack.c.h.bf16 %v259
    %v669 = vunpack.c.l.bf16 %v260
    %v670 = vunpack.c.h.bf16 %v260
    %v671 = vunpack.c.l.bf16 %v261
    %v672 = vunpack.c.h.bf16 %v261
    %v673 = vunpack.c.l.bf16 %v262
    %v674 = vunpack.c.h.bf16 %v262
    %v675 = vunpack.c.l.bf16 %v263
    %v676 = vunpack.c.h.bf16 %v263
    %v677 = vunpack.c.l.bf16 %v264
    %v678 = vunpack.c.h.bf16 %v264
    %v679 = vunpack.c.l.bf16 %v265
    %v680 = vunpack.c.h.bf16 %v265
    %v681 = vunpack.c.l.bf16 %v266
    %v682 = vunpack.c.h.bf16 %v266
    %v683 = vunpack.c.l.bf16 %v267
    %v684 = vunpack.c.h.bf16 %v267
    %v685 = vunpack.c.l.bf16 %v268
    %v686 = vunpack.c.h.bf16 %v268
    %v687 = vunpack.c.l.bf16 %v269
    %v688 = vunpack.c.h.bf16 %v269
    %v689 = vunpack.c.l.bf16 %v270
    %v690 = vunpack.c.h.bf16 %v270
    %v691 = vunpack.c.l.bf16 %v271
    %v692 = vunpack.c.h.bf16 %v271
    %v693 = vunpack.c.l.bf16 %v272
    %v694 = vunpack.c.h.bf16 %v272
    %v695 = vunpack.c.l.bf16 %v273
    %v696 = vunpack.c.h.bf16 %v273
    %v697 = vunpack.c.l.bf16 %v274
    %v698 = vunpack.c.h.bf16 %v274
    %v699 = vunpack.c.l.bf16 %v275
    %v700 = vunpack.c.h.bf16 %v275
    %v701 = vunpack.c.l.bf16 %v276
    %v702 = vunpack.c.h.bf16 %v276
    %v703 = vunpack.c.l.bf16 %v277
    %v704 = vunpack.c.h.bf16 %v277
    %v705 = vunpack.c.l.bf16 %v278
    %v706 = vunpack.c.h.bf16 %v278
    %v707 = vunpack.c.l.bf16 %v279
    %v708 = vunpack.c.h.bf16 %v279
    %v709 = vunpack.c.l.bf16 %v280
    %v710 = vunpack.c.h.bf16 %v280
    %v711 = vunpack.c.l.bf16 %v281
    %v712 = vunpack.c.h.bf16 %v281
    %v713 = vunpack.c.l.bf16 %v282
    %v714 = vunpack.c.h.bf16 %v282
    %v715 = vunpack.c.l.bf16 %v283
    %v716 = vunpack.c.h.bf16 %v283
    %v717 = vunpack.c.l.bf16 %v284
    %v718 = vunpack.c.h.bf16 %v284
    %v719 = vunpack.c.l.bf16 %v285
    %v720 = vunpack.c.h.bf16 %v285
    %v721 = vunpack.c.l.bf16 %v286
    %v722 = vunpack.c.h.bf16 %v286
    %v723 = vunpack.c.l.bf16 %v287
    %v724 = vunpack.c.h.bf16 %v287
    %v725 = vunpack.c.l.bf16 %v288
    %v726 = vunpack.c.h.bf16 %v288
    %v727 = vunpack.c.l.bf16 %v289
    %v728 = vunpack.c.h.bf16 %v289
    %v729 = vunpack.c.l.bf16 %v290
    %v730 = vunpack.c.h.bf16 %v290
    %v731 = vunpack.c.l.bf16 %v291
    %v732 = vunpack.c.h.bf16 %v291
    %v733 = vunpack.c.l.bf16 %v292
    %v734 = vunpack.c.h.bf16 %v292
    %v735 = vunpack.c.l.bf16 %v293
    %v736 = vunpack.c.h.bf16 %v293
    %v737 = vunpack.c.l.bf16 %v294
    %v738 = vunpack.c.h.bf16 %v294
    %v739 = vunpack.c.l.bf16 %v295
    %v740 = vunpack.c.h.bf16 %v295
    %v741 = vunpack.c.l.bf16 %v296
    %v742 = vunpack.c.h.bf16 %v296
    %v743 = vunpack.c.l.bf16 %v297
    %v744 = vunpack.c.h.bf16 %v297
    %v745 = vunpack.c.l.bf16 %v298
    %v746 = vunpack.c.h.bf16 %v298
    %747 = vmatprep.subr.mxu0 %v300
    %748 = vmatpush1.msra.mxu0 %v299
    %749 = vmatprep.subr.mxu0 %v304
    %750 = vmatpush1.msra.mxu0 %v303
    %751 = vmatprep.subr.mxu0 %v308
    %752 = vmatpush1.msra.mxu0 %v307
    %753 = vmatprep.subr.mxu0 %v312
    %754 = vmatpush1.msra.mxu0 %v311
    %755 = vmatprep.subr.mxu0 %v316
    %756 = vmatpush1.msra.mxu0 %v315
    %757 = vmatprep.subr.mxu0 %v320
    %758 = vmatpush1.msra.mxu0 %v319
    %759 = vmatprep.subr.mxu0 %v324
    %760 = vmatpush1.msra.mxu0 %v323
    %761 = vmatprep.subr.mxu0 %v328
    %762 = vmatpush1.msra.mxu0 %v327
    %763 = vmatprep.subr.mxu0 %v332
    %764 = vmatpush1.msra.mxu0 %v331
    %765 = vmatprep.subr.mxu0 %v336
    %766 = vmatpush1.msra.mxu0 %v335
    %767 = vmatprep.subr.mxu0 %v340
    %768 = vmatpush1.msra.mxu0 %v339
    %769 = vmatprep.subr.mxu0 %v344
    %770 = vmatpush1.msra.mxu0 %v343
    %771 = vmatprep.subr.mxu0 %v348
    %772 = vmatpush1.msra.mxu0 %v347
    %773 = vmatprep.subr.mxu0 %v352
    %774 = vmatpush1.msra.mxu0 %v351
    %775 = vmatprep.subr.mxu0 %v356
    %776 = vmatpush1.msra.mxu0 %v355
    %777 = vmatprep.subr.mxu0 %v360
    %778 = vmatpush1.msra.mxu0 %v359
    %779 = vmatprep.subr.mxu0 %v364
    %780 = vmatpush1.msra.mxu0 %v363
    %781 = vmatprep.subr.mxu0 %v368
    %782 = vmatpush1.msra.mxu0 %v367
    %783 = vmatprep.subr.mxu0 %v372
    %784 = vmatpush1.msra.mxu0 %v371
    %785 = vmatprep.subr.mxu0 %v376
    %786 = vmatpush1.msra.mxu0 %v375
    %787 = vmatprep.subr.mxu0 %v380
    %788 = vmatpush1.msra.mxu0 %v379
    %789 = vmatprep.subr.mxu0 %v384
    %790 = vmatpush1.msra.mxu0 %v383
    %791 = vmatprep.subr.mxu0 %v388
    %792 = vmatpush1.msra.mxu0 %v387
    %793 = vmatprep.subr.mxu0 %v392
    %794 = vmatpush1.msra.mxu0 %v391
    %795 = vmatprep.subr.mxu0 %v396
    %796 = vmatpush1.msra.mxu0 %v395
    %797 = vmatprep.subr.mxu0 %v400
    %798 = vmatpush1.msra.mxu0 %v399
    %799 = vmatprep.subr.mxu0 %v404
    %800 = vmatpush1.msra.mxu0 %v403
    %801 = vmatprep.subr.mxu0 %v408
    %802 = vmatpush1.msra.mxu0 %v407
    %803 = vmatprep.subr.mxu0 %v412
    %804 = vmatpush1.msra.mxu0 %v411
    %805 = vmatprep.subr.mxu0 %v416
    %806 = vmatpush1.msra.mxu0 %v415
    %807 = vmatprep.subr.mxu0 %v420
    %808 = vmatpush1.msra.mxu0 %v419
    %809 = vmatprep.subr.mxu0 %v424
    %810 = vmatpush1.msra.mxu0 %v423
    %811 = vmatprep.mubr.f32.mxu0 %v69
    %812 = vmatmul.mubr.f32.gmra.mrb[0].mxu0 %v68
    %v813 = vpop.f32.mrb[0].mxu0
    %v814 = vadd.f32 0.0, %v813
    %v815 = vpop.f32.mrb[0].mxu0
    %v816 = vadd.f32 0.0, %v815
    %817 = vdwg.mxu0
    %818 = vmatprep.subr.mxu0 %v428
    %819 = vmatpush1.msra.mxu0 %v427
    %820 = vmatprep.subr.mxu0 %v432
    %821 = vmatpush1.msra.mxu0 %v431
    %822 = vmatprep.subr.mxu0 %v436
    %823 = vmatpush1.msra.mxu0 %v435
    %824 = vmatprep.subr.mxu0 %v440
    %825 = vmatpush1.msra.mxu0 %v439
    %826 = vmatprep.subr.mxu0 %v444
    %827 = vmatpush1.msra.mxu0 %v443
    %828 = vmatprep.subr.mxu0 %v448
    %829 = vmatpush1.msra.mxu0 %v447
    %830 = vmatprep.subr.mxu0 %v452
    %831 = vmatpush1.msra.mxu0 %v451
    %832 = vmatprep.subr.mxu0 %v456
    %833 = vmatpush1.msra.mxu0 %v455
    %834 = vmatprep.subr.mxu0 %v460
    %835 = vmatpush1.msra.mxu0 %v459
    %836 = vmatprep.subr.mxu0 %v464
    %837 = vmatpush1.msra.mxu0 %v463
    %838 = vmatprep.subr.mxu0 %v468
    %839 = vmatpush1.msra.mxu0 %v467
    %840 = vmatprep.subr.mxu0 %v472
    %841 = vmatpush1.msra.mxu0 %v471
    %842 = vmatprep.subr.mxu0 %v476
    %843 = vmatpush1.msra.mxu0 %v475
    %844 = vmatprep.subr.mxu0 %v480
    %845 = vmatpush1.msra.mxu0 %v479
    %846 = vmatprep.subr.mxu0 %v484
    %847 = vmatpush1.msra.mxu0 %v483
    %848 = vmatprep.subr.mxu0 %v488
    %849 = vmatpush1.msra.mxu0 %v487
    %850 = vmatprep.subr.mxu0 %v492
    %851 = vmatpush1.msra.mxu0 %v491
    %852 = vmatprep.subr.mxu0 %v496
    %853 = vmatpush1.msra.mxu0 %v495
    %854 = vmatprep.subr.mxu0 %v500
    %855 = vmatpush1.msra.mxu0 %v499
    %856 = vmatprep.subr.mxu0 %v504
    %857 = vmatpush1.msra.mxu0 %v503
    %858 = vmatprep.subr.mxu0 %v508
    %859 = vmatpush1.msra.mxu0 %v507
    %860 = vmatprep.subr.mxu0 %v512
    %861 = vmatpush1.msra.mxu0 %v511
    %862 = vmatprep.subr.mxu0 %v516
    %863 = vmatpush1.msra.mxu0 %v515
    %864 = vmatprep.subr.mxu0 %v520
    %865 = vmatpush1.msra.mxu0 %v519
    %866 = vmatprep.subr.mxu0 %v524
    %867 = vmatpush1.msra.mxu0 %v523
    %868 = vmatprep.subr.mxu0 %v528
    %869 = vmatpush1.msra.mxu0 %v527
    %870 = vmatprep.subr.mxu0 %v532
    %871 = vmatpush1.msra.mxu0 %v531
    %872 = vmatprep.subr.mxu0 %v536
    %873 = vmatpush1.msra.mxu0 %v535
    %874 = vmatprep.subr.mxu0 %v540
    %875 = vmatpush1.msra.mxu0 %v539
    %876 = vmatprep.subr.mxu0 %v544
    %877 = vmatpush1.msra.mxu0 %v543
    %878 = vmatprep.subr.mxu0 %v548
    %879 = vmatpush1.msra.mxu0 %v547
    %880 = vmatprep.subr.mxu0 %v552
    %881 = vmatpush1.msra.mxu0 %v551
    %882 = vmatprep.mubr.f32.mxu0 %v71
    %883 = vmatmul.mubr.f32.gmra.mrb[0].mxu0 %v70
    %v884 = vpop.f32.mrb[0].mxu0
    %v885 = vadd.f32 %v814, %v884
    %v886 = vpop.f32.mrb[0].mxu0
    %v887 = vadd.f32 %v816, %v886
    %888 = vdwg.mxu0
    %889 = vmatprep.subr.mxu0 %v556
    %890 = vmatpush1.msra.mxu0 %v555
    %891 = vmatprep.subr.mxu0 %v560
    %892 = vmatpush1.msra.mxu0 %v559
    %893 = vmatprep.subr.mxu0 %v564
    %894 = vmatpush1.msra.mxu0 %v563
    %895 = vmatprep.subr.mxu0 %v568
    %896 = vmatpush1.msra.mxu0 %v567
    %897 = vmatprep.subr.mxu0 %v572
    %898 = vmatpush1.msra.mxu0 %v571
    %899 = vmatprep.subr.mxu0 %v576
    %900 = vmatpush1.msra.mxu0 %v575
    %901 = vmatprep.subr.mxu0 %v580
    %902 = vmatpush1.msra.mxu0 %v579
    %903 = vmatprep.subr.mxu0 %v584
    %904 = vmatpush1.msra.mxu0 %v583
    %905 = vmatprep.subr.mxu0 %v588
    %906 = vmatpush1.msra.mxu0 %v587
    %907 = vmatprep.subr.mxu0 %v592
    %908 = vmatpush1.msra.mxu0 %v591
    %909 = vmatprep.subr.mxu0 %v596
    %910 = vmatpush1.msra.mxu0 %v595
    %911 = vmatprep.subr.mxu0 %v600
    %912 = vmatpush1.msra.mxu0 %v599
    %913 = vmatprep.subr.mxu0 %v604
    %914 = vmatpush1.msra.mxu0 %v603
    %915 = vmatprep.subr.mxu0 %v608
    %916 = vmatpush1.msra.mxu0 %v607
    %917 = vmatprep.subr.mxu0 %v612
    %918 = vmatpush1.msra.mxu0 %v611
    %919 = vmatprep.subr.mxu0 %v616
    %920 = vmatpush1.msra.mxu0 %v615
    %921 = vmatprep.subr.mxu0 %v620
    %922 = vmatpush1.msra.mxu0 %v619
    %923 = vmatprep.subr.mxu0 %v624
    %924 = vmatpush1.msra.mxu0 %v623
    %925 = vmatprep.subr.mxu0 %v628
    %926 = vmatpush1.msra.mxu0 %v627
    %927 = vmatprep.subr.mxu0 %v632
    %928 = vmatpush1.msra.mxu0 %v631
    %929 = vmatprep.subr.mxu0 %v636
    %930 = vmatpush1.msra.mxu0 %v635
    %931 = vmatprep.subr.mxu0 %v640
    %932 = vmatpush1.msra.mxu0 %v639
    %933 = vmatprep.subr.mxu0 %v644
    %934 = vmatpush1.msra.mxu0 %v643
    %935 = vmatprep.subr.mxu0 %v648
    %936 = vmatpush1.msra.mxu0 %v647
    %937 = vmatprep.subr.mxu0 %v652
    %938 = vmatpush1.msra.mxu0 %v651
    %939 = vmatprep.subr.mxu0 %v656
    %940 = vmatpush1.msra.mxu0 %v655
    %941 = vmatprep.subr.mxu0 %v660
    %942 = vmatpush1.msra.mxu0 %v659
    %943 = vmatprep.subr.mxu0 %v664
    %944 = vmatpush1.msra.mxu0 %v663
    %945 = vmatprep.subr.mxu0 %v668
    %946 = vmatpush1.msra.mxu0 %v667
    %947 = vmatprep.subr.mxu0 %v672
    %948 = vmatpush1.msra.mxu0 %v671
    %949 = vmatprep.subr.mxu0 %v676
    %950 = vmatpush1.msra.mxu0 %v675
    %951 = vmatprep.subr.mxu0 %v680
    %952 = vmatpush1.msra.mxu0 %v679
    %953 = vmatprep.mubr.f32.mxu0 %v73
    %954 = vmatmul.mubr.f32.gmra.mrb[0].mxu0 %v72
    %v955 = vpop.f32.mrb[0].mxu0
    %v956 = vadd.f32 %v885, %v955
    %v957 = vpop.f32.mrb[0].mxu0
    %v958 = vadd.f32 %v887, %v957
    %959 = vdwg.mxu0
    %960 = vmatprep.subr.mxu0 %v684
    %961 = vmatpush1.msra.mxu0 %v683
    %962 = vmatprep.subr.mxu0 %v688
    %963 = vmatpush1.msra.mxu0 %v687
    %964 = vmatprep.subr.mxu0 %v692
    %965 = vmatpush1.msra.mxu0 %v691
    %966 = vmatprep.subr.mxu0 %v696
    %967 = vmatpush1.msra.mxu0 %v695
    %968 = vmatprep.subr.mxu0 %v700
    %969 = vmatpush1.msra.mxu0 %v699
    %970 = vmatprep.subr.mxu0 %v704
    %971 = vmatpush1.msra.mxu0 %v703
    %972 = vmatprep.subr.mxu0 %v708
    %973 = vmatpush1.msra.mxu0 %v707
    %974 = vmatprep.subr.mxu0 %v712
    %975 = vmatpush1.msra.mxu0 %v711
    %976 = vmatprep.subr.mxu0 %v716
    %977 = vmatpush1.msra.mxu0 %v715
    %978 = vmatprep.subr.mxu0 %v720
    %979 = vmatpush1.msra.mxu0 %v719
    %980 = vmatprep.subr.mxu0 %v724
    %981 = vmatpush1.msra.mxu0 %v723
    %982 = vmatprep.subr.mxu0 %v728
    %983 = vmatpush1.msra.mxu0 %v727
    %984 = vmatprep.subr.mxu0 %v732
    %985 = vmatpush1.msra.mxu0 %v731
    %986 = vmatprep.subr.mxu0 %v736
    %987 = vmatpush1.msra.mxu0 %v735
    %988 = vmatprep.subr.mxu0 %v740
    %989 = vmatpush1.msra.mxu0 %v739
    %990 = vmatprep.subr.mxu0 %v744
    %991 = vmatpush1.msra.mxu0 %v743
    %992 = vmatprep.subr.mxu0 0.0
    %993 = vmatpush1.msra.mxu0 0.0
    %994 = vmatprep.subr.mxu0 0.0
    %995 = vmatpush1.msra.mxu0 0.0
    %996 = vmatprep.subr.mxu0 0.0
    %997 = vmatpush1.msra.mxu0 0.0
    %998 = vmatprep.subr.mxu0 0.0
    %999 = vmatpush1.msra.mxu0 0.0
    %1000 = vmatprep.subr.mxu0 0.0
    %1001 = vmatpush1.msra.mxu0 0.0
    %1002 = vmatprep.subr.mxu0 0.0
    %1003 = vmatpush1.msra.mxu0 0.0
    %1004 = vmatprep.subr.mxu0 0.0
    %1005 = vmatpush1.msra.mxu0 0.0
    %1006 = vmatprep.subr.mxu0 0.0
    %1007 = vmatpush1.msra.mxu0 0.0
    %1008 = vmatprep.subr.mxu0 0.0
    %1009 = vmatpush1.msra.mxu0 0.0
    %1010 = vmatprep.subr.mxu0 0.0
    %1011 = vmatpush1.msra.mxu0 0.0
    %1012 = vmatprep.subr.mxu0 0.0
    %1013 = vmatpush1.msra.mxu0 0.0
    %1014 = vmatprep.subr.mxu0 0.0
    %1015 = vmatpush1.msra.mxu0 0.0
    %1016 = vmatprep.subr.mxu0 0.0
    %1017 = vmatpush1.msra.mxu0 0.0
    %1018 = vmatprep.subr.mxu0 0.0
    %1019 = vmatpush1.msra.mxu0 0.0
    %1020 = vmatprep.subr.mxu0 0.0
    %1021 = vmatpush1.msra.mxu0 0.0
    %1022 = vmatprep.subr.mxu0 0.0
    %1023 = vmatpush1.msra.mxu0 0.0
    %1024 = vmatprep.mubr.f32.mxu0 0.0
    %1025 = vmatmul.mubr.f32.gmra.mrb[0].mxu0 %v74
    %v1026 = vpop.f32.mrb[0].mxu0
    %v1027 = vadd.f32 %v956, %v1026
    %v1028 = vpop.f32.mrb[0].mxu0
    %v1029 = vadd.f32 %v958, %v1028
    %1030 = vdwg.mxu0
    %1031 = vmatprep.subr.mxu0 %v302
    %1032 = vmatpush1.msra.mxu0 %v301
    %1033 = vmatprep.subr.mxu0 %v306
    %1034 = vmatpush1.msra.mxu0 %v305
    %1035 = vmatprep.subr.mxu0 %v310
    %1036 = vmatpush1.msra.mxu0 %v309
    %1037 = vmatprep.subr.mxu0 %v314
    %1038 = vmatpush1.msra.mxu0 %v313
    %1039 = vmatprep.subr.mxu0 %v318
    %1040 = vmatpush1.msra.mxu0 %v317
    %1041 = vmatprep.subr.mxu0 %v322
    %1042 = vmatpush1.msra.mxu0 %v321
    %1043 = vmatprep.subr.mxu0 %v326
    %1044 = vmatpush1.msra.mxu0 %v325
    %1045 = vmatprep.subr.mxu0 %v330
    %1046 = vmatpush1.msra.mxu0 %v329
    %1047 = vmatprep.subr.mxu0 %v334
    %1048 = vmatpush1.msra.mxu0 %v333
    %1049 = vmatprep.subr.mxu0 %v338
    %1050 = vmatpush1.msra.mxu0 %v337
    %1051 = vmatprep.subr.mxu0 %v342
    %1052 = vmatpush1.msra.mxu0 %v341
    %1053 = vmatprep.subr.mxu0 %v346
    %1054 = vmatpush1.msra.mxu0 %v345
    %1055 = vmatprep.subr.mxu0 %v350
    %1056 = vmatpush1.msra.mxu0 %v349
    %1057 = vmatprep.subr.mxu0 %v354
    %1058 = vmatpush1.msra.mxu0 %v353
    %1059 = vmatprep.subr.mxu0 %v358
    %1060 = vmatpush1.msra.mxu0 %v357
    %1061 = vmatprep.subr.mxu0 %v362
    %1062 = vmatpush1.msra.mxu0 %v361
    %1063 = vmatprep.subr.mxu0 %v366
    %1064 = vmatpush1.msra.mxu0 %v365
    %1065 = vmatprep.subr.mxu0 %v370
    %1066 = vmatpush1.msra.mxu0 %v369
    %1067 = vmatprep.subr.mxu0 %v374
    %1068 = vmatpush1.msra.mxu0 %v373
    %1069 = vmatprep.subr.mxu0 %v378
    %1070 = vmatpush1.msra.mxu0 %v377
    %1071 = vmatprep.subr.mxu0 %v382
    %1072 = vmatpush1.msra.mxu0 %v381
    %1073 = vmatprep.subr.mxu0 %v386
    %1074 = vmatpush1.msra.mxu0 %v385
    %1075 = vmatprep.subr.mxu0 %v390
    %1076 = vmatpush1.msra.mxu0 %v389
    %1077 = vmatprep.subr.mxu0 %v394
    %1078 = vmatpush1.msra.mxu0 %v393
    %1079 = vmatprep.subr.mxu0 %v398
    %1080 = vmatpush1.msra.mxu0 %v397
    %1081 = vmatprep.subr.mxu0 %v402
    %1082 = vmatpush1.msra.mxu0 %v401
    %1083 = vmatprep.subr.mxu0 %v406
    %1084 = vmatpush1.msra.mxu0 %v405
    %1085 = vmatprep.subr.mxu0 %v410
    %1086 = vmatpush1.msra.mxu0 %v409
    %1087 = vmatprep.subr.mxu0 %v414
    %1088 = vmatpush1.msra.mxu0 %v413
    %1089 = vmatprep.subr.mxu0 %v418
    %1090 = vmatpush1.msra.mxu0 %v417
    %1091 = vmatprep.subr.mxu0 %v422
    %1092 = vmatpush1.msra.mxu0 %v421
    %1093 = vmatprep.subr.mxu0 %v426
    %1094 = vmatpush1.msra.mxu0 %v425
    %1095 = vmatprep.mubr.f32.mxu0 %v69
    %1096 = vmatmul.mubr.f32.gmra.mrb[0].mxu0 %v68
    %v1097 = vpop.f32.mrb[0].mxu0
    %v1098 = vadd.f32 0.0, %v1097
    %v1099 = vpop.f32.mrb[0].mxu0
    %v1100 = vadd.f32 0.0, %v1099
    %1101 = vdwg.mxu0
    %1102 = vmatprep.subr.mxu0 %v430
    %1103 = vmatpush1.msra.mxu0 %v429
    %1104 = vmatprep.subr.mxu0 %v434
    %1105 = vmatpush1.msra.mxu0 %v433
    %1106 = vmatprep.subr.mxu0 %v438
    %1107 = vmatpush1.msra.mxu0 %v437
    %1108 = vmatprep.subr.mxu0 %v442
    %1109 = vmatpush1.msra.mxu0 %v441
    %1110 = vmatprep.subr.mxu0 %v446
    %1111 = vmatpush1.msra.mxu0 %v445
    %1112 = vmatprep.subr.mxu0 %v450
    %1113 = vmatpush1.msra.mxu0 %v449
    %1114 = vmatprep.subr.mxu0 %v454
    %1115 = vmatpush1.msra.mxu0 %v453
    %1116 = vmatprep.subr.mxu0 %v458
    %1117 = vmatpush1.msra.mxu0 %v457
    %1118 = vmatprep.subr.mxu0 %v462
    %1119 = vmatpush1.msra.mxu0 %v461
    %1120 = vmatprep.subr.mxu0 %v466
    %1121 = vmatpush1.msra.mxu0 %v465
    %1122 = vmatprep.subr.mxu0 %v470
    %1123 = vmatpush1.msra.mxu0 %v469
    %1124 = vmatprep.subr.mxu0 %v474
    %1125 = vmatpush1.msra.mxu0 %v473
    %1126 = vmatprep.subr.mxu0 %v478
    %1127 = vmatpush1.msra.mxu0 %v477
    %1128 = vmatprep.subr.mxu0 %v482
    %1129 = vmatpush1.msra.mxu0 %v481
    %1130 = vmatprep.subr.mxu0 %v486
    %1131 = vmatpush1.msra.mxu0 %v485
    %1132 = vmatprep.subr.mxu0 %v490
    %1133 = vmatpush1.msra.mxu0 %v489
    %1134 = vmatprep.subr.mxu0 %v494
    %1135 = vmatpush1.msra.mxu0 %v493
    %1136 = vmatprep.subr.mxu0 %v498
    %1137 = vmatpush1.msra.mxu0 %v497
    %1138 = vmatprep.subr.mxu0 %v502
    %1139 = vmatpush1.msra.mxu0 %v501
    %1140 = vmatprep.subr.mxu0 %v506
    %1141 = vmatpush1.msra.mxu0 %v505
    %1142 = vmatprep.subr.mxu0 %v510
    %1143 = vmatpush1.msra.mxu0 %v509
    %1144 = vmatprep.subr.mxu0 %v514
    %1145 = vmatpush1.msra.mxu0 %v513
    %1146 = vmatprep.subr.mxu0 %v518
    %1147 = vmatpush1.msra.mxu0 %v517
    %1148 = vmatprep.subr.mxu0 %v522
    %1149 = vmatpush1.msra.mxu0 %v521
    %1150 = vmatprep.subr.mxu0 %v526
    %1151 = vmatpush1.msra.mxu0 %v525
    %1152 = vmatprep.subr.mxu0 %v530
    %1153 = vmatpush1.msra.mxu0 %v529
    %1154 = vmatprep.subr.mxu0 %v534
    %1155 = vmatpush1.msra.mxu0 %v533
    %1156 = vmatprep.subr.mxu0 %v538
    %1157 = vmatpush1.msra.mxu0 %v537
    %1158 = vmatprep.subr.mxu0 %v542
    %1159 = vmatpush1.msra.mxu0 %v541
    %1160 = vmatprep.subr.mxu0 %v546
    %1161 = vmatpush1.msra.mxu0 %v545
    %1162 = vmatprep.subr.mxu0 %v550
    %1163 = vmatpush1.msra.mxu0 %v549
    %1164 = vmatprep.subr.mxu0 %v554
    %1165 = vmatpush1.msra.mxu0 %v553
    %1166 = vmatprep.mubr.f32.mxu0 %v71
    %1167 = vmatmul.mubr.f32.gmra.mrb[0].mxu0 %v70
    %v1168 = vpop.f32.mrb[0].mxu0
    %v1169 = vadd.f32 %v1098, %v1168
    %v1170 = vpop.f32.mrb[0].mxu0
    %v1171 = vadd.f32 %v1100, %v1170
    %1172 = vdwg.mxu0
    %1173 = vmatprep.subr.mxu0 %v558
    %1174 = vmatpush1.msra.mxu0 %v557
    %1175 = vmatprep.subr.mxu0 %v562
    %1176 = vmatpush1.msra.mxu0 %v561
    %1177 = vmatprep.subr.mxu0 %v566
    %1178 = vmatpush1.msra.mxu0 %v565
    %1179 = vmatprep.subr.mxu0 %v570
    %1180 = vmatpush1.msra.mxu0 %v569
    %1181 = vmatprep.subr.mxu0 %v574
    %1182 = vmatpush1.msra.mxu0 %v573
    %1183 = vmatprep.subr.mxu0 %v578
    %1184 = vmatpush1.msra.mxu0 %v577
    %1185 = vmatprep.subr.mxu0 %v582
    %1186 = vmatpush1.msra.mxu0 %v581
    %1187 = vmatprep.subr.mxu0 %v586
    %1188 = vmatpush1.msra.mxu0 %v585
    %1189 = vmatprep.subr.mxu0 %v590
    %1190 = vmatpush1.msra.mxu0 %v589
    %1191 = vmatprep.subr.mxu0 %v594
    %1192 = vmatpush1.msra.mxu0 %v593
    %1193 = vmatprep.subr.mxu0 %v598
    %1194 = vmatpush1.msra.mxu0 %v597
    %1195 = vmatprep.subr.mxu0 %v602
    %1196 = vmatpush1.msra.mxu0 %v601
    %1197 = vmatprep.subr.mxu0 %v606
    %1198 = vmatpush1.msra.mxu0 %v605
    %1199 = vmatprep.subr.mxu0 %v610
    %1200 = vmatpush1.msra.mxu0 %v609
    %1201 = vmatprep.subr.mxu0 %v614
    %1202 = vmatpush1.msra.mxu0 %v613
    %1203 = vmatprep.subr.mxu0 %v618
    %1204 = vmatpush1.msra.mxu0 %v617
    %1205 = vmatprep.subr.mxu0 %v622
    %1206 = vmatpush1.msra.mxu0 %v621
    %1207 = vmatprep.subr.mxu0 %v626
    %1208 = vmatpush1.msra.mxu0 %v625
    %1209 = vmatprep.subr.mxu0 %v630
    %1210 = vmatpush1.msra.mxu0 %v629
    %1211 = vmatprep.subr.mxu0 %v634
    %1212 = vmatpush1.msra.mxu0 %v633
    %1213 = vmatprep.subr.mxu0 %v638
    %1214 = vmatpush1.msra.mxu0 %v637
    %1215 = vmatprep.subr.mxu0 %v642
    %1216 = vmatpush1.msra.mxu0 %v641
    %1217 = vmatprep.subr.mxu0 %v646
    %1218 = vmatpush1.msra.mxu0 %v645
    %1219 = vmatprep.subr.mxu0 %v650
    %1220 = vmatpush1.msra.mxu0 %v649
    %1221 = vmatprep.subr.mxu0 %v654
    %1222 = vmatpush1.msra.mxu0 %v653
    %1223 = vmatprep.subr.mxu0 %v658
    %1224 = vmatpush1.msra.mxu0 %v657
    %1225 = vmatprep.subr.mxu0 %v662
    %1226 = vmatpush1.msra.mxu0 %v661
    %1227 = vmatprep.subr.mxu0 %v666
    %1228 = vmatpush1.msra.mxu0 %v665
    %1229 = vmatprep.subr.mxu0 %v670
    %1230 = vmatpush1.msra.mxu0 %v669
    %1231 = vmatprep.subr.mxu0 %v674
    %1232 = vmatpush1.msra.mxu0 %v673
    %1233 = vmatprep.subr.mxu0 %v678
    %1234 = vmatpush1.msra.mxu0 %v677
    %1235 = vmatprep.subr.mxu0 %v682
    %1236 = vmatpush1.msra.mxu0 %v681
    %1237 = vmatprep.mubr.f32.mxu0 %v73
    %1238 = vmatmul.mubr.f32.gmra.mrb[0].mxu0 %v72
    %v1239 = vpop.f32.mrb[0].mxu0
    %v1240 = vadd.f32 %v1169, %v1239
    %v1241 = vpop.f32.mrb[0].mxu0
    %v1242 = vadd.f32 %v1171, %v1241
    %1243 = vdwg.mxu0
    %1244 = vmatprep.subr.mxu0 %v686
    %1245 = vmatpush1.msra.mxu0 %v685
    %1246 = vmatprep.subr.mxu0 %v690
    %1247 = vmatpush1.msra.mxu0 %v689
    %1248 = vmatprep.subr.mxu0 %v694
    %1249 = vmatpush1.msra.mxu0 %v693
    %1250 = vmatprep.subr.mxu0 %v698
    %1251 = vmatpush1.msra.mxu0 %v697
    %1252 = vmatprep.subr.mxu0 %v702
    %1253 = vmatpush1.msra.mxu0 %v701
    %1254 = vmatprep.subr.mxu0 %v706
    %1255 = vmatpush1.msra.mxu0 %v705
    %1256 = vmatprep.subr.mxu0 %v710
    %1257 = vmatpush1.msra.mxu0 %v709
    %1258 = vmatprep.subr.mxu0 %v714
    %1259 = vmatpush1.msra.mxu0 %v713
    %1260 = vmatprep.subr.mxu0 %v718
    %1261 = vmatpush1.msra.mxu0 %v717
    %1262 = vmatprep.subr.mxu0 %v722
    %1263 = vmatpush1.msra.mxu0 %v721
    %1264 = vmatprep.subr.mxu0 %v726
    %1265 = vmatpush1.msra.mxu0 %v725
    %1266 = vmatprep.subr.mxu0 %v730
    %1267 = vmatpush1.msra.mxu0 %v729
    %1268 = vmatprep.subr.mxu0 %v734
    %1269 = vmatpush1.msra.mxu0 %v733
    %1270 = vmatprep.subr.mxu0 %v738
    %1271 = vmatpush1.msra.mxu0 %v737
    %1272 = vmatprep.subr.mxu0 %v742
    %1273 = vmatpush1.msra.mxu0 %v741
    %1274 = vmatprep.subr.mxu0 %v746
    %1275 = vmatpush1.msra.mxu0 %v745
    %1276 = vmatprep.subr.mxu0 0.0
    %1277 = vmatpush1.msra.mxu0 0.0
    %1278 = vmatprep.subr.mxu0 0.0
    %1279 = vmatpush1.msra.mxu0 0.0
    %1280 = vmatprep.subr.mxu0 0.0
    %1281 = vmatpush1.msra.mxu0 0.0
    %1282 = vmatprep.subr.mxu0 0.0
    %1283 = vmatpush1.msra.mxu0 0.0
    %1284 = vmatprep.subr.mxu0 0.0
    %1285 = vmatpush1.msra.mxu0 0.0
    %1286 = vmatprep.subr.mxu0 0.0
    %1287 = vmatpush1.msra.mxu0 0.0
    %1288 = vmatprep.subr.mxu0 0.0
    %1289 = vmatpush1.msra.mxu0 0.0
    %1290 = vmatprep.subr.mxu0 0.0
    %1291 = vmatpush1.msra.mxu0 0.0
    %1292 = vmatprep.subr.mxu0 0.0
    %1293 = vmatpush1.msra.mxu0 0.0
    %1294 = vmatprep.subr.mxu0 0.0
    %1295 = vmatpush1.msra.mxu0 0.0
    %1296 = vmatprep.subr.mxu0 0.0
    %1297 = vmatpush1.msra.mxu0 0.0
    %1298 = vmatprep.subr.mxu0 0.0
    %1299 = vmatpush1.msra.mxu0 0.0
    %1300 = vmatprep.subr.mxu0 0.0
    %1301 = vmatpush1.msra.mxu0 0.0
    %1302 = vmatprep.subr.mxu0 0.0
    %1303 = vmatpush1.msra.mxu0 0.0
    %1304 = vmatprep.subr.mxu0 0.0
    %1305 = vmatpush1.msra.mxu0 0.0
    %1306 = vmatprep.subr.mxu0 0.0
    %1307 = vmatpush1.msra.mxu0 0.0
    %1308 = vmatprep.mubr.f32.mxu0 0.0
    %1309 = vmatmul.mubr.f32.gmra.mrb[0].mxu0 %v74
    %v1310 = vpop.f32.mrb[0].mxu0
    %v1311 = vadd.f32 %v1240, %v1310
    %v1312 = vpop.f32.mrb[0].mxu0
    %v1313 = vadd.f32 %v1242, %v1312
    %1314 = vdwg.mxu0
    %vm1315 = vcmask 64512
    %v1317 = vsel %vm1315, 1.0, 0
    %1319 = vmatprep.subr.mxu0 %v1029
    %1320 = vmatpush1.msra.mxu0 %v1027
    %1321 = vmatprep.subr.mxu0 0.0
    %1322 = vmatpush1.msra.mxu0 0.0
    %1323 = vmatprep.subr.mxu0 0.0
    %1324 = vmatpush1.msra.mxu0 0.0
    %1325 = vmatprep.subr.mxu0 0.0
    %1326 = vmatpush1.msra.mxu0 0.0
    %1327 = vmatprep.subr.mxu0 0.0
    %1328 = vmatpush1.msra.mxu0 0.0
    %1329 = vmatprep.subr.mxu0 0.0
    %1330 = vmatpush1.msra.mxu0 0.0
    %1331 = vmatprep.subr.mxu0 0.0
    %1332 = vmatpush1.msra.mxu0 0.0
    %1333 = vmatprep.subr.mxu0 0.0
    %1334 = vmatpush1.msra.mxu0 0.0
    %1335 = vmatprep.subr.mxu0 0.0
    %1336 = vmatpush1.msra.mxu0 0.0
    %1337 = vmatprep.subr.mxu0 0.0
    %1338 = vmatpush1.msra.mxu0 0.0
    %1339 = vmatprep.subr.mxu0 0.0
    %1340 = vmatpush1.msra.mxu0 0.0
    %1341 = vmatprep.subr.mxu0 0.0
    %1342 = vmatpush1.msra.mxu0 0.0
    %1343 = vmatprep.subr.mxu0 0.0
    %1344 = vmatpush1.msra.mxu0 0.0
    %1345 = vmatprep.subr.mxu0 0.0
    %1346 = vmatpush1.msra.mxu0 0.0
    %1347 = vmatprep.subr.mxu0 0.0
    %1348 = vmatpush1.msra.mxu0 0.0
    %1349 = vmatprep.subr.mxu0 0.0
    %1350 = vmatpush1.msra.mxu0 0.0
    %1351 = vmatprep.subr.mxu0 0.0
    %1352 = vmatpush1.msra.mxu0 0.0
    %1353 = vmatprep.subr.mxu0 0.0
    %1354 = vmatpush1.msra.mxu0 0.0
    %1355 = vmatprep.subr.mxu0 0.0
    %1356 = vmatpush1.msra.mxu0 0.0
    %1357 = vmatprep.subr.mxu0 0.0
    %1358 = vmatpush1.msra.mxu0 0.0
    %1359 = vmatprep.subr.mxu0 0.0
    %1360 = vmatpush1.msra.mxu0 0.0
    %1361 = vmatprep.subr.mxu0 0.0
    %1362 = vmatpush1.msra.mxu0 0.0
    %1363 = vmatprep.subr.mxu0 0.0
    %1364 = vmatpush1.msra.mxu0 0.0
    %1365 = vmatprep.subr.mxu0 0.0
    %1366 = vmatpush1.msra.mxu0 0.0
    %1367 = vmatprep.subr.mxu0 0.0
    %1368 = vmatpush1.msra.mxu0 0.0
    %1369 = vmatprep.subr.mxu0 0.0
    %1370 = vmatpush1.msra.mxu0 0.0
    %1371 = vmatprep.subr.mxu0 0.0
    %1372 = vmatpush1.msra.mxu0 0.0
    %1373 = vmatprep.subr.mxu0 0.0
    %1374 = vmatpush1.msra.mxu0 0.0
    %1375 = vmatprep.subr.mxu0 0.0
    %1376 = vmatpush1.msra.mxu0 0.0
    %1377 = vmatprep.subr.mxu0 0.0
    %1378 = vmatpush1.msra.mxu0 0.0
    %1379 = vmatprep.subr.mxu0 0.0
    %1380 = vmatpush1.msra.mxu0 0.0
    %1381 = vmatprep.subr.mxu0 0.0
    %1382 = vmatpush1.msra.mxu0 0.0
    %1383 = vmatprep.mubr.f32.mxu0 0.0
    %1384 = vmatmul.mubr.f32.gmra.mrb[0].mxu0 %v1317
    %v1385 = vpop.f32.mrb[0].mxu0
    %v1386 = vadd.f32 0.0, %v1385
    %v1387 = vpop.f32.mrb[0].mxu0
    %v1388 = vadd.f32 0.0, %v1387
    %1389 = vdwg.mxu0
    %1390 = vmatprep.subr.mxu0 %v1313
    %1391 = vmatpush1.msra.mxu0 %v1311
    %1392 = vmatprep.subr.mxu0 0.0
    %1393 = vmatpush1.msra.mxu0 0.0
    %1394 = vmatprep.subr.mxu0 0.0
    %1395 = vmatpush1.msra.mxu0 0.0
    %1396 = vmatprep.subr.mxu0 0.0
    %1397 = vmatpush1.msra.mxu0 0.0
    %1398 = vmatprep.subr.mxu0 0.0
    %1399 = vmatpush1.msra.mxu0 0.0
    %1400 = vmatprep.subr.mxu0 0.0
    %1401 = vmatpush1.msra.mxu0 0.0
    %1402 = vmatprep.subr.mxu0 0.0
    %1403 = vmatpush1.msra.mxu0 0.0
    %1404 = vmatprep.subr.mxu0 0.0
    %1405 = vmatpush1.msra.mxu0 0.0
    %1406 = vmatprep.subr.mxu0 0.0
    %1407 = vmatpush1.msra.mxu0 0.0
    %1408 = vmatprep.subr.mxu0 0.0
    %1409 = vmatpush1.msra.mxu0 0.0
    %1410 = vmatprep.subr.mxu0 0.0
    %1411 = vmatpush1.msra.mxu0 0.0
    %1412 = vmatprep.subr.mxu0 0.0
    %1413 = vmatpush1.msra.mxu0 0.0
    %1414 = vmatprep.subr.mxu0 0.0
    %1415 = vmatpush1.msra.mxu0 0.0
    %1416 = vmatprep.subr.mxu0 0.0
    %1417 = vmatpush1.msra.mxu0 0.0
    %1418 = vmatprep.subr.mxu0 0.0
    %1419 = vmatpush1.msra.mxu0 0.0
    %1420 = vmatprep.subr.mxu0 0.0
    %1421 = vmatpush1.msra.mxu0 0.0
    %1422 = vmatprep.subr.mxu0 0.0
    %1423 = vmatpush1.msra.mxu0 0.0
    %1424 = vmatprep.subr.mxu0 0.0
    %1425 = vmatpush1.msra.mxu0 0.0
    %1426 = vmatprep.subr.mxu0 0.0
    %1427 = vmatpush1.msra.mxu0 0.0
    %1428 = vmatprep.subr.mxu0 0.0
    %1429 = vmatpush1.msra.mxu0 0.0
    %1430 = vmatprep.subr.mxu0 0.0
    %1431 = vmatpush1.msra.mxu0 0.0
    %1432 = vmatprep.subr.mxu0 0.0
    %1433 = vmatpush1.msra.mxu0 0.0
    %1434 = vmatprep.subr.mxu0 0.0
    %1435 = vmatpush1.msra.mxu0 0.0
    %1436 = vmatprep.subr.mxu0 0.0
    %1437 = vmatpush1.msra.mxu0 0.0
    %1438 = vmatprep.subr.mxu0 0.0
    %1439 = vmatpush1.msra.mxu0 0.0
    %1440 = vmatprep.subr.mxu0 0.0
    %1441 = vmatpush1.msra.mxu0 0.0
    %1442 = vmatprep.subr.mxu0 0.0
    %1443 = vmatpush1.msra.mxu0 0.0
    %1444 = vmatprep.subr.mxu0 0.0
    %1445 = vmatpush1.msra.mxu0 0.0
    %1446 = vmatprep.subr.mxu0 0.0
    %1447 = vmatpush1.msra.mxu0 0.0
    %1448 = vmatprep.subr.mxu0 0.0
    %1449 = vmatpush1.msra.mxu0 0.0
    %1450 = vmatprep.subr.mxu0 0.0
    %1451 = vmatpush1.msra.mxu0 0.0
    %1452 = vmatprep.subr.mxu0 0.0
    %1453 = vmatpush1.msra.mxu0 0.0
    %1454 = vmatprep.mubr.f32.mxu0 0.0
    %1455 = vmatmul.mubr.f32.gmra.mrb[0].mxu0 %v1317
    %v1456 = vpop.f32.mrb[0].mxu0
    %v1457 = vadd.f32 0.0, %v1456
    %v1458 = vpop.f32.mrb[0].mxu0
    %v1459 = vadd.f32 0.0, %v1458
    %1460 = vdwg.mxu0
    %v1461 = vmul.f32 %v1027, %v1027
    %v1462 = vmul.f32 %v1029, %v1029
    %v1463 = vmul.f32 %v1311, %v1311
    %v1464 = vmul.f32 %v1313, %v1313
    %1465 = vmatprep.subr.mxu0 %v1462
    %1466 = vmatpush1.msra.mxu0 %v1461
    %1467 = vmatprep.subr.mxu0 0.0
    %1468 = vmatpush1.msra.mxu0 0.0
    %1469 = vmatprep.subr.mxu0 0.0
    %1470 = vmatpush1.msra.mxu0 0.0
    %1471 = vmatprep.subr.mxu0 0.0
    %1472 = vmatpush1.msra.mxu0 0.0
    %1473 = vmatprep.subr.mxu0 0.0
    %1474 = vmatpush1.msra.mxu0 0.0
    %1475 = vmatprep.subr.mxu0 0.0
    %1476 = vmatpush1.msra.mxu0 0.0
    %1477 = vmatprep.subr.mxu0 0.0
    %1478 = vmatpush1.msra.mxu0 0.0
    %1479 = vmatprep.subr.mxu0 0.0
    %1480 = vmatpush1.msra.mxu0 0.0
    %1481 = vmatprep.subr.mxu0 0.0
    %1482 = vmatpush1.msra.mxu0 0.0
    %1483 = vmatprep.subr.mxu0 0.0
    %1484 = vmatpush1.msra.mxu0 0.0
    %1485 = vmatprep.subr.mxu0 0.0
    %1486 = vmatpush1.msra.mxu0 0.0
    %1487 = vmatprep.subr.mxu0 0.0
    %1488 = vmatpush1.msra.mxu0 0.0
    %1489 = vmatprep.subr.mxu0 0.0
    %1490 = vmatpush1.msra.mxu0 0.0
    %1491 = vmatprep.subr.mxu0 0.0
    %1492 = vmatpush1.msra.mxu0 0.0
    %1493 = vmatprep.subr.mxu0 0.0
    %1494 = vmatpush1.msra.mxu0 0.0
    %1495 = vmatprep.subr.mxu0 0.0
    %1496 = vmatpush1.msra.mxu0 0.0
    %1497 = vmatprep.subr.mxu0 0.0
    %1498 = vmatpush1.msra.mxu0 0.0
    %1499 = vmatprep.subr.mxu0 0.0
    %1500 = vmatpush1.msra.mxu0 0.0
    %1501 = vmatprep.subr.mxu0 0.0
    %1502 = vmatpush1.msra.mxu0 0.0
    %1503 = vmatprep.subr.mxu0 0.0
    %1504 = vmatpush1.msra.mxu0 0.0
    %1505 = vmatprep.subr.mxu0 0.0
    %1506 = vmatpush1.msra.mxu0 0.0
    %1507 = vmatprep.subr.mxu0 0.0
    %1508 = vmatpush1.msra.mxu0 0.0
    %1509 = vmatprep.subr.mxu0 0.0
    %1510 = vmatpush1.msra.mxu0 0.0
    %1511 = vmatprep.subr.mxu0 0.0
    %1512 = vmatpush1.msra.mxu0 0.0
    %1513 = vmatprep.subr.mxu0 0.0
    %1514 = vmatpush1.msra.mxu0 0.0
    %1515 = vmatprep.subr.mxu0 0.0
    %1516 = vmatpush1.msra.mxu0 0.0
    %1517 = vmatprep.subr.mxu0 0.0
    %1518 = vmatpush1.msra.mxu0 0.0
    %1519 = vmatprep.subr.mxu0 0.0
    %1520 = vmatpush1.msra.mxu0 0.0
    %1521 = vmatprep.subr.mxu0 0.0
    %1522 = vmatpush1.msra.mxu0 0.0
    %1523 = vmatprep.subr.mxu0 0.0
    %1524 = vmatpush1.msra.mxu0 0.0
    %1525 = vmatprep.subr.mxu0 0.0
    %1526 = vmatpush1.msra.mxu0 0.0
    %1527 = vmatprep.subr.mxu0 0.0
    %1528 = vmatpush1.msra.mxu0 0.0
    %1529 = vmatprep.mubr.f32.mxu0 0.0
    %1530 = vmatmul.mubr.f32.gmra.mrb[0].mxu0 %v1317
    %v1531 = vpop.f32.mrb[0].mxu0
    %v1532 = vadd.f32 0.0, %v1531
    %v1533 = vpop.f32.mrb[0].mxu0
    %v1534 = vadd.f32 0.0, %v1533
    %1535 = vdwg.mxu0
    %1536 = vmatprep.subr.mxu0 %v1464
    %1537 = vmatpush1.msra.mxu0 %v1463
    %1538 = vmatprep.subr.mxu0 0.0
    %1539 = vmatpush1.msra.mxu0 0.0
    %1540 = vmatprep.subr.mxu0 0.0
    %1541 = vmatpush1.msra.mxu0 0.0
    %1542 = vmatprep.subr.mxu0 0.0
    %1543 = vmatpush1.msra.mxu0 0.0
    %1544 = vmatprep.subr.mxu0 0.0
    %1545 = vmatpush1.msra.mxu0 0.0
    %1546 = vmatprep.subr.mxu0 0.0
    %1547 = vmatpush1.msra.mxu0 0.0
    %1548 = vmatprep.subr.mxu0 0.0
    %1549 = vmatpush1.msra.mxu0 0.0
    %1550 = vmatprep.subr.mxu0 0.0
    %1551 = vmatpush1.msra.mxu0 0.0
    %1552 = vmatprep.subr.mxu0 0.0
    %1553 = vmatpush1.msra.mxu0 0.0
    %1554 = vmatprep.subr.mxu0 0.0
    %1555 = vmatpush1.msra.mxu0 0.0
    %1556 = vmatprep.subr.mxu0 0.0
    %1557 = vmatpush1.msra.mxu0 0.0
    %1558 = vmatprep.subr.mxu0 0.0
    %1559 = vmatpush1.msra.mxu0 0.0
    %1560 = vmatprep.subr.mxu0 0.0
    %1561 = vmatpush1.msra.mxu0 0.0
    %1562 = vmatprep.subr.mxu0 0.0
    %1563 = vmatpush1.msra.mxu0 0.0
    %1564 = vmatprep.subr.mxu0 0.0
    %1565 = vmatpush1.msra.mxu0 0.0
    %1566 = vmatprep.subr.mxu0 0.0
    %1567 = vmatpush1.msra.mxu0 0.0
    %1568 = vmatprep.subr.mxu0 0.0
    %1569 = vmatpush1.msra.mxu0 0.0
    %1570 = vmatprep.subr.mxu0 0.0
    %1571 = vmatpush1.msra.mxu0 0.0
    %1572 = vmatprep.subr.mxu0 0.0
    %1573 = vmatpush1.msra.mxu0 0.0
    %1574 = vmatprep.subr.mxu0 0.0
    %1575 = vmatpush1.msra.mxu0 0.0
    %1576 = vmatprep.subr.mxu0 0.0
    %1577 = vmatpush1.msra.mxu0 0.0
    %1578 = vmatprep.subr.mxu0 0.0
    %1579 = vmatpush1.msra.mxu0 0.0
    %1580 = vmatprep.subr.mxu0 0.0
    %1581 = vmatpush1.msra.mxu0 0.0
    %1582 = vmatprep.subr.mxu0 0.0
    %1583 = vmatpush1.msra.mxu0 0.0
    %1584 = vmatprep.subr.mxu0 0.0
    %1585 = vmatpush1.msra.mxu0 0.0
    %1586 = vmatprep.subr.mxu0 0.0
    %1587 = vmatpush1.msra.mxu0 0.0
    %1588 = vmatprep.subr.mxu0 0.0
    %1589 = vmatpush1.msra.mxu0 0.0
    %1590 = vmatprep.subr.mxu0 0.0
    %1591 = vmatpush1.msra.mxu0 0.0
    %1592 = vmatprep.subr.mxu0 0.0
    %1593 = vmatpush1.msra.mxu0 0.0
    %1594 = vmatprep.subr.mxu0 0.0
    %1595 = vmatpush1.msra.mxu0 0.0
    %1596 = vmatprep.subr.mxu0 0.0
    %1597 = vmatpush1.msra.mxu0 0.0
    %1598 = vmatprep.subr.mxu0 0.0
    %1599 = vmatpush1.msra.mxu0 0.0
    %1600 = vmatprep.mubr.f32.mxu0 0.0
    %1601 = vmatmul.mubr.f32.gmra.mrb[0].mxu0 %v1317
    %v1602 = vpop.f32.mrb[0].mxu0
    %v1603 = vadd.f32 0.0, %v1602
    %v1604 = vpop.f32.mrb[0].mxu0
    %v1605 = vadd.f32 0.0, %v1604
    %1606 = vdwg.mxu0
    %v1607 = vmul.f32 %v1386, 0.125
    %v1608 = vmul.f32 %v1388, 0.125
    %v1609 = vmul.f32 %v1457, 0.125
    %v1610 = vmul.f32 %v1459, 0.125
    %v1611 = vmul.f32 %v1532, 0.125
    %v1612 = vmul.f32 %v1534, 0.125
    %v1613 = vmul.f32 %v1603, 0.125
    %v1614 = vmul.f32 %v1605, 0.125
    %v1615 = vmul.f32 %v1607, %v1607
    %v1616 = vmul.f32 %v1608, %v1608
    %v1617 = vmul.f32 %v1609, %v1609
    %v1618 = vmul.f32 %v1610, %v1610
    %v1619 = vsub.f32 %v1611, %v1615
    %v1620 = vsub.f32 %v1612, %v1616
    %v1621 = vsub.f32 %v1613, %v1617
    %v1622 = vsub.f32 %v1614, %v1618
    %v1623 = vld [vmem:[%s2] sm:$0xf]
    %v1624 = vadd.f32 %v1619, 1e-05
    %v1625 = vadd.f32 %v1620, 1e-05
    %v1626 = vadd.f32 %v1621, 1e-05
    %v1627 = vadd.f32 %v1622, 1e-05
    %v1628 = vrsqrt.pop %v1624
    %v1629 = vrsqrt.pop %v1625
    %v1630 = vrsqrt.pop %v1626
    %v1631 = vrsqrt.pop %v1627
    %v1636 = vcombine.low %v1628, %v1629
    %v1637 = vcombine.low %v1630, %v1631
    %v1639 = vunpack.c.l.s4 1966171168
    %v1640 = vunpack.c.0.s8 %v1639
    %v1641 = vlaneseq
    %v1642 = vshrl.u32 %v1641, 7
    %v1643 = vsub.s32 %v1640, %v1642
    %v1644 = vrot.slane %v1636, %v1643
    %v1646 = vunpack.c.l.s4 1966171168
    %v1647 = vunpack.c.0.s8 %v1646
    %v1648 = vlaneseq
    %v1649 = vshrl.u32 %v1648, 7
    %v1650 = vsub.s32 %v1647, %v1649
    %v1651 = vrot.slane %v1637, %v1650
    %v1652 = vcombine.low %v1644, %v1651
    %v1654 = vunpack.c.l.s4 1966171168
    %v1655 = vunpack.c.0.s8 %v1654
    %v1656 = vlaneseq
    %v1657 = vshrl.u32 %v1656, 7
    %v1658 = vsub.s32 %v1655, %v1657
    %v1659 = vrot.slane %v1652, %v1658
    %v1661 = vmul.f32 %v1623, %v1659
    %v1662 = vld [vmem:[%s3] sm:$0xf]
    %v1664 = vlaneseq
    %v1665 = vshrl.u32 %v1664, 7
    %v1666 = vsub.s32 0, %v1665
    %v1667 = vrot.slane %v1661, %v1666
    %v1668 = vlaneseq
    %v1669 = vshrl.u32 %v1668, 7
    %v1670 = vsub.s32 1, %v1669
    %v1671 = vrot.slane %v1661, %v1670
    %v1672 = vlaneseq
    %v1673 = vshrl.u32 %v1672, 7
    %v1674 = vsub.s32 2, %v1673
    %v1675 = vrot.slane %v1661, %v1674
    %v1676 = vlaneseq
    %v1677 = vshrl.u32 %v1676, 7
    %v1678 = vsub.s32 3, %v1677
    %v1679 = vrot.slane %v1661, %v1678
    %v1684 = vmul.f32 %v1607, %v1667
    %v1685 = vmul.f32 %v1608, %v1671
    %v1686 = vmul.f32 %v1609, %v1675
    %v1687 = vmul.f32 %v1610, %v1679
    %v1692 = vcombine.low %v1684, %v1685
    %v1693 = vcombine.low %v1686, %v1687
    %v1695 = vunpack.c.l.s4 1966171168
    %v1696 = vunpack.c.0.s8 %v1695
    %v1697 = vlaneseq
    %v1698 = vshrl.u32 %v1697, 7
    %v1699 = vsub.s32 %v1696, %v1698
    %v1700 = vrot.slane %v1692, %v1699
    %v1702 = vunpack.c.l.s4 1966171168
    %v1703 = vunpack.c.0.s8 %v1702
    %v1704 = vlaneseq
    %v1705 = vshrl.u32 %v1704, 7
    %v1706 = vsub.s32 %v1703, %v1705
    %v1707 = vrot.slane %v1693, %v1706
    %v1708 = vcombine.low %v1700, %v1707
    %v1710 = vunpack.c.l.s4 1966171168
    %v1711 = vunpack.c.0.s8 %v1710
    %v1712 = vlaneseq
    %v1713 = vshrl.u32 %v1712, 7
    %v1714 = vsub.s32 %v1711, %v1713
    %v1715 = vrot.slane %v1708, %v1714
    %v1717 = vsub.f32 %v1662, %v1715
    %v1718 = vmul.f32 %v1027, %v1667
    %v1719 = vmul.f32 %v1029, %v1671
    %v1720 = vmul.f32 %v1311, %v1675
    %v1721 = vmul.f32 %v1313, %v1679
    %v1723 = vlaneseq
    %v1724 = vshrl.u32 %v1723, 7
    %v1725 = vsub.s32 0, %v1724
    %v1726 = vrot.slane %v1717, %v1725
    %v1727 = vlaneseq
    %v1728 = vshrl.u32 %v1727, 7
    %v1729 = vsub.s32 1, %v1728
    %v1730 = vrot.slane %v1717, %v1729
    %v1731 = vlaneseq
    %v1732 = vshrl.u32 %v1731, 7
    %v1733 = vsub.s32 2, %v1732
    %v1734 = vrot.slane %v1717, %v1733
    %v1735 = vlaneseq
    %v1736 = vshrl.u32 %v1735, 7
    %v1737 = vsub.s32 3, %v1736
    %v1738 = vrot.slane %v1717, %v1737
    %v1743 = vadd.f32 %v1718, %v1726
    %v1744 = vadd.f32 %v1719, %v1730
    %v1745 = vadd.f32 %v1720, %v1734
    %v1746 = vadd.f32 %v1721, %v1738
    %v1747 = vmul.f32 %v1743, 0.01
    %v1748 = vmul.f32 %v1744, 0.01
    %v1749 = vmul.f32 %v1745, 0.01
    %v1750 = vmul.f32 %v1746, 0.01
    %v1751 = vmax.f32 %v1743, %v1747
    %v1752 = vmax.f32 %v1744, %v1748
    %v1753 = vmax.f32 %v1745, %v1749
    %v1754 = vmax.f32 %v1746, %v1750
    %v1755 = vld [vmem:[%s4] sm:$0xff]
    %v1756 = vld [vmem:[%s4 + $0x8] sm:$0xff]
    %v1757 = vld [vmem:[%s4 + $0x10] sm:$0xff]
    %v1758 = vld [vmem:[%s4 + $0x18] sm:$0xff]
    %v1759 = vld [vmem:[%s4 + $0x20] sm:$0xff]
    %v1760 = vld [vmem:[%s4 + $0x28] sm:$0xff]
    %v1761 = vld [vmem:[%s4 + $0x30] sm:$0xff]
    %v1762 = vld [vmem:[%s4 + $0x38] sm:$0xff]
    %v1763 = vld [vmem:[%s4 + $0x40] sm:$0xff]
    %v1764 = vld [vmem:[%s4 + $0x48] sm:$0xff]
    %v1765 = vld [vmem:[%s4 + $0x50] sm:$0xff]
    %v1766 = vld [vmem:[%s4 + $0x58] sm:$0xff]
    %v1767 = vld [vmem:[%s4 + $0x60] sm:$0xff]
    %v1768 = vld [vmem:[%s4 + $0x68] sm:$0xff]
    %v1769 = vld [vmem:[%s4 + $0x70] sm:$0xff]
    %v1770 = vld [vmem:[%s4 + $0x78] sm:$0xff]
    %v1771 = vld [vmem:[%s4 + $0x80] sm:$0xff]
    %v1772 = vld [vmem:[%s4 + $0x88] sm:$0xff]
    %v1773 = vld [vmem:[%s4 + $0x90] sm:$0xff]
    %v1774 = vld [vmem:[%s4 + $0x98] sm:$0xff]
    %v1775 = vld [vmem:[%s4 + $0xa0] sm:$0xff]
    %v1776 = vld [vmem:[%s4 + $0xa8] sm:$0xff]
    %v1777 = vld [vmem:[%s4 + $0xb0] sm:$0xff]
    %v1778 = vld [vmem:[%s4 + $0xb8] sm:$0xff]
    %v1779 = vld [vmem:[%s4 + $0xc0] sm:$0xff]
    %v1780 = vld [vmem:[%s4 + $0xc8] sm:$0xff]
    %v1781 = vld [vmem:[%s4 + $0xd0] sm:$0xff]
    %v1782 = vld [vmem:[%s4 + $0xd8] sm:$0xff]
    %v1783 = vld [vmem:[%s4 + $0xe0] sm:$0xff]
    %v1784 = vld [vmem:[%s4 + $0xe8] sm:$0xff]
    %v1785 = vld [vmem:[%s4 + $0xf0] sm:$0xff]
    %v1786 = vld [vmem:[%s4 + $0xf8] sm:$0xff]
    %v1787 = vld [vmem:[%s4 + $0x100] sm:$0xff]
    %v1788 = vld [vmem:[%s4 + $0x108] sm:$0xff]
    %v1789 = vld [vmem:[%s4 + $0x110] sm:$0xff]
    %v1790 = vld [vmem:[%s4 + $0x118] sm:$0xff]
    %v1791 = vld [vmem:[%s4 + $0x120] sm:$0xff]
    %v1792 = vld [vmem:[%s4 + $0x128] sm:$0xff]
    %v1793 = vld [vmem:[%s4 + $0x130] sm:$0xff]
    %v1794 = vld [vmem:[%s4 + $0x138] sm:$0xff]
    %v1795 = vld [vmem:[%s4 + $0x140] sm:$0xff]
    %v1796 = vld [vmem:[%s4 + $0x148] sm:$0xff]
    %v1797 = vld [vmem:[%s4 + $0x150] sm:$0xff]
    %v1798 = vld [vmem:[%s4 + $0x158] sm:$0xff]
    %v1799 = vld [vmem:[%s4 + $0x160] sm:$0xff]
    %v1800 = vld [vmem:[%s4 + $0x168] sm:$0xff]
    %v1801 = vld [vmem:[%s4 + $0x170] sm:$0xff]
    %v1802 = vld [vmem:[%s4 + $0x178] sm:$0xff]
    %v1803 = vld [vmem:[%s4 + $0x180] sm:$0xff]
    %v1804 = vld [vmem:[%s4 + $0x188] sm:$0xff]
    %v1805 = vld [vmem:[%s4 + $0x190] sm:$0xff]
    %v1806 = vld [vmem:[%s4 + $0x198] sm:$0xff]
    %v1807 = vld [vmem:[%s4 + $0x1a0] sm:$0xff]
    %v1808 = vld [vmem:[%s4 + $0x1a8] sm:$0xff]
    %v1809 = vld [vmem:[%s4 + $0x1b0] sm:$0xff]
    %v1810 = vld [vmem:[%s4 + $0x1b8] sm:$0xff]
    %v1811 = vld [vmem:[%s4 + $0x1c0] sm:$0xff]
    %v1812 = vld [vmem:[%s4 + $0x1c8] sm:$0xff]
    %v1813 = vld [vmem:[%s4 + $0x1d0] sm:$0xff]
    %v1814 = vld [vmem:[%s4 + $0x1d8] sm:$0xff]
    %v1815 = vld [vmem:[%s4 + $0x1e0] sm:$0xff]
    %v1816 = vld [vmem:[%s4 + $0x1e8] sm:$0xff]
    %v1817 = vld [vmem:[%s4 + $0x1f0] sm:$0xff]
    %v1818 = vld [vmem:[%s4 + $0x1f8] sm:$0xff]
    %v1819 = vunpack.c.l.bf16 %v1755
    %v1820 = vunpack.c.h.bf16 %v1755
    %v1821 = vunpack.c.l.bf16 %v1756
    %v1822 = vunpack.c.h.bf16 %v1756
    %v1823 = vunpack.c.l.bf16 %v1757
    %v1824 = vunpack.c.h.bf16 %v1757
    %v1825 = vunpack.c.l.bf16 %v1758
    %v1826 = vunpack.c.h.bf16 %v1758
    %v1827 = vunpack.c.l.bf16 %v1759
    %v1828 = vunpack.c.h.bf16 %v1759
    %v1829 = vunpack.c.l.bf16 %v1760
    %v1830 = vunpack.c.h.bf16 %v1760
    %v1831 = vunpack.c.l.bf16 %v1761
    %v1832 = vunpack.c.h.bf16 %v1761
    %v1833 = vunpack.c.l.bf16 %v1762
    %v1834 = vunpack.c.h.bf16 %v1762
    %v1835 = vunpack.c.l.bf16 %v1763
    %v1836 = vunpack.c.h.bf16 %v1763
    %v1837 = vunpack.c.l.bf16 %v1764
    %v1838 = vunpack.c.h.bf16 %v1764
    %v1839 = vunpack.c.l.bf16 %v1765
    %v1840 = vunpack.c.h.bf16 %v1765
    %v1841 = vunpack.c.l.bf16 %v1766
    %v1842 = vunpack.c.h.bf16 %v1766
    %v1843 = vunpack.c.l.bf16 %v1767
    %v1844 = vunpack.c.h.bf16 %v1767
    %v1845 = vunpack.c.l.bf16 %v1768
    %v1846 = vunpack.c.h.bf16 %v1768
    %v1847 = vunpack.c.l.bf16 %v1769
    %v1848 = vunpack.c.h.bf16 %v1769
    %v1849 = vunpack.c.l.bf16 %v1770
    %v1850 = vunpack.c.h.bf16 %v1770
    %v1851 = vunpack.c.l.bf16 %v1771
    %v1852 = vunpack.c.h.bf16 %v1771
    %v1853 = vunpack.c.l.bf16 %v1772
    %v1854 = vunpack.c.h.bf16 %v1772
    %v1855 = vunpack.c.l.bf16 %v1773
    %v1856 = vunpack.c.h.bf16 %v1773
    %v1857 = vunpack.c.l.bf16 %v1774
    %v1858 = vunpack.c.h.bf16 %v1774
    %v1859 = vunpack.c.l.bf16 %v1775
    %v1860 = vunpack.c.h.bf16 %v1775
    %v1861 = vunpack.c.l.bf16 %v1776
    %v1862 = vunpack.c.h.bf16 %v1776
    %v1863 = vunpack.c.l.bf16 %v1777
    %v1864 = vunpack.c.h.bf16 %v1777
    %v1865 = vunpack.c.l.bf16 %v1778
    %v1866 = vunpack.c.h.bf16 %v1778
    %v1867 = vunpack.c.l.bf16 %v1779
    %v1868 = vunpack.c.h.bf16 %v1779
    %v1869 = vunpack.c.l.bf16 %v1780
    %v1870 = vunpack.c.h.bf16 %v1780
    %v1871 = vunpack.c.l.bf16 %v1781
    %v1872 = vunpack.c.h.bf16 %v1781
    %v1873 = vunpack.c.l.bf16 %v1782
    %v1874 = vunpack.c.h.bf16 %v1782
    %v1875 = vunpack.c.l.bf16 %v1783
    %v1876 = vunpack.c.h.bf16 %v1783
    %v1877 = vunpack.c.l.bf16 %v1784
    %v1878 = vunpack.c.h.bf16 %v1784
    %v1879 = vunpack.c.l.bf16 %v1785
    %v1880 = vunpack.c.h.bf16 %v1785
    %v1881 = vunpack.c.l.bf16 %v1786
    %v1882 = vunpack.c.h.bf16 %v1786
    %v1883 = vunpack.c.l.bf16 %v1787
    %v1884 = vunpack.c.h.bf16 %v1787
    %v1885 = vunpack.c.l.bf16 %v1788
    %v1886 = vunpack.c.h.bf16 %v1788
    %v1887 = vunpack.c.l.bf16 %v1789
    %v1888 = vunpack.c.h.bf16 %v1789
    %v1889 = vunpack.c.l.bf16 %v1790
    %v1890 = vunpack.c.h.bf16 %v1790
    %v1891 = vunpack.c.l.bf16 %v1791
    %v1892 = vunpack.c.h.bf16 %v1791
    %v1893 = vunpack.c.l.bf16 %v1792
    %v1894 = vunpack.c.h.bf16 %v1792
    %v1895 = vunpack.c.l.bf16 %v1793
    %v1896 = vunpack.c.h.bf16 %v1793
    %v1897 = vunpack.c.l.bf16 %v1794
    %v1898 = vunpack.c.h.bf16 %v1794
    %v1899 = vunpack.c.l.bf16 %v1795
    %v1900 = vunpack.c.h.bf16 %v1795
    %v1901 = vunpack.c.l.bf16 %v1796
    %v1902 = vunpack.c.h.bf16 %v1796
    %v1903 = vunpack.c.l.bf16 %v1797
    %v1904 = vunpack.c.h.bf16 %v1797
    %v1905 = vunpack.c.l.bf16 %v1798
    %v1906 = vunpack.c.h.bf16 %v1798
    %v1907 = vunpack.c.l.bf16 %v1799
    %v1908 = vunpack.c.h.bf16 %v1799
    %v1909 = vunpack.c.l.bf16 %v1800
    %v1910 = vunpack.c.h.bf16 %v1800
    %v1911 = vunpack.c.l.bf16 %v1801
    %v1912 = vunpack.c.h.bf16 %v1801
    %v1913 = vunpack.c.l.bf16 %v1802
    %v1914 = vunpack.c.h.bf16 %v1802
    %v1915 = vunpack.c.l.bf16 %v1803
    %v1916 = vunpack.c.h.bf16 %v1803
    %v1917 = vunpack.c.l.bf16 %v1804
    %v1918 = vunpack.c.h.bf16 %v1804
    %v1919 = vunpack.c.l.bf16 %v1805
    %v1920 = vunpack.c.h.bf16 %v1805
    %v1921 = vunpack.c.l.bf16 %v1806
    %v1922 = vunpack.c.h.bf16 %v1806
    %v1923 = vunpack.c.l.bf16 %v1807
    %v1924 = vunpack.c.h.bf16 %v1807
    %v1925 = vunpack.c.l.bf16 %v1808
    %v1926 = vunpack.c.h.bf16 %v1808
    %v1927 = vunpack.c.l.bf16 %v1809
    %v1928 = vunpack.c.h.bf16 %v1809
    %v1929 = vunpack.c.l.bf16 %v1810
    %v1930 = vunpack.c.h.bf16 %v1810
    %v1931 = vunpack.c.l.bf16 %v1811
    %v1932 = vunpack.c.h.bf16 %v1811
    %v1933 = vunpack.c.l.bf16 %v1812
    %v1934 = vunpack.c.h.bf16 %v1812
    %v1935 = vunpack.c.l.bf16 %v1813
    %v1936 = vunpack.c.h.bf16 %v1813
    %v1937 = vunpack.c.l.bf16 %v1814
    %v1938 = vunpack.c.h.bf16 %v1814
    %v1939 = vunpack.c.l.bf16 %v1815
    %v1940 = vunpack.c.h.bf16 %v1815
    %v1941 = vunpack.c.l.bf16 %v1816
    %v1942 = vunpack.c.h.bf16 %v1816
    %v1943 = vunpack.c.l.bf16 %v1817
    %v1944 = vunpack.c.h.bf16 %v1817
    %v1945 = vunpack.c.l.bf16 %v1818
    %v1946 = vunpack.c.h.bf16 %v1818
    %1947 = vmatprep.subr.mxu0 %v1820
    %1948 = vmatpush1.msra.mxu0 %v1819
    %1949 = vmatprep.subr.mxu0 %v1822
    %1950 = vmatpush1.msra.mxu0 %v1821
    %1951 = vmatprep.subr.mxu0 %v1824
    %1952 = vmatpush1.msra.mxu0 %v1823
    %1953 = vmatprep.subr.mxu0 %v1826
    %1954 = vmatpush1.msra.mxu0 %v1825
    %1955 = vmatprep.subr.mxu0 %v1828
    %1956 = vmatpush1.msra.mxu0 %v1827
    %1957 = vmatprep.subr.mxu0 %v1830
    %1958 = vmatpush1.msra.mxu0 %v1829
    %1959 = vmatprep.subr.mxu0 %v1832
    %1960 = vmatpush1.msra.mxu0 %v1831
    %1961 = vmatprep.subr.mxu0 %v1834
    %1962 = vmatpush1.msra.mxu0 %v1833
    %1963 = vmatprep.subr.mxu0 %v1836
    %1964 = vmatpush1.msra.mxu0 %v1835
    %1965 = vmatprep.subr.mxu0 %v1838
    %1966 = vmatpush1.msra.mxu0 %v1837
    %1967 = vmatprep.subr.mxu0 %v1840
    %1968 = vmatpush1.msra.mxu0 %v1839
    %1969 = vmatprep.subr.mxu0 %v1842
    %1970 = vmatpush1.msra.mxu0 %v1841
    %1971 = vmatprep.subr.mxu0 %v1844
    %1972 = vmatpush1.msra.mxu0 %v1843
    %1973 = vmatprep.subr.mxu0 %v1846
    %1974 = vmatpush1.msra.mxu0 %v1845
    %1975 = vmatprep.subr.mxu0 %v1848
    %1976 = vmatpush1.msra.mxu0 %v1847
    %1977 = vmatprep.subr.mxu0 %v1850
    %1978 = vmatpush1.msra.mxu0 %v1849
    %1979 = vmatprep.subr.mxu0 %v1852
    %1980 = vmatpush1.msra.mxu0 %v1851
    %1981 = vmatprep.subr.mxu0 %v1854
    %1982 = vmatpush1.msra.mxu0 %v1853
    %1983 = vmatprep.subr.mxu0 %v1856
    %1984 = vmatpush1.msra.mxu0 %v1855
    %1985 = vmatprep.subr.mxu0 %v1858
    %1986 = vmatpush1.msra.mxu0 %v1857
    %1987 = vmatprep.subr.mxu0 %v1860
    %1988 = vmatpush1.msra.mxu0 %v1859
    %1989 = vmatprep.subr.mxu0 %v1862
    %1990 = vmatpush1.msra.mxu0 %v1861
    %1991 = vmatprep.subr.mxu0 %v1864
    %1992 = vmatpush1.msra.mxu0 %v1863
    %1993 = vmatprep.subr.mxu0 %v1866
    %1994 = vmatpush1.msra.mxu0 %v1865
    %1995 = vmatprep.subr.mxu0 %v1868
    %1996 = vmatpush1.msra.mxu0 %v1867
    %1997 = vmatprep.subr.mxu0 %v1870
    %1998 = vmatpush1.msra.mxu0 %v1869
    %1999 = vmatprep.subr.mxu0 %v1872
    %2000 = vmatpush1.msra.mxu0 %v1871
    %2001 = vmatprep.subr.mxu0 %v1874
    %2002 = vmatpush1.msra.mxu0 %v1873
    %2003 = vmatprep.subr.mxu0 %v1876
    %2004 = vmatpush1.msra.mxu0 %v1875
    %2005 = vmatprep.subr.mxu0 %v1878
    %2006 = vmatpush1.msra.mxu0 %v1877
    %2007 = vmatprep.subr.mxu0 %v1880
    %2008 = vmatpush1.msra.mxu0 %v1879
    %2009 = vmatprep.subr.mxu0 %v1882
    %2010 = vmatpush1.msra.mxu0 %v1881
    %2011 = vmatprep.mubr.f32.mxu0 %v1752
    %2012 = vmatmul.mubr.f32.gmra.mrb[0].mxu0 %v1751
    %v2013 = vpop.f32.mrb[0].mxu0
    %v2014 = vadd.f32 0.0, %v2013
    %v2015 = vpop.f32.mrb[0].mxu0
    %v2016 = vadd.f32 0.0, %v2015
    %2017 = vdwg.mxu0
    %2018 = vmatprep.subr.mxu0 %v1884
    %2019 = vmatpush1.msra.mxu0 %v1883
    %2020 = vmatprep.subr.mxu0 %v1886
    %2021 = vmatpush1.msra.mxu0 %v1885
    %2022 = vmatprep.subr.mxu0 %v1888
    %2023 = vmatpush1.msra.mxu0 %v1887
    %2024 = vmatprep.subr.mxu0 %v1890
    %2025 = vmatpush1.msra.mxu0 %v1889
    %2026 = vmatprep.subr.mxu0 %v1892
    %2027 = vmatpush1.msra.mxu0 %v1891
    %2028 = vmatprep.subr.mxu0 %v1894
    %2029 = vmatpush1.msra.mxu0 %v1893
    %2030 = vmatprep.subr.mxu0 %v1896
    %2031 = vmatpush1.msra.mxu0 %v1895
    %2032 = vmatprep.subr.mxu0 %v1898
    %2033 = vmatpush1.msra.mxu0 %v1897
    %2034 = vmatprep.subr.mxu0 %v1900
    %2035 = vmatpush1.msra.mxu0 %v1899
    %2036 = vmatprep.subr.mxu0 %v1902
    %2037 = vmatpush1.msra.mxu0 %v1901
    %2038 = vmatprep.subr.mxu0 %v1904
    %2039 = vmatpush1.msra.mxu0 %v1903
    %2040 = vmatprep.subr.mxu0 %v1906
    %2041 = vmatpush1.msra.mxu0 %v1905
    %2042 = vmatprep.subr.mxu0 %v1908
    %2043 = vmatpush1.msra.mxu0 %v1907
    %2044 = vmatprep.subr.mxu0 %v1910
    %2045 = vmatpush1.msra.mxu0 %v1909
    %2046 = vmatprep.subr.mxu0 %v1912
    %2047 = vmatpush1.msra.mxu0 %v1911
    %2048 = vmatprep.subr.mxu0 %v1914
    %2049 = vmatpush1.msra.mxu0 %v1913
    %2050 = vmatprep.subr.mxu0 %v1916
    %2051 = vmatpush1.msra.mxu0 %v1915
    %2052 = vmatprep.subr.mxu0 %v1918
    %2053 = vmatpush1.msra.mxu0 %v1917
    %2054 = vmatprep.subr.mxu0 %v1920
    %2055 = vmatpush1.msra.mxu0 %v1919
    %2056 = vmatprep.subr.mxu0 %v1922
    %2057 = vmatpush1.msra.mxu0 %v1921
    %2058 = vmatprep.subr.mxu0 %v1924
    %2059 = vmatpush1.msra.mxu0 %v1923
    %2060 = vmatprep.subr.mxu0 %v1926
    %2061 = vmatpush1.msra.mxu0 %v1925
    %2062 = vmatprep.subr.mxu0 %v1928
    %2063 = vmatpush1.msra.mxu0 %v1927
    %2064 = vmatprep.subr.mxu0 %v1930
    %2065 = vmatpush1.msra.mxu0 %v1929
    %2066 = vmatprep.subr.mxu0 %v1932
    %2067 = vmatpush1.msra.mxu0 %v1931
    %2068 = vmatprep.subr.mxu0 %v1934
    %2069 = vmatpush1.msra.mxu0 %v1933
    %2070 = vmatprep.subr.mxu0 %v1936
    %2071 = vmatpush1.msra.mxu0 %v1935
    %2072 = vmatprep.subr.mxu0 %v1938
    %2073 = vmatpush1.msra.mxu0 %v1937
    %2074 = vmatprep.subr.mxu0 %v1940
    %2075 = vmatpush1.msra.mxu0 %v1939
    %2076 = vmatprep.subr.mxu0 %v1942
    %2077 = vmatpush1.msra.mxu0 %v1941
    %2078 = vmatprep.subr.mxu0 %v1944
    %2079 = vmatpush1.msra.mxu0 %v1943
    %2080 = vmatprep.subr.mxu0 %v1946
    %2081 = vmatpush1.msra.mxu0 %v1945
    %2082 = vmatprep.mubr.f32.mxu0 %v1754
    %2083 = vmatmul.mubr.f32.gmra.mrb[0].mxu0 %v1753
    %v2084 = vpop.f32.mrb[0].mxu0
    %v2085 = vadd.f32 %v2014, %v2084
    %v2086 = vpop.f32.mrb[0].mxu0
    %v2087 = vadd.f32 %v2016, %v2086
    %2088 = vdwg.mxu0
    %2089 = vmatprep.subr.mxu0 %v2087
    %2090 = vmatpush1.msra.mxu0 %v2085
    %2091 = vmatprep.subr.mxu0 0.0
    %2092 = vmatpush1.msra.mxu0 0.0
    %2093 = vmatprep.subr.mxu0 0.0
    %2094 = vmatpush1.msra.mxu0 0.0
    %2095 = vmatprep.subr.mxu0 0.0
    %2096 = vmatpush1.msra.mxu0 0.0
    %2097 = vmatprep.subr.mxu0 0.0
    %2098 = vmatpush1.msra.mxu0 0.0
    %2099 = vmatprep.subr.mxu0 0.0
    %2100 = vmatpush1.msra.mxu0 0.0
    %2101 = vmatprep.subr.mxu0 0.0
    %2102 = vmatpush1.msra.mxu0 0.0
    %2103 = vmatprep.subr.mxu0 0.0
    %2104 = vmatpush1.msra.mxu0 0.0
    %2105 = vmatprep.subr.mxu0 0.0
    %2106 = vmatpush1.msra.mxu0 0.0
    %2107 = vmatprep.subr.mxu0 0.0
    %2108 = vmatpush1.msra.mxu0 0.0
    %2109 = vmatprep.subr.mxu0 0.0
    %2110 = vmatpush1.msra.mxu0 0.0
    %2111 = vmatprep.subr.mxu0 0.0
    %2112 = vmatpush1.msra.mxu0 0.0
    %2113 = vmatprep.subr.mxu0 0.0
    %2114 = vmatpush1.msra.mxu0 0.0
    %2115 = vmatprep.subr.mxu0 0.0
    %2116 = vmatpush1.msra.mxu0 0.0
    %2117 = vmatprep.subr.mxu0 0.0
    %2118 = vmatpush1.msra.mxu0 0.0
    %2119 = vmatprep.subr.mxu0 0.0
    %2120 = vmatpush1.msra.mxu0 0.0
    %2121 = vmatprep.subr.mxu0 0.0
    %2122 = vmatpush1.msra.mxu0 0.0
    %2123 = vmatprep.subr.mxu0 0.0
    %2124 = vmatpush1.msra.mxu0 0.0
    %2125 = vmatprep.subr.mxu0 0.0
    %2126 = vmatpush1.msra.mxu0 0.0
    %2127 = vmatprep.subr.mxu0 0.0
    %2128 = vmatpush1.msra.mxu0 0.0
    %2129 = vmatprep.subr.mxu0 0.0
    %2130 = vmatpush1.msra.mxu0 0.0
    %2131 = vmatprep.subr.mxu0 0.0
    %2132 = vmatpush1.msra.mxu0 0.0
    %2133 = vmatprep.subr.mxu0 0.0
    %2134 = vmatpush1.msra.mxu0 0.0
    %2135 = vmatprep.subr.mxu0 0.0
    %2136 = vmatpush1.msra.mxu0 0.0
    %2137 = vmatprep.subr.mxu0 0.0
    %2138 = vmatpush1.msra.mxu0 0.0
    %2139 = vmatprep.subr.mxu0 0.0
    %2140 = vmatpush1.msra.mxu0 0.0
    %2141 = vmatprep.subr.mxu0 0.0
    %2142 = vmatpush1.msra.mxu0 0.0
    %2143 = vmatprep.subr.mxu0 0.0
    %2144 = vmatpush1.msra.mxu0 0.0
    %2145 = vmatprep.subr.mxu0 0.0
    %2146 = vmatpush1.msra.mxu0 0.0
    %2147 = vmatprep.subr.mxu0 0.0
    %2148 = vmatpush1.msra.mxu0 0.0
    %2149 = vmatprep.subr.mxu0 0.0
    %2150 = vmatpush1.msra.mxu0 0.0
    %2151 = vmatprep.subr.mxu0 0.0
    %2152 = vmatpush1.msra.mxu0 0.0
    %2153 = vmatprep.mubr.f32.mxu0 0.0
    %2154 = vmatmul.mubr.f32.gmra.mrb[0].mxu0 %v1317
    %v2155 = vpop.f32.mrb[0].mxu0
    %v2156 = vadd.f32 0.0, %v2155
    %v2157 = vpop.f32.mrb[0].mxu0
    %v2158 = vadd.f32 0.0, %v2157
    %2159 = vdwg.mxu0
    %v2160 = vmul.f32 %v2085, %v2085
    %v2161 = vmul.f32 %v2087, %v2087
    %2162 = vmatprep.subr.mxu0 %v2161
    %2163 = vmatpush1.msra.mxu0 %v2160
    %2164 = vmatprep.subr.mxu0 0.0
    %2165 = vmatpush1.msra.mxu0 0.0
    %2166 = vmatprep.subr.mxu0 0.0
    %2167 = vmatpush1.msra.mxu0 0.0
    %2168 = vmatprep.subr.mxu0 0.0
    %2169 = vmatpush1.msra.mxu0 0.0
    %2170 = vmatprep.subr.mxu0 0.0
    %2171 = vmatpush1.msra.mxu0 0.0
    %2172 = vmatprep.subr.mxu0 0.0
    %2173 = vmatpush1.msra.mxu0 0.0
    %2174 = vmatprep.subr.mxu0 0.0
    %2175 = vmatpush1.msra.mxu0 0.0
    %2176 = vmatprep.subr.mxu0 0.0
    %2177 = vmatpush1.msra.mxu0 0.0
    %2178 = vmatprep.subr.mxu0 0.0
    %2179 = vmatpush1.msra.mxu0 0.0
    %2180 = vmatprep.subr.mxu0 0.0
    %2181 = vmatpush1.msra.mxu0 0.0
    %2182 = vmatprep.subr.mxu0 0.0
    %2183 = vmatpush1.msra.mxu0 0.0
    %2184 = vmatprep.subr.mxu0 0.0
    %2185 = vmatpush1.msra.mxu0 0.0
    %2186 = vmatprep.subr.mxu0 0.0
    %2187 = vmatpush1.msra.mxu0 0.0
    %2188 = vmatprep.subr.mxu0 0.0
    %2189 = vmatpush1.msra.mxu0 0.0
    %2190 = vmatprep.subr.mxu0 0.0
    %2191 = vmatpush1.msra.mxu0 0.0
    %2192 = vmatprep.subr.mxu0 0.0
    %2193 = vmatpush1.msra.mxu0 0.0
    %2194 = vmatprep.subr.mxu0 0.0
    %2195 = vmatpush1.msra.mxu0 0.0
    %2196 = vmatprep.subr.mxu0 0.0
    %2197 = vmatpush1.msra.mxu0 0.0
    %2198 = vmatprep.subr.mxu0 0.0
    %2199 = vmatpush1.msra.mxu0 0.0
    %2200 = vmatprep.subr.mxu0 0.0
    %2201 = vmatpush1.msra.mxu0 0.0
    %2202 = vmatprep.subr.mxu0 0.0
    %2203 = vmatpush1.msra.mxu0 0.0
    %2204 = vmatprep.subr.mxu0 0.0
    %2205 = vmatpush1.msra.mxu0 0.0
    %2206 = vmatprep.subr.mxu0 0.0
    %2207 = vmatpush1.msra.mxu0 0.0
    %2208 = vmatprep.subr.mxu0 0.0
    %2209 = vmatpush1.msra.mxu0 0.0
    %2210 = vmatprep.subr.mxu0 0.0
    %2211 = vmatpush1.msra.mxu0 0.0
    %2212 = vmatprep.subr.mxu0 0.0
    %2213 = vmatpush1.msra.mxu0 0.0
    %2214 = vmatprep.subr.mxu0 0.0
    %2215 = vmatpush1.msra.mxu0 0.0
    %2216 = vmatprep.subr.mxu0 0.0
    %2217 = vmatpush1.msra.mxu0 0.0
    %2218 = vmatprep.subr.mxu0 0.0
    %2219 = vmatpush1.msra.mxu0 0.0
    %2220 = vmatprep.subr.mxu0 0.0
    %2221 = vmatpush1.msra.mxu0 0.0
    %2222 = vmatprep.subr.mxu0 0.0
    %2223 = vmatpush1.msra.mxu0 0.0
    %2224 = vmatprep.subr.mxu0 0.0
    %2225 = vmatpush1.msra.mxu0 0.0
    %2226 = vmatprep.mubr.f32.mxu0 0.0
    %2227 = vmatmul.mubr.f32.gmra.mrb[0].mxu0 %v1317
    %v2228 = vpop.f32.mrb[0].mxu0
    %v2229 = vadd.f32 0.0, %v2228
    %v2230 = vpop.f32.mrb[0].mxu0
    %v2231 = vadd.f32 0.0, %v2230
    %2232 = vdwg.mxu0
    %v2233 = vmul.f32 %v2156, 0.125
    %v2234 = vmul.f32 %v2158, 0.125
    %v2235 = vmul.f32 %v2229, 0.125
    %v2236 = vmul.f32 %v2231, 0.125
    %v2237 = vmul.f32 %v2233, %v2233
    %v2238 = vmul.f32 %v2234, %v2234
    %v2239 = vsub.f32 %v2235, %v2237
    %v2240 = vsub.f32 %v2236, %v2238
    %v2241 = vld [vmem:[%s5] sm:$0x3]
    %v2242 = vadd.f32 %v2239, 1e-05
    %v2243 = vadd.f32 %v2240, 1e-05
    %v2244 = vrsqrt.pop %v2242
    %v2245 = vrsqrt.pop %v2243
    %v2248 = vcombine.low %v2244, %v2245
    %v2250 = vunpack.c.l.s4 1966171168
    %v2251 = vunpack.c.0.s8 %v2250
    %v2252 = vlaneseq
    %v2253 = vshrl.u32 %v2252, 7
    %v2254 = vsub.s32 %v2251, %v2253
    %v2255 = vrot.slane %v2248, %v2254
    %v2257 = vunpack.c.l.s4 1966171168
    %v2258 = vunpack.c.0.s8 %v2257
    %v2259 = vlaneseq
    %v2260 = vshrl.u32 %v2259, 7
    %v2261 = vsub.s32 %v2258, %v2260
    %v2262 = vrot.slane %v2255, %v2261
    %v2264 = vmul.f32 %v2241, %v2262
    %v2265 = vld [vmem:[%s6] sm:$0x3]
    %v2267 = vlaneseq
    %v2268 = vshrl.u32 %v2267, 7
    %v2269 = vsub.s32 0, %v2268
    %v2270 = vrot.slane %v2264, %v2269
    %v2271 = vlaneseq
    %v2272 = vshrl.u32 %v2271, 7
    %v2273 = vsub.s32 1, %v2272
    %v2274 = vrot.slane %v2264, %v2273
    %v2277 = vmul.f32 %v2233, %v2270
    %v2278 = vmul.f32 %v2234, %v2274
    %v2281 = vcombine.low %v2277, %v2278
    %v2283 = vunpack.c.l.s4 1966171168
    %v2284 = vunpack.c.0.s8 %v2283
    %v2285 = vlaneseq
    %v2286 = vshrl.u32 %v2285, 7
    %v2287 = vsub.s32 %v2284, %v2286
    %v2288 = vrot.slane %v2281, %v2287
    %v2290 = vunpack.c.l.s4 1966171168
    %v2291 = vunpack.c.0.s8 %v2290
    %v2292 = vlaneseq
    %v2293 = vshrl.u32 %v2292, 7
    %v2294 = vsub.s32 %v2291, %v2293
    %v2295 = vrot.slane %v2288, %v2294
    %v2297 = vsub.f32 %v2265, %v2295
    %v2298 = vmul.f32 %v2085, %v2270
    %v2299 = vmul.f32 %v2087, %v2274
    %v2301 = vlaneseq
    %v2302 = vshrl.u32 %v2301, 7
    %v2303 = vsub.s32 0, %v2302
    %v2304 = vrot.slane %v2297, %v2303
    %v2305 = vlaneseq
    %v2306 = vshrl.u32 %v2305, 7
    %v2307 = vsub.s32 1, %v2306
    %v2308 = vrot.slane %v2297, %v2307
    %v2311 = vadd.f32 %v2298, %v2304
    %v2312 = vadd.f32 %v2299, %v2308
    %v2313 = vmul.f32 %v2311, 0.01
    %v2314 = vmul.f32 %v2312, 0.01
    %v2315 = vmax.f32 %v2311, %v2313
    %v2316 = vmax.f32 %v2312, %v2314
    %v2317 = vld [vmem:[%s7] sm:$0xf]
    %v2318 = vld [vmem:[%s7 + $0x4] sm:$0xf]
    %v2319 = vld [vmem:[%s7 + $0x8] sm:$0xf]
    %v2320 = vld [vmem:[%s7 + $0xc] sm:$0xf]
    %v2321 = vld [vmem:[%s7 + $0x10] sm:$0xf]
    %v2322 = vld [vmem:[%s7 + $0x14] sm:$0xf]
    %v2323 = vld [vmem:[%s7 + $0x18] sm:$0xf]
    %v2324 = vld [vmem:[%s7 + $0x1c] sm:$0xf]
    %v2325 = vld [vmem:[%s7 + $0x20] sm:$0xf]
    %v2326 = vld [vmem:[%s7 + $0x24] sm:$0xf]
    %v2327 = vld [vmem:[%s7 + $0x28] sm:$0xf]
    %v2328 = vld [vmem:[%s7 + $0x2c] sm:$0xf]
    %v2329 = vld [vmem:[%s7 + $0x30] sm:$0xf]
    %v2330 = vld [vmem:[%s7 + $0x34] sm:$0xf]
    %v2331 = vld [vmem:[%s7 + $0x38] sm:$0xf]
    %v2332 = vld [vmem:[%s7 + $0x3c] sm:$0xf]
    %v2333 = vld [vmem:[%s7 + $0x40] sm:$0xf]
    %v2334 = vld [vmem:[%s7 + $0x44] sm:$0xf]
    %v2335 = vld [vmem:[%s7 + $0x48] sm:$0xf]
    %v2336 = vld [vmem:[%s7 + $0x4c] sm:$0xf]
    %v2337 = vld [vmem:[%s7 + $0x50] sm:$0xf]
    %v2338 = vld [vmem:[%s7 + $0x54] sm:$0xf]
    %v2339 = vld [vmem:[%s7 + $0x58] sm:$0xf]
    %v2340 = vld [vmem:[%s7 + $0x5c] sm:$0xf]
    %v2341 = vld [vmem:[%s7 + $0x60] sm:$0xf]
    %v2342 = vld [vmem:[%s7 + $0x64] sm:$0xf]
    %v2343 = vld [vmem:[%s7 + $0x68] sm:$0xf]
    %v2344 = vld [vmem:[%s7 + $0x6c] sm:$0xf]
    %v2345 = vld [vmem:[%s7 + $0x70] sm:$0xf]
    %v2346 = vld [vmem:[%s7 + $0x74] sm:$0xf]
    %v2347 = vld [vmem:[%s7 + $0x78] sm:$0xf]
    %v2348 = vld [vmem:[%s7 + $0x7c] sm:$0xf]
    %v2349 = vunpack.c.l.bf16 %v2317
    %v2350 = vunpack.c.l.bf16 %v2318
    %v2351 = vunpack.c.l.bf16 %v2319
    %v2352 = vunpack.c.l.bf16 %v2320
    %v2353 = vunpack.c.l.bf16 %v2321
    %v2354 = vunpack.c.l.bf16 %v2322
    %v2355 = vunpack.c.l.bf16 %v2323
    %v2356 = vunpack.c.l.bf16 %v2324
    %v2357 = vunpack.c.l.bf16 %v2325
    %v2358 = vunpack.c.l.bf16 %v2326
    %v2359 = vunpack.c.l.bf16 %v2327
    %v2360 = vunpack.c.l.bf16 %v2328
    %v2361 = vunpack.c.l.bf16 %v2329
    %v2362 = vunpack.c.l.bf16 %v2330
    %v2363 = vunpack.c.l.bf16 %v2331
    %v2364 = vunpack.c.l.bf16 %v2332
    %v2365 = vunpack.c.l.bf16 %v2333
    %v2366 = vunpack.c.l.bf16 %v2334
    %v2367 = vunpack.c.l.bf16 %v2335
    %v2368 = vunpack.c.l.bf16 %v2336
    %v2369 = vunpack.c.l.bf16 %v2337
    %v2370 = vunpack.c.l.bf16 %v2338
    %v2371 = vunpack.c.l.bf16 %v2339
    %v2372 = vunpack.c.l.bf16 %v2340
    %v2373 = vunpack.c.l.bf16 %v2341
    %v2374 = vunpack.c.l.bf16 %v2342
    %v2375 = vunpack.c.l.bf16 %v2343
    %v2376 = vunpack.c.l.bf16 %v2344
    %v2377 = vunpack.c.l.bf16 %v2345
    %v2378 = vunpack.c.l.bf16 %v2346
    %v2379 = vunpack.c.l.bf16 %v2347
    %v2380 = vunpack.c.l.bf16 %v2348
    %2381 = vmatprep.subr.mxu0 0.0
    %2382 = vmatpush1.msra.mxu0 %v2349
    %2383 = vmatprep.subr.mxu0 0.0
    %2384 = vmatpush1.msra.mxu0 %v2350
    %2385 = vmatprep.subr.mxu0 0.0
    %2386 = vmatpush1.msra.mxu0 %v2351
    %2387 = vmatprep.subr.mxu0 0.0
    %2388 = vmatpush1.msra.mxu0 %v2352
    %2389 = vmatprep.subr.mxu0 0.0
    %2390 = vmatpush1.msra.mxu0 %v2353
    %2391 = vmatprep.subr.mxu0 0.0
    %2392 = vmatpush1.msra.mxu0 %v2354
    %2393 = vmatprep.subr.mxu0 0.0
    %2394 = vmatpush1.msra.mxu0 %v2355
    %2395 = vmatprep.subr.mxu0 0.0
    %2396 = vmatpush1.msra.mxu0 %v2356
    %2397 = vmatprep.subr.mxu0 0.0
    %2398 = vmatpush1.msra.mxu0 %v2357
    %2399 = vmatprep.subr.mxu0 0.0
    %2400 = vmatpush1.msra.mxu0 %v2358
    %2401 = vmatprep.subr.mxu0 0.0
    %2402 = vmatpush1.msra.mxu0 %v2359
    %2403 = vmatprep.subr.mxu0 0.0
    %2404 = vmatpush1.msra.mxu0 %v2360
    %2405 = vmatprep.subr.mxu0 0.0
    %2406 = vmatpush1.msra.mxu0 %v2361
    %2407 = vmatprep.subr.mxu0 0.0
    %2408 = vmatpush1.msra.mxu0 %v2362
    %2409 = vmatprep.subr.mxu0 0.0
    %2410 = vmatpush1.msra.mxu0 %v2363
    %2411 = vmatprep.subr.mxu0 0.0
    %2412 = vmatpush1.msra.mxu0 %v2364
    %2413 = vmatprep.subr.mxu0 0.0
    %2414 = vmatpush1.msra.mxu0 %v2365
    %2415 = vmatprep.subr.mxu0 0.0
    %2416 = vmatpush1.msra.mxu0 %v2366
    %2417 = vmatprep.subr.mxu0 0.0
    %2418 = vmatpush1.msra.mxu0 %v2367
    %2419 = vmatprep.subr.mxu0 0.0
    %2420 = vmatpush1.msra.mxu0 %v2368
    %2421 = vmatprep.subr.mxu0 0.0
    %2422 = vmatpush1.msra.mxu0 %v2369
    %2423 = vmatprep.subr.mxu0 0.0
    %2424 = vmatpush1.msra.mxu0 %v2370
    %2425 = vmatprep.subr.mxu0 0.0
    %2426 = vmatpush1.msra.mxu0 %v2371
    %2427 = vmatprep.subr.mxu0 0.0
    %2428 = vmatpush1.msra.mxu0 %v2372
    %2429 = vmatprep.subr.mxu0 0.0
    %2430 = vmatpush1.msra.mxu0 %v2373
    %2431 = vmatprep.subr.mxu0 0.0
    %2432 = vmatpush1.msra.mxu0 %v2374
    %2433 = vmatprep.subr.mxu0 0.0
    %2434 = vmatpush1.msra.mxu0 %v2375
    %2435 = vmatprep.subr.mxu0 0.0
    %2436 = vmatpush1.msra.mxu0 %v2376
    %2437 = vmatprep.subr.mxu0 0.0
    %2438 = vmatpush1.msra.mxu0 %v2377
    %2439 = vmatprep.subr.mxu0 0.0
    %2440 = vmatpush1.msra.mxu0 %v2378
    %2441 = vmatprep.subr.mxu0 0.0
    %2442 = vmatpush1.msra.mxu0 %v2379
    %2443 = vmatprep.subr.mxu0 0.0
    %2444 = vmatpush1.msra.mxu0 %v2380
    %2445 = vmatprep.mubr.f32.mxu0 %v2316
    %2446 = vmatmul.mubr.f32.gmra.mrb[0].mxu0 %v2315
    %v2447 = vpop.f32.mrb[0].mxu0
    %v2448 = vadd.f32 0.0, %v2447
    %v2449 = vpop.f32.mrb[0].mxu0
    %2450 = vdwg.mxu0
    %2451 = vmatprep.subr.mxu0 0.0
    %2452 = vmatpush1.msra.mxu0 %v2448
    %2453 = vmatprep.subr.mxu0 0.0
    %2454 = vmatpush1.msra.mxu0 0.0
    %2455 = vmatprep.subr.mxu0 0.0
    %2456 = vmatpush1.msra.mxu0 0.0
    %2457 = vmatprep.subr.mxu0 0.0
    %2458 = vmatpush1.msra.mxu0 0.0
    %2459 = vmatprep.subr.mxu0 0.0
    %2460 = vmatpush1.msra.mxu0 0.0
    %2461 = vmatprep.subr.mxu0 0.0
    %2462 = vmatpush1.msra.mxu0 0.0
    %2463 = vmatprep.subr.mxu0 0.0
    %2464 = vmatpush1.msra.mxu0 0.0
    %2465 = vmatprep.subr.mxu0 0.0
    %2466 = vmatpush1.msra.mxu0 0.0
    %2467 = vmatprep.subr.mxu0 0.0
    %2468 = vmatpush1.msra.mxu0 0.0
    %2469 = vmatprep.subr.mxu0 0.0
    %2470 = vmatpush1.msra.mxu0 0.0
    %2471 = vmatprep.subr.mxu0 0.0
    %2472 = vmatpush1.msra.mxu0 0.0
    %2473 = vmatprep.subr.mxu0 0.0
    %2474 = vmatpush1.msra.mxu0 0.0
    %2475 = vmatprep.subr.mxu0 0.0
    %2476 = vmatpush1.msra.mxu0 0.0
    %2477 = vmatprep.subr.mxu0 0.0
    %2478 = vmatpush1.msra.mxu0 0.0
    %2479 = vmatprep.subr.mxu0 0.0
    %2480 = vmatpush1.msra.mxu0 0.0
    %2481 = vmatprep.subr.mxu0 0.0
    %2482 = vmatpush1.msra.mxu0 0.0
    %2483 = vmatprep.subr.mxu0 0.0
    %2484 = vmatpush1.msra.mxu0 0.0
    %2485 = vmatprep.subr.mxu0 0.0
    %2486 = vmatpush1.msra.mxu0 0.0
    %2487 = vmatprep.subr.mxu0 0.0
    %2488 = vmatpush1.msra.mxu0 0.0
    %2489 = vmatprep.subr.mxu0 0.0
    %2490 = vmatpush1.msra.mxu0 0.0
    %2491 = vmatprep.subr.mxu0 0.0
    %2492 = vmatpush1.msra.mxu0 0.0
    %2493 = vmatprep.subr.mxu0 0.0
    %2494 = vmatpush1.msra.mxu0 0.0
    %2495 = vmatprep.subr.mxu0 0.0
    %2496 = vmatpush1.msra.mxu0 0.0
    %2497 = vmatprep.subr.mxu0 0.0
    %2498 = vmatpush1.msra.mxu0 0.0
    %2499 = vmatprep.subr.mxu0 0.0
    %2500 = vmatpush1.msra.mxu0 0.0
    %2501 = vmatprep.subr.mxu0 0.0
    %2502 = vmatpush1.msra.mxu0 0.0
    %2503 = vmatprep.subr.mxu0 0.0
    %2504 = vmatpush1.msra.mxu0 0.0
    %2505 = vmatprep.subr.mxu0 0.0
    %2506 = vmatpush1.msra.mxu0 0.0
    %2507 = vmatprep.subr.mxu0 0.0
    %2508 = vmatpush1.msra.mxu0 0.0
    %2509 = vmatprep.subr.mxu0 0.0
    %2510 = vmatpush1.msra.mxu0 0.0
    %2511 = vmatprep.subr.mxu0 0.0
    %2512 = vmatpush1.msra.mxu0 0.0
    %2513 = vmatprep.subr.mxu0 0.0
    %2514 = vmatpush1.msra.mxu0 0.0
    %2515 = vmatprep.mubr.f32.mxu0 0.0
    %2516 = vmatmul.mubr.f32.gmra.mrb[0].mxu0 %v1317
    %v2517 = vpop.f32.mrb[0].mxu0
    %v2518 = vadd.f32 0.0, %v2517
    %v2519 = vpop.f32.mrb[0].mxu0
    %2520 = vdwg.mxu0
    %v2521 = vmul.f32 %v2448, %v2448
    %2522 = vmatprep.subr.mxu0 0.0
    %2523 = vmatpush1.msra.mxu0 %v2521
    %2524 = vmatprep.subr.mxu0 0.0
    %2525 = vmatpush1.msra.mxu0 0.0
    %2526 = vmatprep.subr.mxu0 0.0
    %2527 = vmatpush1.msra.mxu0 0.0
    %2528 = vmatprep.subr.mxu0 0.0
    %2529 = vmatpush1.msra.mxu0 0.0
    %2530 = vmatprep.subr.mxu0 0.0
    %2531 = vmatpush1.msra.mxu0 0.0
    %2532 = vmatprep.subr.mxu0 0.0
    %2533 = vmatpush1.msra.mxu0 0.0
    %2534 = vmatprep.subr.mxu0 0.0
    %2535 = vmatpush1.msra.mxu0 0.0
    %2536 = vmatprep.subr.mxu0 0.0
    %2537 = vmatpush1.msra.mxu0 0.0
    %2538 = vmatprep.subr.mxu0 0.0
    %2539 = vmatpush1.msra.mxu0 0.0
    %2540 = vmatprep.subr.mxu0 0.0
    %2541 = vmatpush1.msra.mxu0 0.0
    %2542 = vmatprep.subr.mxu0 0.0
    %2543 = vmatpush1.msra.mxu0 0.0
    %2544 = vmatprep.subr.mxu0 0.0
    %2545 = vmatpush1.msra.mxu0 0.0
    %2546 = vmatprep.subr.mxu0 0.0
    %2547 = vmatpush1.msra.mxu0 0.0
    %2548 = vmatprep.subr.mxu0 0.0
    %2549 = vmatpush1.msra.mxu0 0.0
    %2550 = vmatprep.subr.mxu0 0.0
    %2551 = vmatpush1.msra.mxu0 0.0
    %2552 = vmatprep.subr.mxu0 0.0
    %2553 = vmatpush1.msra.mxu0 0.0
    %2554 = vmatprep.subr.mxu0 0.0
    %2555 = vmatpush1.msra.mxu0 0.0
    %2556 = vmatprep.subr.mxu0 0.0
    %2557 = vmatpush1.msra.mxu0 0.0
    %2558 = vmatprep.subr.mxu0 0.0
    %2559 = vmatpush1.msra.mxu0 0.0
    %2560 = vmatprep.subr.mxu0 0.0
    %2561 = vmatpush1.msra.mxu0 0.0
    %2562 = vmatprep.subr.mxu0 0.0
    %2563 = vmatpush1.msra.mxu0 0.0
    %2564 = vmatprep.subr.mxu0 0.0
    %2565 = vmatpush1.msra.mxu0 0.0
    %2566 = vmatprep.subr.mxu0 0.0
    %2567 = vmatpush1.msra.mxu0 0.0
    %2568 = vmatprep.subr.mxu0 0.0
    %2569 = vmatpush1.msra.mxu0 0.0
    %2570 = vmatprep.subr.mxu0 0.0
    %2571 = vmatpush1.msra.mxu0 0.0
    %2572 = vmatprep.subr.mxu0 0.0
    %2573 = vmatpush1.msra.mxu0 0.0
    %2574 = vmatprep.subr.mxu0 0.0
    %2575 = vmatpush1.msra.mxu0 0.0
    %2576 = vmatprep.subr.mxu0 0.0
    %2577 = vmatpush1.msra.mxu0 0.0
    %2578 = vmatprep.subr.mxu0 0.0
    %2579 = vmatpush1.msra.mxu0 0.0
    %2580 = vmatprep.subr.mxu0 0.0
    %2581 = vmatpush1.msra.mxu0 0.0
    %2582 = vmatprep.subr.mxu0 0.0
    %2583 = vmatpush1.msra.mxu0 0.0
    %2584 = vmatprep.subr.mxu0 0.0
    %2585 = vmatpush1.msra.mxu0 0.0
    %2586 = vmatprep.mubr.f32.mxu0 0.0
    %2587 = vmatmul.mubr.f32.gmra.mrb[0].mxu0 %v1317
    %v2588 = vpop.f32.mrb[0].mxu0
    %v2589 = vadd.f32 0.0, %v2588
    %v2590 = vpop.f32.mrb[0].mxu0
    %2591 = vdwg.mxu0
    %v2592 = vmul.f32 %v2518, 0.125
    %v2593 = vmul.f32 %v2589, 0.125
    %v2594 = vmul.f32 %v2592, %v2592
    %v2595 = vsub.f32 %v2593, %v2594
    %v2596 = vld [vmem:[%s8] sm:$0x1]
    %v2597 = vadd.f32 %v2595, 1e-05
    %v2598 = vrsqrt.pop %v2597
    %v2599 = vmul.f32 %v2596, %v2598
    %v2600 = vld [vmem:[%s9] sm:$0x1]
    %v2601 = vmul.f32 %v2592, %v2599
    %v2602 = vsub.f32 %v2600, %v2601
    %v2604 = vlaneseq
    %v2605 = vshrl.u32 %v2604, 7
    %v2606 = vsub.s32 0, %v2605
    %v2607 = vrot.slane %v2599, %v2606
    %v2609 = vmul.f32 %v2448, %v2607
    %v2611 = vlaneseq
    %v2612 = vshrl.u32 %v2611, 7
    %v2613 = vsub.s32 0, %v2612
    %v2614 = vrot.slane %v2602, %v2613
    %v2616 = vadd.f32 %v2609, %v2614
    %v2617 = vmul.f32 %v2616, 0.01
    %v2618 = vmax.f32 %v2616, %v2617
    %v2619 = vld [vmem:[%s10] sm:$0xf]
    %v2620 = vld [vmem:[%s10 + $0x4] sm:$0xf]
    %v2621 = vld [vmem:[%s10 + $0x8] sm:$0xf]
    %v2622 = vld [vmem:[%s10 + $0xc] sm:$0xf]
    %v2623 = vld [vmem:[%s10 + $0x10] sm:$0xf]
    %v2624 = vld [vmem:[%s10 + $0x14] sm:$0xf]
    %v2625 = vld [vmem:[%s10 + $0x18] sm:$0xf]
    %v2626 = vld [vmem:[%s10 + $0x1c] sm:$0xf]
    %v2627 = vld [vmem:[%s10 + $0x20] sm:$0xf]
    %v2628 = vld [vmem:[%s10 + $0x24] sm:$0xf]
    %v2629 = vld [vmem:[%s10 + $0x28] sm:$0xf]
    %v2630 = vld [vmem:[%s10 + $0x2c] sm:$0xf]
    %v2631 = vld [vmem:[%s10 + $0x30] sm:$0xf]
    %v2632 = vld [vmem:[%s10 + $0x34] sm:$0xf]
    %v2633 = vld [vmem:[%s10 + $0x38] sm:$0xf]
    %v2634 = vld [vmem:[%s10 + $0x3c] sm:$0xf]
    %v2635 = vunpack.c.l.bf16 %v2619
    %v2636 = vunpack.c.l.bf16 %v2620
    %v2637 = vunpack.c.l.bf16 %v2621
    %v2638 = vunpack.c.l.bf16 %v2622
    %v2639 = vunpack.c.l.bf16 %v2623
    %v2640 = vunpack.c.l.bf16 %v2624
    %v2641 = vunpack.c.l.bf16 %v2625
    %v2642 = vunpack.c.l.bf16 %v2626
    %v2643 = vunpack.c.l.bf16 %v2627
    %v2644 = vunpack.c.l.bf16 %v2628
    %v2645 = vunpack.c.l.bf16 %v2629
    %v2646 = vunpack.c.l.bf16 %v2630
    %v2647 = vunpack.c.l.bf16 %v2631
    %v2648 = vunpack.c.l.bf16 %v2632
    %v2649 = vunpack.c.l.bf16 %v2633
    %v2650 = vunpack.c.l.bf16 %v2634
    %2651 = vmatprep.subr.mxu0 0.0
    %2652 = vmatpush1.msra.mxu0 %v2635
    %2653 = vmatprep.subr.mxu0 0.0
    %2654 = vmatpush1.msra.mxu0 %v2636
    %2655 = vmatprep.subr.mxu0 0.0
    %2656 = vmatpush1.msra.mxu0 %v2637
    %2657 = vmatprep.subr.mxu0 0.0
    %2658 = vmatpush1.msra.mxu0 %v2638
    %2659 = vmatprep.subr.mxu0 0.0
    %2660 = vmatpush1.msra.mxu0 %v2639
    %2661 = vmatprep.subr.mxu0 0.0
    %2662 = vmatpush1.msra.mxu0 %v2640
    %2663 = vmatprep.subr.mxu0 0.0
    %2664 = vmatpush1.msra.mxu0 %v2641
    %2665 = vmatprep.subr.mxu0 0.0
    %2666 = vmatpush1.msra.mxu0 %v2642
    %2667 = vmatprep.subr.mxu0 0.0
    %2668 = vmatpush1.msra.mxu0 %v2643
    %2669 = vmatprep.subr.mxu0 0.0
    %2670 = vmatpush1.msra.mxu0 %v2644
    %2671 = vmatprep.subr.mxu0 0.0
    %2672 = vmatpush1.msra.mxu0 %v2645
    %2673 = vmatprep.subr.mxu0 0.0
    %2674 = vmatpush1.msra.mxu0 %v2646
    %2675 = vmatprep.subr.mxu0 0.0
    %2676 = vmatpush1.msra.mxu0 %v2647
    %2677 = vmatprep.subr.mxu0 0.0
    %2678 = vmatpush1.msra.mxu0 %v2648
    %2679 = vmatprep.subr.mxu0 0.0
    %2680 = vmatpush1.msra.mxu0 %v2649
    %2681 = vmatprep.subr.mxu0 0.0
    %2682 = vmatpush1.msra.mxu0 %v2650
    %2683 = vmatprep.subr.mxu0 0.0
    %2684 = vmatpush1.msra.mxu0 0.0
    %2685 = vmatprep.subr.mxu0 0.0
    %2686 = vmatpush1.msra.mxu0 0.0
    %2687 = vmatprep.subr.mxu0 0.0
    %2688 = vmatpush1.msra.mxu0 0.0
    %2689 = vmatprep.subr.mxu0 0.0
    %2690 = vmatpush1.msra.mxu0 0.0
    %2691 = vmatprep.subr.mxu0 0.0
    %2692 = vmatpush1.msra.mxu0 0.0
    %2693 = vmatprep.subr.mxu0 0.0
    %2694 = vmatpush1.msra.mxu0 0.0
    %2695 = vmatprep.subr.mxu0 0.0
    %2696 = vmatpush1.msra.mxu0 0.0
    %2697 = vmatprep.subr.mxu0 0.0
    %2698 = vmatpush1.msra.mxu0 0.0
    %2699 = vmatprep.subr.mxu0 0.0
    %2700 = vmatpush1.msra.mxu0 0.0
    %2701 = vmatprep.subr.mxu0 0.0
    %2702 = vmatpush1.msra.mxu0 0.0
    %2703 = vmatprep.subr.mxu0 0.0
    %2704 = vmatpush1.msra.mxu0 0.0
    %2705 = vmatprep.subr.mxu0 0.0
    %2706 = vmatpush1.msra.mxu0 0.0
    %2707 = vmatprep.subr.mxu0 0.0
    %2708 = vmatpush1.msra.mxu0 0.0
    %2709 = vmatprep.subr.mxu0 0.0
    %2710 = vmatpush1.msra.mxu0 0.0
    %2711 = vmatprep.subr.mxu0 0.0
    %2712 = vmatpush1.msra.mxu0 0.0
    %2713 = vmatprep.subr.mxu0 0.0
    %2714 = vmatpush1.msra.mxu0 0.0
    %2715 = vmatprep.mubr.f32.mxu0 0.0
    %2716 = vmatmul.mubr.f32.gmra.mrb[0].mxu0 %v2618
    %v2717 = vpop.f32.mrb[0].mxu0
    %v2718 = vadd.f32 0.0, %v2717
    %v2719 = vpop.f32.mrb[0].mxu0
    %2720 = vdwg.mxu0
    %2721 = vmatprep.subr.mxu0 0.0
    %2722 = vmatpush1.msra.mxu0 %v2718
    %2723 = vmatprep.subr.mxu0 0.0
    %2724 = vmatpush1.msra.mxu0 0.0
    %2725 = vmatprep.subr.mxu0 0.0
    %2726 = vmatpush1.msra.mxu0 0.0
    %2727 = vmatprep.subr.mxu0 0.0
    %2728 = vmatpush1.msra.mxu0 0.0
    %2729 = vmatprep.subr.mxu0 0.0
    %2730 = vmatpush1.msra.mxu0 0.0
    %2731 = vmatprep.subr.mxu0 0.0
    %2732 = vmatpush1.msra.mxu0 0.0
    %2733 = vmatprep.subr.mxu0 0.0
    %2734 = vmatpush1.msra.mxu0 0.0
    %2735 = vmatprep.subr.mxu0 0.0
    %2736 = vmatpush1.msra.mxu0 0.0
    %2737 = vmatprep.subr.mxu0 0.0
    %2738 = vmatpush1.msra.mxu0 0.0
    %2739 = vmatprep.subr.mxu0 0.0
    %2740 = vmatpush1.msra.mxu0 0.0
    %2741 = vmatprep.subr.mxu0 0.0
    %2742 = vmatpush1.msra.mxu0 0.0
    %2743 = vmatprep.subr.mxu0 0.0
    %2744 = vmatpush1.msra.mxu0 0.0
    %2745 = vmatprep.subr.mxu0 0.0
    %2746 = vmatpush1.msra.mxu0 0.0
    %2747 = vmatprep.subr.mxu0 0.0
    %2748 = vmatpush1.msra.mxu0 0.0
    %2749 = vmatprep.subr.mxu0 0.0
    %2750 = vmatpush1.msra.mxu0 0.0
    %2751 = vmatprep.subr.mxu0 0.0
    %2752 = vmatpush1.msra.mxu0 0.0
    %2753 = vmatprep.subr.mxu0 0.0
    %2754 = vmatpush1.msra.mxu0 0.0
    %2755 = vmatprep.subr.mxu0 0.0
    %2756 = vmatpush1.msra.mxu0 0.0
    %2757 = vmatprep.subr.mxu0 0.0
    %2758 = vmatpush1.msra.mxu0 0.0
    %2759 = vmatprep.subr.mxu0 0.0
    %2760 = vmatpush1.msra.mxu0 0.0
    %2761 = vmatprep.subr.mxu0 0.0
    %2762 = vmatpush1.msra.mxu0 0.0
    %2763 = vmatprep.subr.mxu0 0.0
    %2764 = vmatpush1.msra.mxu0 0.0
    %2765 = vmatprep.subr.mxu0 0.0
    %2766 = vmatpush1.msra.mxu0 0.0
    %2767 = vmatprep.subr.mxu0 0.0
    %2768 = vmatpush1.msra.mxu0 0.0
    %2769 = vmatprep.subr.mxu0 0.0
    %2770 = vmatpush1.msra.mxu0 0.0
    %2771 = vmatprep.subr.mxu0 0.0
    %2772 = vmatpush1.msra.mxu0 0.0
    %2773 = vmatprep.subr.mxu0 0.0
    %2774 = vmatpush1.msra.mxu0 0.0
    %2775 = vmatprep.subr.mxu0 0.0
    %2776 = vmatpush1.msra.mxu0 0.0
    %2777 = vmatprep.subr.mxu0 0.0
    %2778 = vmatpush1.msra.mxu0 0.0
    %2779 = vmatprep.subr.mxu0 0.0
    %2780 = vmatpush1.msra.mxu0 0.0
    %2781 = vmatprep.subr.mxu0 0.0
    %2782 = vmatpush1.msra.mxu0 0.0
    %2783 = vmatprep.subr.mxu0 0.0
    %2784 = vmatpush1.msra.mxu0 0.0
    %2785 = vmatprep.mubr.f32.mxu0 0.0
    %2786 = vmatmul.mubr.f32.gmra.mrb[0].mxu0 %v1317
    %v2787 = vpop.f32.mrb[0].mxu0
    %v2788 = vadd.f32 0.0, %v2787
    %v2789 = vpop.f32.mrb[0].mxu0
    %2790 = vdwg.mxu0
    %v2791 = vmul.f32 %v2718, %v2718
    %2792 = vmatprep.subr.mxu0 0.0
    %2793 = vmatpush1.msra.mxu0 %v2791
    %2794 = vmatprep.subr.mxu0 0.0
    %2795 = vmatpush1.msra.mxu0 0.0
    %2796 = vmatprep.subr.mxu0 0.0
    %2797 = vmatpush1.msra.mxu0 0.0
    %2798 = vmatprep.subr.mxu0 0.0
    %2799 = vmatpush1.msra.mxu0 0.0
    %2800 = vmatprep.subr.mxu0 0.0
    %2801 = vmatpush1.msra.mxu0 0.0
    %2802 = vmatprep.subr.mxu0 0.0
    %2803 = vmatpush1.msra.mxu0 0.0
    %2804 = vmatprep.subr.mxu0 0.0
    %2805 = vmatpush1.msra.mxu0 0.0
    %2806 = vmatprep.subr.mxu0 0.0
    %2807 = vmatpush1.msra.mxu0 0.0
    %2808 = vmatprep.subr.mxu0 0.0
    %2809 = vmatpush1.msra.mxu0 0.0
    %2810 = vmatprep.subr.mxu0 0.0
    %2811 = vmatpush1.msra.mxu0 0.0
    %2812 = vmatprep.subr.mxu0 0.0
    %2813 = vmatpush1.msra.mxu0 0.0
    %2814 = vmatprep.subr.mxu0 0.0
    %2815 = vmatpush1.msra.mxu0 0.0
    %2816 = vmatprep.subr.mxu0 0.0
    %2817 = vmatpush1.msra.mxu0 0.0
    %2818 = vmatprep.subr.mxu0 0.0
    %2819 = vmatpush1.msra.mxu0 0.0
    %2820 = vmatprep.subr.mxu0 0.0
    %2821 = vmatpush1.msra.mxu0 0.0
    %2822 = vmatprep.subr.mxu0 0.0
    %2823 = vmatpush1.msra.mxu0 0.0
    %2824 = vmatprep.subr.mxu0 0.0
    %2825 = vmatpush1.msra.mxu0 0.0
    %2826 = vmatprep.subr.mxu0 0.0
    %2827 = vmatpush1.msra.mxu0 0.0
    %2828 = vmatprep.subr.mxu0 0.0
    %2829 = vmatpush1.msra.mxu0 0.0
    %2830 = vmatprep.subr.mxu0 0.0
    %2831 = vmatpush1.msra.mxu0 0.0
    %2832 = vmatprep.subr.mxu0 0.0
    %2833 = vmatpush1.msra.mxu0 0.0
    %2834 = vmatprep.subr.mxu0 0.0
    %2835 = vmatpush1.msra.mxu0 0.0
    %2836 = vmatprep.subr.mxu0 0.0
    %2837 = vmatpush1.msra.mxu0 0.0
    %2838 = vmatprep.subr.mxu0 0.0
    %2839 = vmatpush1.msra.mxu0 0.0
    %2840 = vmatprep.subr.mxu0 0.0
    %2841 = vmatpush1.msra.mxu0 0.0
    %2842 = vmatprep.subr.mxu0 0.0
    %2843 = vmatpush1.msra.mxu0 0.0
    %2844 = vmatprep.subr.mxu0 0.0
    %2845 = vmatpush1.msra.mxu0 0.0
    %2846 = vmatprep.subr.mxu0 0.0
    %2847 = vmatpush1.msra.mxu0 0.0
    %2848 = vmatprep.subr.mxu0 0.0
    %2849 = vmatpush1.msra.mxu0 0.0
    %2850 = vmatprep.subr.mxu0 0.0
    %2851 = vmatpush1.msra.mxu0 0.0
    %2852 = vmatprep.subr.mxu0 0.0
    %2853 = vmatpush1.msra.mxu0 0.0
    %2854 = vmatprep.subr.mxu0 0.0
    %2855 = vmatpush1.msra.mxu0 0.0
    %2856 = vmatprep.mubr.f32.mxu0 0.0
    %2857 = vmatmul.mubr.f32.gmra.mrb[0].mxu0 %v1317
    %v2858 = vpop.f32.mrb[0].mxu0
    %v2859 = vadd.f32 0.0, %v2858
    %v2860 = vpop.f32.mrb[0].mxu0
    %2861 = vdwg.mxu0
    %v2862 = vmul.f32 %v2788, 0.125
    %v2863 = vmul.f32 %v2859, 0.125
    %v2864 = vmul.f32 %v2862, %v2862
    %v2865 = vsub.f32 %v2863, %v2864
    %v2866 = vld [vmem:[%s11] sm:$0x1]
    %v2867 = vadd.f32 %v2865, 1e-05
    %v2868 = vrsqrt.pop %v2867
    %v2869 = vmul.f32 %v2866, %v2868
    %v2870 = vld [vmem:[%s12] sm:$0x1]
    %v2871 = vmul.f32 %v2862, %v2869
    %v2872 = vsub.f32 %v2870, %v2871
    %v2874 = vlaneseq
    %v2875 = vshrl.u32 %v2874, 7
    %v2876 = vsub.s32 0, %v2875
    %v2877 = vrot.slane %v2869, %v2876
    %v2879 = vmul.f32 %v2718, %v2877
    %v2881 = vlaneseq
    %v2882 = vshrl.u32 %v2881, 7
    %v2883 = vsub.s32 0, %v2882
    %v2884 = vrot.slane %v2872, %v2883
    %v2886 = vadd.f32 %v2879, %v2884
    %v2887 = vmul.f32 %v2886, 0.01
    %v2888 = vmax.f32 %v2886, %v2887
    %v2889 = vld [vmem:[%s13] sm:$0xf]
    %v2890 = vld [vmem:[%s13 + $0x4] sm:$0xf]
    %v2891 = vld [vmem:[%s13 + $0x8] sm:$0xf]
    %v2892 = vld [vmem:[%s13 + $0xc] sm:$0xf]
    %v2893 = vld [vmem:[%s13 + $0x10] sm:$0xf]
    %v2894 = vld [vmem:[%s13 + $0x14] sm:$0xf]
    %v2895 = vld [vmem:[%s13 + $0x18] sm:$0xf]
    %v2896 = vld [vmem:[%s13 + $0x1c] sm:$0xf]
    %v2897 = vunpack.c.l.bf16 %v2889
    %v2898 = vunpack.c.l.bf16 %v2890
    %v2899 = vunpack.c.l.bf16 %v2891
    %v2900 = vunpack.c.l.bf16 %v2892
    %v2901 = vunpack.c.l.bf16 %v2893
    %v2902 = vunpack.c.l.bf16 %v2894
    %v2903 = vunpack.c.l.bf16 %v2895
    %v2904 = vunpack.c.l.bf16 %v2896
    %vm2905 = vcmask 523264
    %v2907 = vsel %vm2905, %v2888, 0
    %2909 = vmatprep.subr.mxu0 0.0
    %2910 = vmatpush1.msra.mxu0 %v2897
    %2911 = vmatprep.subr.mxu0 0.0
    %2912 = vmatpush1.msra.mxu0 %v2898
    %2913 = vmatprep.subr.mxu0 0.0
    %2914 = vmatpush1.msra.mxu0 %v2899
    %2915 = vmatprep.subr.mxu0 0.0
    %2916 = vmatpush1.msra.mxu0 %v2900
    %2917 = vmatprep.subr.mxu0 0.0
    %2918 = vmatpush1.msra.mxu0 %v2901
    %2919 = vmatprep.subr.mxu0 0.0
    %2920 = vmatpush1.msra.mxu0 %v2902
    %2921 = vmatprep.subr.mxu0 0.0
    %2922 = vmatpush1.msra.mxu0 %v2903
    %2923 = vmatprep.subr.mxu0 0.0
    %2924 = vmatpush1.msra.mxu0 %v2904
    %2925 = vmatprep.subr.mxu0 0.0
    %2926 = vmatpush1.msra.mxu0 0.0
    %2927 = vmatprep.subr.mxu0 0.0
    %2928 = vmatpush1.msra.mxu0 0.0
    %2929 = vmatprep.subr.mxu0 0.0
    %2930 = vmatpush1.msra.mxu0 0.0
    %2931 = vmatprep.subr.mxu0 0.0
    %2932 = vmatpush1.msra.mxu0 0.0
    %2933 = vmatprep.subr.mxu0 0.0
    %2934 = vmatpush1.msra.mxu0 0.0
    %2935 = vmatprep.subr.mxu0 0.0
    %2936 = vmatpush1.msra.mxu0 0.0
    %2937 = vmatprep.subr.mxu0 0.0
    %2938 = vmatpush1.msra.mxu0 0.0
    %2939 = vmatprep.subr.mxu0 0.0
    %2940 = vmatpush1.msra.mxu0 0.0
    %2941 = vmatprep.subr.mxu0 0.0
    %2942 = vmatpush1.msra.mxu0 0.0
    %2943 = vmatprep.subr.mxu0 0.0
    %2944 = vmatpush1.msra.mxu0 0.0
    %2945 = vmatprep.subr.mxu0 0.0
    %2946 = vmatpush1.msra.mxu0 0.0
    %2947 = vmatprep.subr.mxu0 0.0
    %2948 = vmatpush1.msra.mxu0 0.0
    %2949 = vmatprep.subr.mxu0 0.0
    %2950 = vmatpush1.msra.mxu0 0.0
    %2951 = vmatprep.subr.mxu0 0.0
    %2952 = vmatpush1.msra.mxu0 0.0
    %2953 = vmatprep.subr.mxu0 0.0
    %2954 = vmatpush1.msra.mxu0 0.0
    %2955 = vmatprep.subr.mxu0 0.0
    %2956 = vmatpush1.msra.mxu0 0.0
    %2957 = vmatprep.subr.mxu0 0.0
    %2958 = vmatpush1.msra.mxu0 0.0
    %2959 = vmatprep.subr.mxu0 0.0
    %2960 = vmatpush1.msra.mxu0 0.0
    %2961 = vmatprep.subr.mxu0 0.0
    %2962 = vmatpush1.msra.mxu0 0.0
    %2963 = vmatprep.subr.mxu0 0.0
    %2964 = vmatpush1.msra.mxu0 0.0
    %2965 = vmatprep.subr.mxu0 0.0
    %2966 = vmatpush1.msra.mxu0 0.0
    %2967 = vmatprep.subr.mxu0 0.0
    %2968 = vmatpush1.msra.mxu0 0.0
    %2969 = vmatprep.subr.mxu0 0.0
    %2970 = vmatpush1.msra.mxu0 0.0
    %2971 = vmatprep.subr.mxu0 0.0
    %2972 = vmatpush1.msra.mxu0 0.0
    %2973 = vmatprep.mubr.f32.mxu0 0.0
    %2974 = vmatmul.mubr.f32.gmra.mrb[0].mxu0 %v2907
    %v2975 = vpop.f32.mrb[0].mxu0
    %v2976 = vadd.f32 0.0, %v2975
    %v2977 = vpop.f32.mrb[0].mxu0
    %2978 = vdwg.mxu0
    %2979 = vmatprep.subr.mxu0 0.0
    %2980 = vmatpush1.msra.mxu0 %v2976
    %2981 = vmatprep.subr.mxu0 0.0
    %2982 = vmatpush1.msra.mxu0 0.0
    %2983 = vmatprep.subr.mxu0 0.0
    %2984 = vmatpush1.msra.mxu0 0.0
    %2985 = vmatprep.subr.mxu0 0.0
    %2986 = vmatpush1.msra.mxu0 0.0
    %2987 = vmatprep.subr.mxu0 0.0
    %2988 = vmatpush1.msra.mxu0 0.0
    %2989 = vmatprep.subr.mxu0 0.0
    %2990 = vmatpush1.msra.mxu0 0.0
    %2991 = vmatprep.subr.mxu0 0.0
    %2992 = vmatpush1.msra.mxu0 0.0
    %2993 = vmatprep.subr.mxu0 0.0
    %2994 = vmatpush1.msra.mxu0 0.0
    %2995 = vmatprep.subr.mxu0 0.0
    %2996 = vmatpush1.msra.mxu0 0.0
    %2997 = vmatprep.subr.mxu0 0.0
    %2998 = vmatpush1.msra.mxu0 0.0
    %2999 = vmatprep.subr.mxu0 0.0
    %3000 = vmatpush1.msra.mxu0 0.0
    %3001 = vmatprep.subr.mxu0 0.0
    %3002 = vmatpush1.msra.mxu0 0.0
    %3003 = vmatprep.subr.mxu0 0.0
    %3004 = vmatpush1.msra.mxu0 0.0
    %3005 = vmatprep.subr.mxu0 0.0
    %3006 = vmatpush1.msra.mxu0 0.0
    %3007 = vmatprep.subr.mxu0 0.0
    %3008 = vmatpush1.msra.mxu0 0.0
    %3009 = vmatprep.subr.mxu0 0.0
    %3010 = vmatpush1.msra.mxu0 0.0
    %3011 = vmatprep.subr.mxu0 0.0
    %3012 = vmatpush1.msra.mxu0 0.0
    %3013 = vmatprep.subr.mxu0 0.0
    %3014 = vmatpush1.msra.mxu0 0.0
    %3015 = vmatprep.subr.mxu0 0.0
    %3016 = vmatpush1.msra.mxu0 0.0
    %3017 = vmatprep.subr.mxu0 0.0
    %3018 = vmatpush1.msra.mxu0 0.0
    %3019 = vmatprep.subr.mxu0 0.0
    %3020 = vmatpush1.msra.mxu0 0.0
    %3021 = vmatprep.subr.mxu0 0.0
    %3022 = vmatpush1.msra.mxu0 0.0
    %3023 = vmatprep.subr.mxu0 0.0
    %3024 = vmatpush1.msra.mxu0 0.0
    %3025 = vmatprep.subr.mxu0 0.0
    %3026 = vmatpush1.msra.mxu0 0.0
    %3027 = vmatprep.subr.mxu0 0.0
    %3028 = vmatpush1.msra.mxu0 0.0
    %3029 = vmatprep.subr.mxu0 0.0
    %3030 = vmatpush1.msra.mxu0 0.0
    %3031 = vmatprep.subr.mxu0 0.0
    %3032 = vmatpush1.msra.mxu0 0.0
    %3033 = vmatprep.subr.mxu0 0.0
    %3034 = vmatpush1.msra.mxu0 0.0
    %3035 = vmatprep.subr.mxu0 0.0
    %3036 = vmatpush1.msra.mxu0 0.0
    %3037 = vmatprep.subr.mxu0 0.0
    %3038 = vmatpush1.msra.mxu0 0.0
    %3039 = vmatprep.subr.mxu0 0.0
    %3040 = vmatpush1.msra.mxu0 0.0
    %3041 = vmatprep.subr.mxu0 0.0
    %3042 = vmatpush1.msra.mxu0 0.0
    %3043 = vmatprep.mubr.f32.mxu0 0.0
    %3044 = vmatmul.mubr.f32.gmra.mrb[0].mxu0 %v1317
    %v3045 = vpop.f32.mrb[0].mxu0
    %v3046 = vadd.f32 0.0, %v3045
    %v3047 = vpop.f32.mrb[0].mxu0
    %3048 = vdwg.mxu0
    %v3049 = vmul.f32 %v2976, %v2976
    %3050 = vmatprep.subr.mxu0 0.0
    %3051 = vmatpush1.msra.mxu0 %v3049
    %3052 = vmatprep.subr.mxu0 0.0
    %3053 = vmatpush1.msra.mxu0 0.0
    %3054 = vmatprep.subr.mxu0 0.0
    %3055 = vmatpush1.msra.mxu0 0.0
    %3056 = vmatprep.subr.mxu0 0.0
    %3057 = vmatpush1.msra.mxu0 0.0
    %3058 = vmatprep.subr.mxu0 0.0
    %3059 = vmatpush1.msra.mxu0 0.0
    %3060 = vmatprep.subr.mxu0 0.0
    %3061 = vmatpush1.msra.mxu0 0.0
    %3062 = vmatprep.subr.mxu0 0.0
    %3063 = vmatpush1.msra.mxu0 0.0
    %3064 = vmatprep.subr.mxu0 0.0
    %3065 = vmatpush1.msra.mxu0 0.0
    %3066 = vmatprep.subr.mxu0 0.0
    %3067 = vmatpush1.msra.mxu0 0.0
    %3068 = vmatprep.subr.mxu0 0.0
    %3069 = vmatpush1.msra.mxu0 0.0
    %3070 = vmatprep.subr.mxu0 0.0
    %3071 = vmatpush1.msra.mxu0 0.0
    %3072 = vmatprep.subr.mxu0 0.0
    %3073 = vmatpush1.msra.mxu0 0.0
    %3074 = vmatprep.subr.mxu0 0.0
    %3075 = vmatpush1.msra.mxu0 0.0
    %3076 = vmatprep.subr.mxu0 0.0
    %3077 = vmatpush1.msra.mxu0 0.0
    %3078 = vmatprep.subr.mxu0 0.0
    %3079 = vmatpush1.msra.mxu0 0.0
    %3080 = vmatprep.subr.mxu0 0.0
    %3081 = vmatpush1.msra.mxu0 0.0
    %3082 = vmatprep.subr.mxu0 0.0
    %3083 = vmatpush1.msra.mxu0 0.0
    %3084 = vmatprep.subr.mxu0 0.0
    %3085 = vmatpush1.msra.mxu0 0.0
    %3086 = vmatprep.subr.mxu0 0.0
    %3087 = vmatpush1.msra.mxu0 0.0
    %3088 = vmatprep.subr.mxu0 0.0
    %3089 = vmatpush1.msra.mxu0 0.0
    %3090 = vmatprep.subr.mxu0 0.0
    %3091 = vmatpush1.msra.mxu0 0.0
    %3092 = vmatprep.subr.mxu0 0.0
    %3093 = vmatpush1.msra.mxu0 0.0
    %3094 = vmatprep.subr.mxu0 0.0
    %3095 = vmatpush1.msra.mxu0 0.0
    %3096 = vmatprep.subr.mxu0 0.0
    %3097 = vmatpush1.msra.mxu0 0.0
    %3098 = vmatprep.subr.mxu0 0.0
    %3099 = vmatpush1.msra.mxu0 0.0
    %3100 = vmatprep.subr.mxu0 0.0
    %3101 = vmatpush1.msra.mxu0 0.0
    %3102 = vmatprep.subr.mxu0 0.0
    %3103 = vmatpush1.msra.mxu0 0.0
    %3104 = vmatprep.subr.mxu0 0.0
    %3105 = vmatpush1.msra.mxu0 0.0
    %3106 = vmatprep.subr.mxu0 0.0
    %3107 = vmatpush1.msra.mxu0 0.0
    %3108 = vmatprep.subr.mxu0 0.0
    %3109 = vmatpush1.msra.mxu0 0.0
    %3110 = vmatprep.subr.mxu0 0.0
    %3111 = vmatpush1.msra.mxu0 0.0
    %3112 = vmatprep.subr.mxu0 0.0
    %3113 = vmatpush1.msra.mxu0 0.0
    %3114 = vmatprep.mubr.f32.mxu0 0.0
    %3115 = vmatmul.mubr.f32.gmra.mrb[0].mxu0 %v1317
    %v3116 = vpop.f32.mrb[0].mxu0
    %v3117 = vadd.f32 0.0, %v3116
    %v3118 = vpop.f32.mrb[0].mxu0
    %3119 = vdwg.mxu0
    %v3120 = vmul.f32 %v3046, 0.125
    %v3121 = vmul.f32 %v3117, 0.125
    %v3122 = vmul.f32 %v3120, %v3120
    %v3123 = vsub.f32 %v3121, %v3122
    %v3124 = vld [vmem:[%s14] sm:$0x1]
    %v3125 = vadd.f32 %v3123, 1e-05
    %v3126 = vrsqrt.pop %v3125
    %v3127 = vmul.f32 %v3124, %v3126
    %v3128 = vld [vmem:[%s15] sm:$0x1]
    %v3129 = vmul.f32 %v3120, %v3127
    %v3130 = vsub.f32 %v3128, %v3129
    %v3132 = vlaneseq
    %v3133 = vshrl.u32 %v3132, 7
    %v3134 = vsub.s32 0, %v3133
    %v3135 = vrot.slane %v3127, %v3134
    %v3137 = vmul.f32 %v2976, %v3135
    %v3139 = vlaneseq
    %v3140 = vshrl.u32 %v3139, 7
    %v3141 = vsub.s32 0, %v3140
    %v3142 = vrot.slane %v3130, %v3141
    %v3144 = vadd.f32 %v3137, %v3142
    %v3145 = vmul.f32 %v3144, 0.01
    %v3146 = vmax.f32 %v3144, %v3145
    %vm3147 = vcmask 261120
    %3148 = vst.msk [vmem:[#allocation5] sm:$0xff] %vm3147, %v3146
    // Predicated region
    $region70: #{encoder_forward.1} parent=1 // pred_check
      _
    $region71: #{encoder_forward.1} parent=1 // pred_check_branch
      %3150 = sbr.rel (0) target = $region73
    $region72: #{encoder_forward.1} parent=1 // pred_region
      %s3152 = ssub.s32 128, 128
      %3153 = vsyncadd [#allocation4], %s3152
      %s3155 = sshll.u32 [#allocation5], 4
      %s3156 = int_to_ptr.vmem [resolvable:$true] %s3155
      %3158 = dma.vmem_to_hbm [thread:$0]  %s3156, 128, %s16, [#allocation4]
    $region73: #{encoder_forward.1} parent=1 // pred_fallthru
      _
    // Predicated region
    $region74: #{encoder_forward.1} parent=1 // pred_check
      _
    $region75: #{encoder_forward.1} parent=1 // pred_check_branch
      %3160 = sbr.rel (0) target = $region77
    $region76: #{encoder_forward.1} parent=1 // pred_region
      %3161 = dma.done [#allocation4], 128
    $region77: #{encoder_forward.1} parent=1 // pred_fallthru
      _
    %3162 = vsyncpa [#allocation3], 1
    %3163 = vsyncpa [#allocation4], 1

</llo_original>
